<compile_context>
chip_gen: v7x
topology: tpu7x:2x2x1
jax: 0.10.0
libtpu: 0.0.40
codegen_flags: <defaults>
</compile_context>

<pallas_src>
import functools

import jax
import jax.numpy as jnp
from jax import lax
from jax.experimental import pallas as pl
from jax.experimental.pallas import tpu as pltpu

BN_EPS = 1e-5


def _bottleneck_kernel(d, H, Wp,
                       x_ref, mask_ref,
                       w1_ref, s1_ref, b1_ref,
                       w2_ref, s2_ref, b2_ref,
                       w3_ref, s3_ref, b3_ref,
                       out_ref):
    """One batch element, everything 2D (pixels x channels).

    x_ref    : (P_in, Cin)  flattened zero-padded NHWC pixels (P_in = Hp*Wp + 2d)
    mask_ref : (P_in, 1)    1.0 on interior pixels, 0.0 on the zero-padding halo
    w1_ref   : (Cin, Cb)    1x1 conv weight (bf16)
    w2_ref   : (3, 3, Cb, Cb) 3x3 conv weight, HWIO (bf16)
    w3_ref   : (Cb, Cout)   1x1 conv weight (bf16)
    s*_ref, b*_ref : (1, C) folded BatchNorm scale / bias (f32)
    out_ref  : (H*Wp, Cout) flat output; columns >= W of each row are garbage
               and are dropped by the wrapper.
    """
    L = H * Wp

    # ---- conv1 (1x1) + bn1 + relu.  Halo pixels are masked to zero afterwards so
    # they act as conv2's zero padding.
    x = x_ref[...]
    h1 = jnp.dot(x.astype(jnp.bfloat16), w1_ref[...],
                 preferred_element_type=jnp.float32)
    h1 = jnp.maximum(h1 * s1_ref[...] + b1_ref[...], 0.0)
    h1 = (h1 * mask_ref[...]).astype(jnp.bfloat16)

    # ---- conv2 (3x3, dilation d, padding d) as 9 contiguous row-shifted matmuls.
    w2 = w2_ref[...]
    acc = jnp.zeros((L, w2.shape[-1]), jnp.float32)
    for kh in range(3):
        for kw in range(3):
            off = kh * d * Wp + kw * d
            acc = acc + jnp.dot(h1[off:off + L], w2[kh, kw],
                                preferred_element_type=jnp.float32)
    h2 = jnp.maximum(acc * s2_ref[...] + b2_ref[...], 0.0).astype(jnp.bfloat16)

    # ---- conv3 (1x1) + bn3 + residual + relu.
    h3 = jnp.dot(h2, w3_ref[...], preferred_element_type=jnp.float32)
    h3 = h3 * s3_ref[...] + b3_ref[...]
    res = x_ref[d * (Wp + 1):d * (Wp + 1) + L, :]   # interior of x == residual (f32)
    out_ref[...] = jnp.maximum(h3 + res, 0.0).astype(out_ref.dtype)


def bottleneck_forward(x_nchw, params, dilation=1, stride=1):
    """Wrapper: NCHW in / NCHW out.  Eval-mode BN folded into scale/bias."""
    if stride != 1:
        raise NotImplementedError("stride > 1 not implemented")  # TODO(synk)
    w1, s1, b1, w2, s2, b2, w3, s3, b3 = params
    N, Cin, H, W = x_nchw.shape
    Cb = w1.shape[1]
    Cout = w3.shape[1]
    assert Cout == Cin, "residual=None path requires planes == inplanes"

    d = dilation
    Hp, Wp = H + 2 * d, W + 2 * d
    P_in = Hp * Wp + 2 * d      # extra 2d zero rows keep every tap slice in-bounds
    L = H * Wp                  # flat output rows per batch element

    # ---- layout plumbing (fused by XLA under jit) ----
    # TODO(synk): in production keep the whole network NHWC to avoid this transpose.
    x = jnp.transpose(x_nchw, (0, 2, 3, 1))                          # NHWC
    x = jnp.pad(x, ((0, 0), (d, d), (d, d), (0, 0)))                 # spatial zero pad
    x = jnp.pad(x.reshape(N, Hp * Wp, Cin), ((0, 0), (0, 2 * d), (0, 0)))

    mask = jnp.pad(jnp.ones((H, W), jnp.float32), ((d, d), (d, d)))
    mask = jnp.pad(mask.reshape(Hp * Wp, 1), ((0, 2 * d), (0, 0)))

    kern = functools.partial(_bottleneck_kernel, d, H, Wp)

    flops = 2 * N * (P_in * Cin * Cb + 9 * L * Cb * Cb + L * Cb * Cout)
    bytes_accessed = int(
        x.size * x.dtype.itemsize
        + mask.size * mask.dtype.itemsize
        + N * L * Cout * x_nchw.dtype.itemsize
        + sum(int(p.size) * p.dtype.itemsize for p in params))

    def full(a):  # whole-array block, re-used (not re-DMA'd) across grid steps
        return pl.BlockSpec(a.shape, lambda b, _n=a.ndim: (0,) * _n)

    out_flat = pl.pallas_call(
        kern,
        out_shape=jax.ShapeDtypeStruct((N, L, Cout), x_nchw.dtype),
        grid_spec=pltpu.PrefetchScalarGridSpec(
            num_scalar_prefetch=0,
            grid=(N,),
            in_specs=[
                pl.BlockSpec((None, P_in, Cin), lambda b: (b, 0, 0)),
                full(mask),
                full(w1), full(s1), full(b1),
                full(w2), full(s2), full(b2),
                full(w3), full(s3), full(b3),
            ],
            out_specs=pl.BlockSpec((None, L, Cout), lambda b: (b, 0, 0)),
        ),
        compiler_params=pltpu.CompilerParams(
            dimension_semantics=("parallel",),          # megacore split on v7x
            vmem_limit_bytes=48 * 1024 * 1024,          # fits v7x 64 MiB with headroom
        ),
        cost_estimate=pl.CostEstimate(flops=flops, transcendentals=0,
                                      bytes_accessed=bytes_accessed),
    )(x, mask, w1, s1, b1, w2, s2, b2, w3, s3, b3)

    out = out_flat.reshape(N, H, Wp, Cout)[:, :, :W, :]   # drop flat-trick garbage cols
    return jnp.transpose(out, (0, 3, 1, 2))               # back to NCHW


def make_params(key, inplanes, planes):
    """Deterministic synthetic parameters matching Bottleneck.__init__ shapes."""
    bottle = planes // 2            # Bottleneck.expansion == 2
    ks = jax.random.split(key, 15)

    w1 = (0.1 * jax.random.normal(ks[0], (inplanes, bottle), jnp.float32)).astype(jnp.bfloat16)
    w2 = (0.1 * jax.random.normal(ks[1], (3, 3, bottle, bottle), jnp.float32)).astype(jnp.bfloat16)
    w3 = (0.1 * jax.random.normal(ks[2], (bottle, planes), jnp.float32)).astype(jnp.bfloat16)

    def bn_fold(kg, kb, km, kv, c):
        gamma = 1.0 + 0.1 * jax.random.normal(kg, (c,), jnp.float32)
        beta = 0.1 * jax.random.normal(kb, (c,), jnp.float32)
        mean = 0.1 * jax.random.normal(km, (c,), jnp.float32)
        var = jnp.abs(jax.random.normal(kv, (c,), jnp.float32)) + 0.5
        scale = gamma / jnp.sqrt(var + BN_EPS)
        bias = beta - mean * scale
        return scale.reshape(1, c), bias.reshape(1, c)

    s1, b1 = bn_fold(ks[3], ks[4], ks[5], ks[6], bottle)
    s2, b2 = bn_fold(ks[7], ks[8], ks[9], ks[10], bottle)
    s3, b3 = bn_fold(ks[11], ks[12], ks[13], ks[14], planes)
    return (w1, s1, b1, w2, s2, b2, w3, s3, b3)


def reference_forward(x_nchw, params, dilation=1):
    """Pure-JAX reference (eval-mode BN, bf16 matmul inputs, f32 accumulation)."""
    w1, s1, b1, w2, s2, b2, w3, s3, b3 = params
    d = dilation
    dn = ("NHWC", "HWIO", "NHWC")
    x = jnp.transpose(x_nchw, (0, 2, 3, 1))

    h = lax.conv_general_dilated(x.astype(jnp.bfloat16), w1.reshape(1, 1, *w1.shape),
                                 (1, 1), "VALID", dimension_numbers=dn,
                                 preferred_element_type=jnp.float32)
    h = jnp.maximum(h * s1 + b1, 0.0)

    h = lax.conv_general_dilated(h.astype(jnp.bfloat16), w2, (1, 1),
                                 [(d, d), (d, d)], rhs_dilation=(d, d),
                                 dimension_numbers=dn,
                                 preferred_element_type=jnp.float32)
    h = jnp.maximum(h * s2 + b2, 0.0)

    h = lax.conv_general_dilated(h.astype(jnp.bfloat16), w3.reshape(1, 1, *w3.shape),
                                 (1, 1), "VALID", dimension_numbers=dn,
                                 preferred_element_type=jnp.float32)
    h = h * s3 + b3
    h = jnp.maximum(h + x, 0.0)
    return jnp.transpose(h, (0, 3, 1, 2))


if __name__ == "__main__":
    key = jax.random.PRNGKey(0)
    kx, kp = jax.random.split(key)

    # residual=None path requires planes == inplanes.
    inplanes = planes = 64
    N, H, W = 2, 16, 16
    x = jax.random.normal(kx, (N, inplanes, H, W), jnp.float32)
    params = make_params(kp, inplanes, planes)

    fwd = jax.jit(bottleneck_forward, static_argnames=("dilation", "stride"))
    for dil in (1, 2):
        out = jax.block_until_ready(fwd(x, params, dilation=dil))
        ref = reference_forward(x, params, dilation=dil)
        assert out.shape == (N, planes, H, W), out.shape
        err = float(jnp.max(jnp.abs(out - ref)))
        # bf16 matmul inputs in both paths; residual / BN / accumulation in f32.
        assert jnp.allclose(out, ref, atol=2e-3, rtol=2e-3), \
            f"Pallas output mismatch (dilation={dil}, max|err|={err})"
    print("KERNEL_OK")
</pallas_src>

<mosaic_0001>
module attributes {stable_mosaic.version = 11 : i64} {
  func.func @_bottleneck_kernel(%arg0: i32, %arg1: memref<1x326x64xf32, #tpu.memory_space<vmem>>, %arg2: memref<326x1xf32, #tpu.memory_space<vmem>>, %arg3: memref<64x32xbf16, #tpu.memory_space<vmem>>, %arg4: memref<1x32xf32, #tpu.memory_space<vmem>>, %arg5: memref<1x32xf32, #tpu.memory_space<vmem>>, %arg6: memref<3x3x32x32xbf16, #tpu.memory_space<vmem>>, %arg7: memref<1x32xf32, #tpu.memory_space<vmem>>, %arg8: memref<1x32xf32, #tpu.memory_space<vmem>>, %arg9: memref<32x64xbf16, #tpu.memory_space<vmem>>, %arg10: memref<1x64xf32, #tpu.memory_space<vmem>>, %arg11: memref<1x64xf32, #tpu.memory_space<vmem>>, %arg12: memref<1x288x64xf32, #tpu.memory_space<vmem>>) attributes {dimension_semantics = [#tpu.dimension_semantics<parallel>], iteration_bounds = array<i64: 2>, scalar_prefetch = 0 : i64, scratch_operands = 0 : i64, tpu.core_type = #tpu.core_type<tc>, window_params = [{transform_indices = @transform_0, window_bounds = array<i64: 1, 326, 64>}, {pipeline_mode = #tpu.pipeline_mode<synchronous>, transform_indices = @transform_1, window_bounds = array<i64: 326, 1>}, {pipeline_mode = #tpu.pipeline_mode<synchronous>, transform_indices = @transform_2, window_bounds = array<i64: 64, 32>}, {pipeline_mode = #tpu.pipeline_mode<synchronous>, transform_indices = @transform_3, window_bounds = array<i64: 1, 32>}, {pipeline_mode = #tpu.pipeline_mode<synchronous>, transform_indices = @transform_4, window_bounds = array<i64: 1, 32>}, {pipeline_mode = #tpu.pipeline_mode<synchronous>, transform_indices = @transform_5, window_bounds = array<i64: 3, 3, 32, 32>}, {pipeline_mode = #tpu.pipeline_mode<synchronous>, transform_indices = @transform_6, window_bounds = array<i64: 1, 32>}, {pipeline_mode = #tpu.pipeline_mode<synchronous>, transform_indices = @transform_7, window_bounds = array<i64: 1, 32>}, {pipeline_mode = #tpu.pipeline_mode<synchronous>, transform_indices = @transform_8, window_bounds = array<i64: 32, 64>}, {pipeline_mode = #tpu.pipeline_mode<synchronous>, transform_indices = @transform_9, window_bounds = array<i64: 1, 64>}, {pipeline_mode = #tpu.pipeline_mode<synchronous>, transform_indices = @transform_10, window_bounds = array<i64: 1, 64>}, {transform_indices = @transform_11, window_bounds = array<i64: 1, 288, 64>}]} {
    %c0 = arith.constant 0 : index
    %c0_0 = arith.constant 0 : index
    %c0_1 = arith.constant 0 : index
    %0 = vector.load %arg1[%c0, %c0_0, %c0_1] : memref<1x326x64xf32, #tpu.memory_space<vmem>>, vector<1x326x64xf32>
    %1 = vector.shape_cast %0 : vector<1x326x64xf32> to vector<326x64xf32>
    %2 = arith.truncf %1 : vector<326x64xf32> to vector<326x64xbf16>
    %c0_2 = arith.constant 0 : index
    %c0_3 = arith.constant 0 : index
    %3 = vector.load %arg3[%c0_2, %c0_3] : memref<64x32xbf16, #tpu.memory_space<vmem>>, vector<64x32xbf16>
    %cst = arith.constant dense<0.000000e+00> : vector<326x32xf32>
    %4 = tpu.matmul %2, %3, %cst {dimension_numbers = #tpu.dot_dimension_numbers<[1], [0], [0], [1], [0, 0, 1, 1], [], []>} : vector<326x64xbf16>, vector<64x32xbf16>, vector<326x32xf32> -> vector<326x32xf32>
    %c0_4 = arith.constant 0 : index
    %c0_5 = arith.constant 0 : index
    %5 = vector.load %arg4[%c0_4, %c0_5] : memref<1x32xf32, #tpu.memory_space<vmem>>, vector<1x32xf32>
    %6 = vector.broadcast %5 : vector<1x32xf32> to vector<326x32xf32>
    %7 = arith.mulf %4, %6 : vector<326x32xf32>
    %c0_6 = arith.constant 0 : index
    %c0_7 = arith.constant 0 : index
    %8 = vector.load %arg5[%c0_6, %c0_7] : memref<1x32xf32, #tpu.memory_space<vmem>>, vector<1x32xf32>
    %9 = vector.broadcast %8 : vector<1x32xf32> to vector<326x32xf32>
    %10 = arith.addf %7, %9 : vector<326x32xf32>
    %cst_8 = arith.constant 0.000000e+00 : f32
    %11 = vector.broadcast %cst_8 : f32 to vector<326x32xf32>
    %12 = arith.maximumf %10, %11 : vector<326x32xf32>
    %c0_9 = arith.constant 0 : index
    %c0_10 = arith.constant 0 : index
    %13 = vector.load %arg2[%c0_9, %c0_10] : memref<326x1xf32, #tpu.memory_space<vmem>>, vector<326x1xf32>
    %14 = vector.broadcast %13 : vector<326x1xf32> to vector<326x32xf32>
    %15 = arith.mulf %12, %14 : vector<326x32xf32>
    %16 = arith.truncf %15 : vector<326x32xf32> to vector<326x32xbf16>
    %c0_11 = arith.constant 0 : index
    %c0_12 = arith.constant 0 : index
    %c0_13 = arith.constant 0 : index
    %c0_14 = arith.constant 0 : index
    %17 = vector.load %arg6[%c0_11, %c0_12, %c0_13, %c0_14] : memref<3x3x32x32xbf16, #tpu.memory_space<vmem>>, vector<3x3x32x32xbf16>
    %cst_15 = arith.constant 0.000000e+00 : f32
    %18 = vector.broadcast %cst_15 : f32 to vector<288x32xf32>
    %19 = vector.extract_strided_slice %16 {offsets = [0, 0], sizes = [288, 32], strides = [1, 1]} : vector<326x32xbf16> to vector<288x32xbf16>
    %20 = vector.extract_strided_slice %17 {offsets = [0, 0, 0, 0], sizes = [1, 1, 32, 32], strides = [1, 1, 1, 1]} : vector<3x3x32x32xbf16> to vector<1x1x32x32xbf16>
    %21 = vector.shape_cast %20 : vector<1x1x32x32xbf16> to vector<32x32xbf16>
    %cst_16 = arith.constant dense<0.000000e+00> : vector<288x32xf32>
    %22 = tpu.matmul %19, %21, %cst_16 {dimension_numbers = #tpu.dot_dimension_numbers<[1], [0], [0], [1], [0, 0, 1, 1], [], []>} : vector<288x32xbf16>, vector<32x32xbf16>, vector<288x32xf32> -> vector<288x32xf32>
    %23 = arith.addf %18, %22 : vector<288x32xf32>
    %24 = vector.extract_strided_slice %16 {offsets = [1, 0], sizes = [288, 32], strides = [1, 1]} : vector<326x32xbf16> to vector<288x32xbf16>
    %25 = vector.extract_strided_slice %17 {offsets = [0, 1, 0, 0], sizes = [1, 1, 32, 32], strides = [1, 1, 1, 1]} : vector<3x3x32x32xbf16> to vector<1x1x32x32xbf16>
    %26 = vector.shape_cast %25 : vector<1x1x32x32xbf16> to vector<32x32xbf16>
    %cst_17 = arith.constant dense<0.000000e+00> : vector<288x32xf32>
    %27 = tpu.matmul %24, %26, %cst_17 {dimension_numbers = #tpu.dot_dimension_numbers<[1], [0], [0], [1], [0, 0, 1, 1], [], []>} : vector<288x32xbf16>, vector<32x32xbf16>, vector<288x32xf32> -> vector<288x32xf32>
    %28 = arith.addf %23, %27 : vector<288x32xf32>
    %29 = vector.extract_strided_slice %16 {offsets = [2, 0], sizes = [288, 32], strides = [1, 1]} : vector<326x32xbf16> to vector<288x32xbf16>
    %30 = vector.extract_strided_slice %17 {offsets = [0, 2, 0, 0], sizes = [1, 1, 32, 32], strides = [1, 1, 1, 1]} : vector<3x3x32x32xbf16> to vector<1x1x32x32xbf16>
    %31 = vector.shape_cast %30 : vector<1x1x32x32xbf16> to vector<32x32xbf16>
    %cst_18 = arith.constant dense<0.000000e+00> : vector<288x32xf32>
    %32 = tpu.matmul %29, %31, %cst_18 {dimension_numbers = #tpu.dot_dimension_numbers<[1], [0], [0], [1], [0, 0, 1, 1], [], []>} : vector<288x32xbf16>, vector<32x32xbf16>, vector<288x32xf32> -> vector<288x32xf32>
    %33 = arith.addf %28, %32 : vector<288x32xf32>
    %34 = vector.extract_strided_slice %16 {offsets = [18, 0], sizes = [288, 32], strides = [1, 1]} : vector<326x32xbf16> to vector<288x32xbf16>
    %35 = vector.extract_strided_slice %17 {offsets = [1, 0, 0, 0], sizes = [1, 1, 32, 32], strides = [1, 1, 1, 1]} : vector<3x3x32x32xbf16> to vector<1x1x32x32xbf16>
    %36 = vector.shape_cast %35 : vector<1x1x32x32xbf16> to vector<32x32xbf16>
    %cst_19 = arith.constant dense<0.000000e+00> : vector<288x32xf32>
    %37 = tpu.matmul %34, %36, %cst_19 {dimension_numbers = #tpu.dot_dimension_numbers<[1], [0], [0], [1], [0, 0, 1, 1], [], []>} : vector<288x32xbf16>, vector<32x32xbf16>, vector<288x32xf32> -> vector<288x32xf32>
    %38 = arith.addf %33, %37 : vector<288x32xf32>
    %39 = vector.extract_strided_slice %16 {offsets = [19, 0], sizes = [288, 32], strides = [1, 1]} : vector<326x32xbf16> to vector<288x32xbf16>
    %40 = vector.extract_strided_slice %17 {offsets = [1, 1, 0, 0], sizes = [1, 1, 32, 32], strides = [1, 1, 1, 1]} : vector<3x3x32x32xbf16> to vector<1x1x32x32xbf16>
    %41 = vector.shape_cast %40 : vector<1x1x32x32xbf16> to vector<32x32xbf16>
    %cst_20 = arith.constant dense<0.000000e+00> : vector<288x32xf32>
    %42 = tpu.matmul %39, %41, %cst_20 {dimension_numbers = #tpu.dot_dimension_numbers<[1], [0], [0], [1], [0, 0, 1, 1], [], []>} : vector<288x32xbf16>, vector<32x32xbf16>, vector<288x32xf32> -> vector<288x32xf32>
    %43 = arith.addf %38, %42 : vector<288x32xf32>
    %44 = vector.extract_strided_slice %16 {offsets = [20, 0], sizes = [288, 32], strides = [1, 1]} : vector<326x32xbf16> to vector<288x32xbf16>
    %45 = vector.extract_strided_slice %17 {offsets = [1, 2, 0, 0], sizes = [1, 1, 32, 32], strides = [1, 1, 1, 1]} : vector<3x3x32x32xbf16> to vector<1x1x32x32xbf16>
    %46 = vector.shape_cast %45 : vector<1x1x32x32xbf16> to vector<32x32xbf16>
    %cst_21 = arith.constant dense<0.000000e+00> : vector<288x32xf32>
    %47 = tpu.matmul %44, %46, %cst_21 {dimension_numbers = #tpu.dot_dimension_numbers<[1], [0], [0], [1], [0, 0, 1, 1], [], []>} : vector<288x32xbf16>, vector<32x32xbf16>, vector<288x32xf32> -> vector<288x32xf32>
    %48 = arith.addf %43, %47 : vector<288x32xf32>
    %49 = vector.extract_strided_slice %16 {offsets = [36, 0], sizes = [288, 32], strides = [1, 1]} : vector<326x32xbf16> to vector<288x32xbf16>
    %50 = vector.extract_strided_slice %17 {offsets = [2, 0, 0, 0], sizes = [1, 1, 32, 32], strides = [1, 1, 1, 1]} : vector<3x3x32x32xbf16> to vector<1x1x32x32xbf16>
    %51 = vector.shape_cast %50 : vector<1x1x32x32xbf16> to vector<32x32xbf16>
    %cst_22 = arith.constant dense<0.000000e+00> : vector<288x32xf32>
    %52 = tpu.matmul %49, %51, %cst_22 {dimension_numbers = #tpu.dot_dimension_numbers<[1], [0], [0], [1], [0, 0, 1, 1], [], []>} : vector<288x32xbf16>, vector<32x32xbf16>, vector<288x32xf32> -> vector<288x32xf32>
    %53 = arith.addf %48, %52 : vector<288x32xf32>
    %54 = vector.extract_strided_slice %16 {offsets = [37, 0], sizes = [288, 32], strides = [1, 1]} : vector<326x32xbf16> to vector<288x32xbf16>
    %55 = vector.extract_strided_slice %17 {offsets = [2, 1, 0, 0], sizes = [1, 1, 32, 32], strides = [1, 1, 1, 1]} : vector<3x3x32x32xbf16> to vector<1x1x32x32xbf16>
    %56 = vector.shape_cast %55 : vector<1x1x32x32xbf16> to vector<32x32xbf16>
    %cst_23 = arith.constant dense<0.000000e+00> : vector<288x32xf32>
    %57 = tpu.matmul %54, %56, %cst_23 {dimension_numbers = #tpu.dot_dimension_numbers<[1], [0], [0], [1], [0, 0, 1, 1], [], []>} : vector<288x32xbf16>, vector<32x32xbf16>, vector<288x32xf32> -> vector<288x32xf32>
    %58 = arith.addf %53, %57 : vector<288x32xf32>
    %59 = vector.extract_strided_slice %16 {offsets = [38, 0], sizes = [288, 32], strides = [1, 1]} : vector<326x32xbf16> to vector<288x32xbf16>
    %60 = vector.extract_strided_slice %17 {offsets = [2, 2, 0, 0], sizes = [1, 1, 32, 32], strides = [1, 1, 1, 1]} : vector<3x3x32x32xbf16> to vector<1x1x32x32xbf16>
    %61 = vector.shape_cast %60 : vector<1x1x32x32xbf16> to vector<32x32xbf16>
    %cst_24 = arith.constant dense<0.000000e+00> : vector<288x32xf32>
    %62 = tpu.matmul %59, %61, %cst_24 {dimension_numbers = #tpu.dot_dimension_numbers<[1], [0], [0], [1], [0, 0, 1, 1], [], []>} : vector<288x32xbf16>, vector<32x32xbf16>, vector<288x32xf32> -> vector<288x32xf32>
    %63 = arith.addf %58, %62 : vector<288x32xf32>
    %c0_25 = arith.constant 0 : index
    %c0_26 = arith.constant 0 : index
    %64 = vector.load %arg7[%c0_25, %c0_26] : memref<1x32xf32, #tpu.memory_space<vmem>>, vector<1x32xf32>
    %65 = vector.broadcast %64 : vector<1x32xf32> to vector<288x32xf32>
    %66 = arith.mulf %63, %65 : vector<288x32xf32>
    %c0_27 = arith.constant 0 : index
    %c0_28 = arith.constant 0 : index
    %67 = vector.load %arg8[%c0_27, %c0_28] : memref<1x32xf32, #tpu.memory_space<vmem>>, vector<1x32xf32>
    %68 = vector.broadcast %67 : vector<1x32xf32> to vector<288x32xf32>
    %69 = arith.addf %66, %68 : vector<288x32xf32>
    %cst_29 = arith.constant 0.000000e+00 : f32
    %70 = vector.broadcast %cst_29 : f32 to vector<288x32xf32>
    %71 = arith.maximumf %69, %70 : vector<288x32xf32>
    %72 = arith.truncf %71 : vector<288x32xf32> to vector<288x32xbf16>
    %c0_30 = arith.constant 0 : index
    %c0_31 = arith.constant 0 : index
    %73 = vector.load %arg9[%c0_30, %c0_31] : memref<32x64xbf16, #tpu.memory_space<vmem>>, vector<32x64xbf16>
    %cst_32 = arith.constant dense<0.000000e+00> : vector<288x64xf32>
    %74 = tpu.matmul %72, %73, %cst_32 {dimension_numbers = #tpu.dot_dimension_numbers<[1], [0], [0], [1], [0, 0, 1, 1], [], []>} : vector<288x32xbf16>, vector<32x64xbf16>, vector<288x64xf32> -> vector<288x64xf32>
    %c0_33 = arith.constant 0 : index
    %c0_34 = arith.constant 0 : index
    %75 = vector.load %arg10[%c0_33, %c0_34] : memref<1x64xf32, #tpu.memory_space<vmem>>, vector<1x64xf32>
    %76 = vector.broadcast %75 : vector<1x64xf32> to vector<288x64xf32>
    %77 = arith.mulf %74, %76 : vector<288x64xf32>
    %c0_35 = arith.constant 0 : index
    %c0_36 = arith.constant 0 : index
    %78 = vector.load %arg11[%c0_35, %c0_36] : memref<1x64xf32, #tpu.memory_space<vmem>>, vector<1x64xf32>
    %79 = vector.broadcast %78 : vector<1x64xf32> to vector<288x64xf32>
    %80 = arith.addf %77, %79 : vector<288x64xf32>
    %c0_37 = arith.constant 0 : index
    %c19 = arith.constant 19 : index
    %c0_38 = arith.constant 0 : index
    %81 = vector.load %arg1[%c0_37, %c19, %c0_38] : memref<1x326x64xf32, #tpu.memory_space<vmem>>, vector<1x288x64xf32>
    %82 = vector.shape_cast %81 : vector<1x288x64xf32> to vector<288x64xf32>
    %83 = arith.addf %80, %82 : vector<288x64xf32>
    %cst_39 = arith.constant 0.000000e+00 : f32
    %84 = vector.broadcast %cst_39 : f32 to vector<288x64xf32>
    %85 = arith.maximumf %83, %84 : vector<288x64xf32>
    %c0_40 = arith.constant 0 : index
    %c0_41 = arith.constant 0 : index
    %c0_42 = arith.constant 0 : index
    %86 = vector.load %arg12[%c0_40, %c0_41, %c0_42] : memref<1x288x64xf32, #tpu.memory_space<vmem>>, vector<1x288x64xf32>
    %87 = vector.shape_cast %86 : vector<1x288x64xf32> to vector<288x64xf32>
    %88 = vector.shape_cast %85 : vector<288x64xf32> to vector<1x288x64xf32>
    tpu.vector_store %arg12[%c0_40, %c0_41, %c0_42], %88 {strides = array<i32>} : memref<1x288x64xf32, #tpu.memory_space<vmem>>, vector<1x288x64xf32>,
    return
  }
  func.func @transform_0(%arg0: i32) -> (i32, i32, i32) {
    %c0_i32 = arith.constant 0 : i32
    %c0_i32_0 = arith.constant 0 : i32
    %c0_i32_1 = arith.constant 0 : i32
    return %arg0, %c0_i32, %c0_i32_0 : i32, i32, i32
  }
  func.func @transform_1(%arg0: i32) -> (i32, i32) {
    %c0_i32 = arith.constant 0 : i32
    %c0_i32_0 = arith.constant 0 : i32
    %c0_i32_1 = arith.constant 0 : i32
    return %c0_i32, %c0_i32_0 : i32, i32
  }
  func.func @transform_2(%arg0: i32) -> (i32, i32) {
    %c0_i32 = arith.constant 0 : i32
    %c0_i32_0 = arith.constant 0 : i32
    %c0_i32_1 = arith.constant 0 : i32
    return %c0_i32, %c0_i32_0 : i32, i32
  }
  func.func @transform_3(%arg0: i32) -> (i32, i32) {
    %c0_i32 = arith.constant 0 : i32
    %c0_i32_0 = arith.constant 0 : i32
    %c0_i32_1 = arith.constant 0 : i32
    return %c0_i32, %c0_i32_0 : i32, i32
  }
  func.func @transform_4(%arg0: i32) -> (i32, i32) {
    %c0_i32 = arith.constant 0 : i32
    %c0_i32_0 = arith.constant 0 : i32
    %c0_i32_1 = arith.constant 0 : i32
    return %c0_i32, %c0_i32_0 : i32, i32
  }
  func.func @transform_5(%arg0: i32) -> (i32, i32, i32, i32) {
    %c0_i32 = arith.constant 0 : i32
    %c0_i32_0 = arith.constant 0 : i32
    %c0_i32_1 = arith.constant 0 : i32
    %c0_i32_2 = arith.constant 0 : i32
    %c0_i32_3 = arith.constant 0 : i32
    return %c0_i32, %c0_i32_0, %c0_i32_1, %c0_i32_2 : i32, i32, i32, i32
  }
  func.func @transform_6(%arg0: i32) -> (i32, i32) {
    %c0_i32 = arith.constant 0 : i32
    %c0_i32_0 = arith.constant 0 : i32
    %c0_i32_1 = arith.constant 0 : i32
    return %c0_i32, %c0_i32_0 : i32, i32
  }
  func.func @transform_7(%arg0: i32) -> (i32, i32) {
    %c0_i32 = arith.constant 0 : i32
    %c0_i32_0 = arith.constant 0 : i32
    %c0_i32_1 = arith.constant 0 : i32
    return %c0_i32, %c0_i32_0 : i32, i32
  }
  func.func @transform_8(%arg0: i32) -> (i32, i32) {
    %c0_i32 = arith.constant 0 : i32
    %c0_i32_0 = arith.constant 0 : i32
    %c0_i32_1 = arith.constant 0 : i32
    return %c0_i32, %c0_i32_0 : i32, i32
  }
  func.func @transform_9(%arg0: i32) -> (i32, i32) {
    %c0_i32 = arith.constant 0 : i32
    %c0_i32_0 = arith.constant 0 : i32
    %c0_i32_1 = arith.constant 0 : i32
    return %c0_i32, %c0_i32_0 : i32, i32
  }
  func.func @transform_10(%arg0: i32) -> (i32, i32) {
    %c0_i32 = arith.constant 0 : i32
    %c0_i32_0 = arith.constant 0 : i32
    %c0_i32_1 = arith.constant 0 : i32
    return %c0_i32, %c0_i32_0 : i32, i32
  }
  func.func @transform_11(%arg0: i32) -> (i32, i32, i32) {
    %c0_i32 = arith.constant 0 : i32
    %c0_i32_0 = arith.constant 0 : i32
    %c0_i32_1 = arith.constant 0 : i32
    return %arg0, %c0_i32, %c0_i32_0 : i32, i32, i32
  }
}

</mosaic_0001>

<llo_original>
// kernel: bottleneck_forward.1
$region0: #{bottleneck_forward.1}
  #allocation0 [shape = 'u32[]', space=smem, size = 0x4, offset = 0x4, fixed_abs, tag = 'smem constant byte address 0x4 - core index']
  #allocation1 [shape = 'u32[144,128]{1,0:T(1,128)}', space=vmem, size = 0x12000, scoped, tag = 'internal scratch']
  %s0 = inlined_call_operand.vmem [shape: f32[2,326,64], index: 0, kind: input, shape index: {}]
  %s1 = inlined_call_operand.vmem [shape: f32[326,1], index: 1, kind: input, shape index: {}]
  %s2 = inlined_call_operand.vmem [shape: bf16[64,32], index: 2, kind: input, shape index: {}]
  %s3 = inlined_call_operand.vmem [shape: f32[1,32], index: 3, kind: input, shape index: {}]
  %s4 = inlined_call_operand.vmem [shape: f32[1,32], index: 4, kind: input, shape index: {}]
  %s5 = inlined_call_operand.vmem [shape: bf16[3,3,32,32], index: 5, kind: input, shape index: {}]
  %s6 = inlined_call_operand.vmem [shape: f32[1,32], index: 6, kind: input, shape index: {}]
  %s7 = inlined_call_operand.vmem [shape: f32[1,32], index: 7, kind: input, shape index: {}]
  %s8 = inlined_call_operand.vmem [shape: bf16[32,64], index: 8, kind: input, shape index: {}]
  %s9 = inlined_call_operand.vmem [shape: f32[1,64], index: 9, kind: input, shape index: {}]
  %s10 = inlined_call_operand.vmem [shape: f32[1,64], index: 10, kind: input, shape index: {}]
  %s11 = inlined_call_operand.vmem [shape: f32[2,288,64], index: 11, kind: output, shape index: {}]
  %s12 = sld [smem:[#allocation0]]
  $region77: #{bottleneck_forward.1} parent=0
    _
  %s14 = ssub.s32 1, %s12
  %s15 = scalar_select 0, %s14, %s12
  loop: start=0, step=1, limit=4
  $region2: #{bottleneck_forward.1} parent=0 // loop_pre_header
    _
  $region3: #{bottleneck_forward.1} parent=0 // loop_header
    %s17 = sphi 0, %s21
    %p18 = scmp.ge.s32.totalorder %s17, 4
    %s27 = sphi 0, %s29
    %s30 = sphi 0, %s27
    %s31 = sphi 0, %s30
    %s47 = sphi 0, %s31
    %s51 = sphi 0, %s51
    %s53 = sphi 0, %s51
    %s54 = sphi 0, %s53
    %s68 = sphi 0, %s54
    %s72 = sphi 0, %s72
    %s74 = sphi 0, %s72
    %s75 = sphi 0, %s74
    %s89 = sphi 0, %s75
    %s93 = sphi 0, %s93
    %s95 = sphi 0, %s93
    %s96 = sphi 0, %s95
    %s110 = sphi 0, %s96
    %s114 = sphi 0, %s114
    %s116 = sphi 0, %s114
    %s117 = sphi 0, %s116
    %s131 = sphi 0, %s117
    %s135 = sphi 0, %s135
    %s137 = sphi 0, %s135
    %s138 = sphi 0, %s137
    %s152 = sphi 0, %s138
    %s156 = sphi 0, %s156
    %s158 = sphi 0, %s156
    %s159 = sphi 0, %s158
    %s173 = sphi 0, %s159
    %s177 = sphi 0, %s177
    %s179 = sphi 0, %s177
    %s180 = sphi 0, %s179
    %s194 = sphi 0, %s180
    %s198 = sphi 0, %s198
    %s200 = sphi 0, %s198
    %s201 = sphi 0, %s200
    %s215 = sphi 0, %s201
    %s219 = sphi 0, %s219
    %s221 = sphi 0, %s219
    %s222 = sphi 0, %s221
    %s236 = sphi 0, %s222
    %s240 = sphi 0, %s240
    %s242 = sphi 0, %s240
    %s243 = sphi 0, %s242
    %s257 = sphi 0, %s243
    %s263 = sphi 0, %s265
    %s266 = sphi 0, %s263
    %s267 = sphi 0, %s266
    %s283 = sphi 0, %s267
  $region4: #{bottleneck_forward.1} parent=0 // loop_header_branch
    %20 = sbr.rel (%p18) target = $region8
  $region5: #{bottleneck_forward.1} parent=0 // loop_body
    %s22 = ssub.s32 %s17, 1
    %s23 = ssub.s32 %s17, 2
    %s24 = sadd.s32 %s17, 1
    %s25 = ssub.s32 %s17, %s24
    %p26 = scmp.eq.s32.totalorder %s25, 0
    %s28 = sadd.s32 %s27, 1
    %s29 = scalar_select %p26, %s27, %s28
    %p32 = pneg %p26
    %p33 = scmp.eq.s32.totalorder %s17, 1
    %p34 = por %p32, %p33
    %p35 = scmp.ne.s32.totalorder %s27, %s30
    %p36 = scmp.eq.s32.totalorder %s17, 0
    %p37 = por %p35, %p36
    %p38 = scmp.ne.s32.totalorder %s27, %s30
    %p39 = scmp.eq.s32.totalorder %s22, 1
    %p40 = por %p38, %p39
    %p41 = scmp.ne.s32.totalorder %s30, %s31
    %p42 = scmp.eq.s32.totalorder %s22, 0
    %p43 = por %p41, %p42
    %p44 = scmp.ne.s32.totalorder %s30, %s31
    %p45 = scmp.eq.s32.totalorder %s23, 1
    %p46 = por %p44, %p45
    %p48 = scmp.ne.s32.totalorder %s31, %s47
    %p49 = scmp.eq.s32.totalorder %s23, 0
    %p50 = por %p48, %p49
    %s52 = sadd.s32 %s51, 1
    %p55 = scmp.eq.s32.totalorder %s17, 1
    %p56 = scmp.ne.s32.totalorder %s51, %s53
    %p57 = scmp.eq.s32.totalorder %s17, 0
    %p58 = por %p56, %p57
    %p59 = scmp.ne.s32.totalorder %s51, %s53
    %p60 = scmp.eq.s32.totalorder %s22, 1
    %p61 = por %p59, %p60
    %p62 = scmp.ne.s32.totalorder %s53, %s54
    %p63 = scmp.eq.s32.totalorder %s22, 0
    %p64 = por %p62, %p63
    %p65 = scmp.ne.s32.totalorder %s53, %s54
    %p66 = scmp.eq.s32.totalorder %s23, 1
    %p67 = por %p65, %p66
    %p69 = scmp.ne.s32.totalorder %s54, %s68
    %p70 = scmp.eq.s32.totalorder %s23, 0
    %p71 = por %p69, %p70
    %s73 = sadd.s32 %s72, 1
    %p76 = scmp.eq.s32.totalorder %s17, 1
    %p77 = scmp.ne.s32.totalorder %s72, %s74
    %p78 = scmp.eq.s32.totalorder %s17, 0
    %p79 = por %p77, %p78
    %p80 = scmp.ne.s32.totalorder %s72, %s74
    %p81 = scmp.eq.s32.totalorder %s22, 1
    %p82 = por %p80, %p81
    %p83 = scmp.ne.s32.totalorder %s74, %s75
    %p84 = scmp.eq.s32.totalorder %s22, 0
    %p85 = por %p83, %p84
    %p86 = scmp.ne.s32.totalorder %s74, %s75
    %p87 = scmp.eq.s32.totalorder %s23, 1
    %p88 = por %p86, %p87
    %p90 = scmp.ne.s32.totalorder %s75, %s89
    %p91 = scmp.eq.s32.totalorder %s23, 0
    %p92 = por %p90, %p91
    %s94 = sadd.s32 %s93, 1
    %p97 = scmp.eq.s32.totalorder %s17, 1
    %p98 = scmp.ne.s32.totalorder %s93, %s95
    %p99 = scmp.eq.s32.totalorder %s17, 0
    %p100 = por %p98, %p99
    %p101 = scmp.ne.s32.totalorder %s93, %s95
    %p102 = scmp.eq.s32.totalorder %s22, 1
    %p103 = por %p101, %p102
    %p104 = scmp.ne.s32.totalorder %s95, %s96
    %p105 = scmp.eq.s32.totalorder %s22, 0
    %p106 = por %p104, %p105
    %p107 = scmp.ne.s32.totalorder %s95, %s96
    %p108 = scmp.eq.s32.totalorder %s23, 1
    %p109 = por %p107, %p108
    %p111 = scmp.ne.s32.totalorder %s96, %s110
    %p112 = scmp.eq.s32.totalorder %s23, 0
    %p113 = por %p111, %p112
    %s115 = sadd.s32 %s114, 1
    %p118 = scmp.eq.s32.totalorder %s17, 1
    %p119 = scmp.ne.s32.totalorder %s114, %s116
    %p120 = scmp.eq.s32.totalorder %s17, 0
    %p121 = por %p119, %p120
    %p122 = scmp.ne.s32.totalorder %s114, %s116
    %p123 = scmp.eq.s32.totalorder %s22, 1
    %p124 = por %p122, %p123
    %p125 = scmp.ne.s32.totalorder %s116, %s117
    %p126 = scmp.eq.s32.totalorder %s22, 0
    %p127 = por %p125, %p126
    %p128 = scmp.ne.s32.totalorder %s116, %s117
    %p129 = scmp.eq.s32.totalorder %s23, 1
    %p130 = por %p128, %p129
    %p132 = scmp.ne.s32.totalorder %s117, %s131
    %p133 = scmp.eq.s32.totalorder %s23, 0
    %p134 = por %p132, %p133
    %s136 = sadd.s32 %s135, 1
    %p139 = scmp.eq.s32.totalorder %s17, 1
    %p140 = scmp.ne.s32.totalorder %s135, %s137
    %p141 = scmp.eq.s32.totalorder %s17, 0
    %p142 = por %p140, %p141
    %p143 = scmp.ne.s32.totalorder %s135, %s137
    %p144 = scmp.eq.s32.totalorder %s22, 1
    %p145 = por %p143, %p144
    %p146 = scmp.ne.s32.totalorder %s137, %s138
    %p147 = scmp.eq.s32.totalorder %s22, 0
    %p148 = por %p146, %p147
    %p149 = scmp.ne.s32.totalorder %s137, %s138
    %p150 = scmp.eq.s32.totalorder %s23, 1
    %p151 = por %p149, %p150
    %p153 = scmp.ne.s32.totalorder %s138, %s152
    %p154 = scmp.eq.s32.totalorder %s23, 0
    %p155 = por %p153, %p154
    %s157 = sadd.s32 %s156, 1
    %p160 = scmp.eq.s32.totalorder %s17, 1
    %p161 = scmp.ne.s32.totalorder %s156, %s158
    %p162 = scmp.eq.s32.totalorder %s17, 0
    %p163 = por %p161, %p162
    %p164 = scmp.ne.s32.totalorder %s156, %s158
    %p165 = scmp.eq.s32.totalorder %s22, 1
    %p166 = por %p164, %p165
    %p167 = scmp.ne.s32.totalorder %s158, %s159
    %p168 = scmp.eq.s32.totalorder %s22, 0
    %p169 = por %p167, %p168
    %p170 = scmp.ne.s32.totalorder %s158, %s159
    %p171 = scmp.eq.s32.totalorder %s23, 1
    %p172 = por %p170, %p171
    %p174 = scmp.ne.s32.totalorder %s159, %s173
    %p175 = scmp.eq.s32.totalorder %s23, 0
    %p176 = por %p174, %p175
    %s178 = sadd.s32 %s177, 1
    %p181 = scmp.eq.s32.totalorder %s17, 1
    %p182 = scmp.ne.s32.totalorder %s177, %s179
    %p183 = scmp.eq.s32.totalorder %s17, 0
    %p184 = por %p182, %p183
    %p185 = scmp.ne.s32.totalorder %s177, %s179
    %p186 = scmp.eq.s32.totalorder %s22, 1
    %p187 = por %p185, %p186
    %p188 = scmp.ne.s32.totalorder %s179, %s180
    %p189 = scmp.eq.s32.totalorder %s22, 0
    %p190 = por %p188, %p189
    %p191 = scmp.ne.s32.totalorder %s179, %s180
    %p192 = scmp.eq.s32.totalorder %s23, 1
    %p193 = por %p191, %p192
    %p195 = scmp.ne.s32.totalorder %s180, %s194
    %p196 = scmp.eq.s32.totalorder %s23, 0
    %p197 = por %p195, %p196
    %s199 = sadd.s32 %s198, 1
    %p202 = scmp.eq.s32.totalorder %s17, 1
    %p203 = scmp.ne.s32.totalorder %s198, %s200
    %p204 = scmp.eq.s32.totalorder %s17, 0
    %p205 = por %p203, %p204
    %p206 = scmp.ne.s32.totalorder %s198, %s200
    %p207 = scmp.eq.s32.totalorder %s22, 1
    %p208 = por %p206, %p207
    %p209 = scmp.ne.s32.totalorder %s200, %s201
    %p210 = scmp.eq.s32.totalorder %s22, 0
    %p211 = por %p209, %p210
    %p212 = scmp.ne.s32.totalorder %s200, %s201
    %p213 = scmp.eq.s32.totalorder %s23, 1
    %p214 = por %p212, %p213
    %p216 = scmp.ne.s32.totalorder %s201, %s215
    %p217 = scmp.eq.s32.totalorder %s23, 0
    %p218 = por %p216, %p217
    %s220 = sadd.s32 %s219, 1
    %p223 = scmp.eq.s32.totalorder %s17, 1
    %p224 = scmp.ne.s32.totalorder %s219, %s221
    %p225 = scmp.eq.s32.totalorder %s17, 0
    %p226 = por %p224, %p225
    %p227 = scmp.ne.s32.totalorder %s219, %s221
    %p228 = scmp.eq.s32.totalorder %s22, 1
    %p229 = por %p227, %p228
    %p230 = scmp.ne.s32.totalorder %s221, %s222
    %p231 = scmp.eq.s32.totalorder %s22, 0
    %p232 = por %p230, %p231
    %p233 = scmp.ne.s32.totalorder %s221, %s222
    %p234 = scmp.eq.s32.totalorder %s23, 1
    %p235 = por %p233, %p234
    %p237 = scmp.ne.s32.totalorder %s222, %s236
    %p238 = scmp.eq.s32.totalorder %s23, 0
    %p239 = por %p237, %p238
    %s241 = sadd.s32 %s240, 1
    %p244 = scmp.eq.s32.totalorder %s17, 1
    %p245 = scmp.ne.s32.totalorder %s240, %s242
    %p246 = scmp.eq.s32.totalorder %s17, 0
    %p247 = por %p245, %p246
    %p248 = scmp.ne.s32.totalorder %s240, %s242
    %p249 = scmp.eq.s32.totalorder %s22, 1
    %p250 = por %p248, %p249
    %p251 = scmp.ne.s32.totalorder %s242, %s243
    %p252 = scmp.eq.s32.totalorder %s22, 0
    %p253 = por %p251, %p252
    %p254 = scmp.ne.s32.totalorder %s242, %s243
    %p255 = scmp.eq.s32.totalorder %s23, 1
    %p256 = por %p254, %p255
    %p258 = scmp.ne.s32.totalorder %s243, %s257
    %p259 = scmp.eq.s32.totalorder %s23, 0
    %p260 = por %p258, %p259
    %s261 = ssub.s32 %s17, %s24
    %p262 = scmp.eq.s32.totalorder %s261, 0
    %s264 = sadd.s32 %s263, 1
    %s265 = scalar_select %p262, %s263, %s264
    %p268 = pneg %p262
    %p269 = scmp.eq.s32.totalorder %s17, 1
    %p270 = por %p268, %p269
    %p271 = scmp.ne.s32.totalorder %s263, %s266
    %p272 = scmp.eq.s32.totalorder %s17, 0
    %p273 = por %p271, %p272
    %p274 = scmp.ne.s32.totalorder %s263, %s266
    %p275 = scmp.eq.s32.totalorder %s22, 1
    %p276 = por %p274, %p275
    %p277 = scmp.ne.s32.totalorder %s266, %s267
    %p278 = scmp.eq.s32.totalorder %s22, 0
    %p279 = por %p277, %p278
    %p280 = scmp.ne.s32.totalorder %s266, %s267
    %p281 = scmp.eq.s32.totalorder %s23, 1
    %p282 = por %p280, %p281
    %p284 = scmp.ne.s32.totalorder %s267, %s283
    %p285 = scmp.eq.s32.totalorder %s23, 0
    %p286 = por %p284, %p285
    %p287 = scmp.le.s32.totalorder 1, %s17
    %p288 = scmp.lt.s32.totalorder %s17, 3
    %p289 = pnand %p287, %p288
    %p290 = pneg %p289
    // Predicated region
    $region9: #{bottleneck_forward.1} parent=5 // pred_check
      _
    $region10: #{bottleneck_forward.1} parent=5 // pred_check_branch
      %292 = sbr.rel (%p289) target = $region12
    $region11: #{bottleneck_forward.1} parent=5 // pred_region
      %s293 = ssub.s32 %s17, 1
      // Predicated region
      $region13: #{bottleneck_forward.1} parent=11 // pred_check
        %p294 = pneg %p64
      $region14: #{bottleneck_forward.1} parent=11 // pred_check_branch
        %296 = sbr.rel (%p294) target = $region16
      $region15: #{bottleneck_forward.1} parent=11 // pred_region
        _
      $region16: #{bottleneck_forward.1} parent=11 // pred_fallthru
        _
      // Predicated region
      $region17: #{bottleneck_forward.1} parent=11 // pred_check
        %p297 = pneg %p85
      $region18: #{bottleneck_forward.1} parent=11 // pred_check_branch
        %299 = sbr.rel (%p297) target = $region20
      $region19: #{bottleneck_forward.1} parent=11 // pred_region
        _
      $region20: #{bottleneck_forward.1} parent=11 // pred_fallthru
        _
      // Predicated region
      $region21: #{bottleneck_forward.1} parent=11 // pred_check
        %p300 = pneg %p106
      $region22: #{bottleneck_forward.1} parent=11 // pred_check_branch
        %302 = sbr.rel (%p300) target = $region24
      $region23: #{bottleneck_forward.1} parent=11 // pred_region
        _
      $region24: #{bottleneck_forward.1} parent=11 // pred_fallthru
        _
      // Predicated region
      $region25: #{bottleneck_forward.1} parent=11 // pred_check
        %p303 = pneg %p127
      $region26: #{bottleneck_forward.1} parent=11 // pred_check_branch
        %305 = sbr.rel (%p303) target = $region28
      $region27: #{bottleneck_forward.1} parent=11 // pred_region
        _
      $region28: #{bottleneck_forward.1} parent=11 // pred_fallthru
        _
      // Predicated region
      $region29: #{bottleneck_forward.1} parent=11 // pred_check
        %p306 = pneg %p148
      $region30: #{bottleneck_forward.1} parent=11 // pred_check_branch
        %308 = sbr.rel (%p306) target = $region32
      $region31: #{bottleneck_forward.1} parent=11 // pred_region
        _
      $region32: #{bottleneck_forward.1} parent=11 // pred_fallthru
        _
      // Predicated region
      $region33: #{bottleneck_forward.1} parent=11 // pred_check
        %p309 = pneg %p169
      $region34: #{bottleneck_forward.1} parent=11 // pred_check_branch
        %311 = sbr.rel (%p309) target = $region36
      $region35: #{bottleneck_forward.1} parent=11 // pred_region
        _
      $region36: #{bottleneck_forward.1} parent=11 // pred_fallthru
        _
      // Predicated region
      $region37: #{bottleneck_forward.1} parent=11 // pred_check
        %p312 = pneg %p190
      $region38: #{bottleneck_forward.1} parent=11 // pred_check_branch
        %314 = sbr.rel (%p312) target = $region40
      $region39: #{bottleneck_forward.1} parent=11 // pred_region
        _
      $region40: #{bottleneck_forward.1} parent=11 // pred_fallthru
        _
      // Predicated region
      $region41: #{bottleneck_forward.1} parent=11 // pred_check
        %p315 = pneg %p211
      $region42: #{bottleneck_forward.1} parent=11 // pred_check_branch
        %317 = sbr.rel (%p315) target = $region44
      $region43: #{bottleneck_forward.1} parent=11 // pred_region
        _
      $region44: #{bottleneck_forward.1} parent=11 // pred_fallthru
        _
      // Predicated region
      $region45: #{bottleneck_forward.1} parent=11 // pred_check
        %p318 = pneg %p232
      $region46: #{bottleneck_forward.1} parent=11 // pred_check_branch
        %320 = sbr.rel (%p318) target = $region48
      $region47: #{bottleneck_forward.1} parent=11 // pred_region
        _
      $region48: #{bottleneck_forward.1} parent=11 // pred_fallthru
        _
      // Predicated region
      $region49: #{bottleneck_forward.1} parent=11 // pred_check
        %p321 = pneg %p253
      $region50: #{bottleneck_forward.1} parent=11 // pred_check_branch
        %323 = sbr.rel (%p321) target = $region52
      $region51: #{bottleneck_forward.1} parent=11 // pred_region
        _
      $region52: #{bottleneck_forward.1} parent=11 // pred_fallthru
        _
    $region12: #{bottleneck_forward.1} parent=5 // pred_fallthru
      _
    %p324 = scmp.lt.s32.totalorder %s17, 2
    // Predicated region
    $region53: #{bottleneck_forward.1} parent=5 // pred_check
      %p325 = pneg %p324
    $region54: #{bottleneck_forward.1} parent=5 // pred_check_branch
      %327 = sbr.rel (%p325) target = $region56
    $region55: #{bottleneck_forward.1} parent=5 // pred_region
      // Predicated region
      $region57: #{bottleneck_forward.1} parent=55 // pred_check
        %p328 = pneg %p37
      $region58: #{bottleneck_forward.1} parent=55 // pred_check_branch
        %330 = sbr.rel (%p328) target = $region60
      $region59: #{bottleneck_forward.1} parent=55 // pred_region
        %p331 = scmp.lt.s32.totalorder %s17, 1
        %s332 = scalar_select %p331, %s17, 1
        %s333 = smul.addr %s332, 41
        %s334 = smul.addr %s333, 8
        %s335 = scalar_lea.vmem %s0, %s334
      $region60: #{bottleneck_forward.1} parent=55 // pred_fallthru
        _
    $region56: #{bottleneck_forward.1} parent=5 // pred_fallthru
      _
    %p336 = scmp.le.s32.totalorder 1, %s17
    %p337 = scmp.lt.s32.totalorder %s17, 3
    %p338 = pnand %p336, %p337
    %p339 = pneg %p338
    // Predicated region
    $region61: #{bottleneck_forward.1} parent=5 // pred_check
      _
    $region62: #{bottleneck_forward.1} parent=5 // pred_check_branch
      %341 = sbr.rel (%p338) target = $region64
    $region63: #{bottleneck_forward.1} parent=5 // pred_region
      %s342 = ssub.s32 %s17, 1
      %p343 = scmp.lt.s32.totalorder %s22, 1
      %s344 = scalar_select %p343, %s22, 1
      %s345 = smul.addr %s344, 41
      %s346 = smul.addr %s345, 8
      %s347 = scalar_lea.vmem %s0, %s346
      %p348 = pneg %p43
      %p349 = pneg %p40
      %p350 = pneg %p64
      %p351 = pneg %p61
      %p352 = pneg %p85
      %p353 = pneg %p82
      %p354 = pneg %p106
      %p355 = pneg %p103
      %p356 = pneg %p127
      %p357 = pneg %p124
      %p358 = pneg %p148
      %p359 = pneg %p145
      %p360 = pneg %p169
      %p361 = pneg %p166
      %p362 = pneg %p190
      %p363 = pneg %p187
      %p364 = pneg %p211
      %p365 = pneg %p208
      %p366 = pneg %p232
      %p367 = pneg %p229
      %p368 = pneg %p253
      %p369 = pneg %p250
      %p370 = pneg %p279
      %p371 = pneg %p276
      %p372 = scmp.lt.s32.totalorder %s22, 1
      %s373 = scalar_select %p372, %s22, 1
      %s374 = smul.addr %s373, 36
      %s375 = smul.addr %s374, 8
      %s376 = scalar_lea.vmem %s11, %s375
      %p377 = scmp.lt.s32.totalorder %s22, 1
      %s378 = scalar_select %p377, %s22, 1
      %s379 = smul.addr %s378, 41
      %s380 = smul.addr %s379, 8
      %s381 = scalar_lea.vmem %s0, %s380
      %p382 = scmp.lt.s32.totalorder %s22, 1
      %s383 = scalar_select %p382, %s22, 1
      %s384 = smul.addr %s383, 36
      %s385 = smul.addr %s384, 8
      %s386 = scalar_lea.vmem %s11, %s385
      %v388 = vld [vmem:[%s381] sm:$0xff]
      %v389 = vld [vmem:[%s381 + $0x8] sm:$0xff]
      %v390 = vld [vmem:[%s381 + $0x10] sm:$0xff]
      %v391 = vld [vmem:[%s381 + $0x18] sm:$0xff]
      %v392 = vld [vmem:[%s381 + $0x20] sm:$0xff]
      %v393 = vld [vmem:[%s381 + $0x28] sm:$0xff]
      %v394 = vld [vmem:[%s381 + $0x30] sm:$0xff]
      %v395 = vld [vmem:[%s381 + $0x38] sm:$0xff]
      %v396 = vld [vmem:[%s381 + $0x40] sm:$0xff]
      %v397 = vld [vmem:[%s381 + $0x48] sm:$0xff]
      %v398 = vld [vmem:[%s381 + $0x50] sm:$0xff]
      %v399 = vld [vmem:[%s381 + $0x58] sm:$0xff]
      %v400 = vld [vmem:[%s381 + $0x60] sm:$0xff]
      %v401 = vld [vmem:[%s381 + $0x68] sm:$0xff]
      %v402 = vld [vmem:[%s381 + $0x70] sm:$0xff]
      %v403 = vld [vmem:[%s381 + $0x78] sm:$0xff]
      %v404 = vld [vmem:[%s381 + $0x80] sm:$0xff]
      %v405 = vld [vmem:[%s381 + $0x88] sm:$0xff]
      %v406 = vld [vmem:[%s381 + $0x90] sm:$0xff]
      %v407 = vld [vmem:[%s381 + $0x98] sm:$0xff]
      %v408 = vld [vmem:[%s381 + $0xa0] sm:$0xff]
      %v409 = vld [vmem:[%s381 + $0xa8] sm:$0xff]
      %v410 = vld [vmem:[%s381 + $0xb0] sm:$0xff]
      %v411 = vld [vmem:[%s381 + $0xb8] sm:$0xff]
      %v412 = vld [vmem:[%s381 + $0xc0] sm:$0xff]
      %v413 = vld [vmem:[%s381 + $0xc8] sm:$0xff]
      %v414 = vld [vmem:[%s381 + $0xd0] sm:$0xff]
      %v415 = vld [vmem:[%s381 + $0xd8] sm:$0xff]
      %v416 = vld [vmem:[%s381 + $0xe0] sm:$0xff]
      %v417 = vld [vmem:[%s381 + $0xe8] sm:$0xff]
      %v418 = vld [vmem:[%s381 + $0xf0] sm:$0xff]
      %v419 = vld [vmem:[%s381 + $0xf8] sm:$0xff]
      %v420 = vld [vmem:[%s381 + $0x100] sm:$0xff]
      %v421 = vld [vmem:[%s381 + $0x108] sm:$0xff]
      %v422 = vld [vmem:[%s381 + $0x110] sm:$0xff]
      %v423 = vld [vmem:[%s381 + $0x118] sm:$0xff]
      %v424 = vld [vmem:[%s381 + $0x120] sm:$0xff]
      %v425 = vld [vmem:[%s381 + $0x128] sm:$0xff]
      %v426 = vld [vmem:[%s381 + $0x130] sm:$0xff]
      %v427 = vld [vmem:[%s381 + $0x138] sm:$0xff]
      %v428 = vld [vmem:[%s381 + $0x140] sm:$0x3f]
      %v429 = vpack.c.bf16 %v389, %v388
      %v430 = vpack.c.bf16 %v391, %v390
      %v431 = vpack.c.bf16 %v393, %v392
      %v432 = vpack.c.bf16 %v395, %v394
      %v433 = vpack.c.bf16 %v397, %v396
      %v434 = vpack.c.bf16 %v399, %v398
      %v435 = vpack.c.bf16 %v401, %v400
      %v436 = vpack.c.bf16 %v403, %v402
      %v437 = vpack.c.bf16 %v405, %v404
      %v438 = vpack.c.bf16 %v407, %v406
      %v439 = vpack.c.bf16 %v409, %v408
      %v440 = vpack.c.bf16 %v411, %v410
      %v441 = vpack.c.bf16 %v413, %v412
      %v442 = vpack.c.bf16 %v415, %v414
      %v443 = vpack.c.bf16 %v417, %v416
      %v444 = vpack.c.bf16 %v419, %v418
      %v445 = vpack.c.bf16 %v421, %v420
      %v446 = vpack.c.bf16 %v423, %v422
      %v447 = vpack.c.bf16 %v425, %v424
      %v448 = vpack.c.bf16 %v427, %v426
      %v449 = vpack.c.bf16 %v428, %v428
      %v450 = vld [vmem:[%s2] sm:$0xf]
      %v451 = vld [vmem:[%s2 + $0x4] sm:$0xf]
      %v452 = vld [vmem:[%s2 + $0x8] sm:$0xf]
      %v453 = vld [vmem:[%s2 + $0xc] sm:$0xf]
      %v454 = vld [vmem:[%s2 + $0x10] sm:$0xf]
      %v455 = vld [vmem:[%s2 + $0x14] sm:$0xf]
      %v456 = vld [vmem:[%s2 + $0x18] sm:$0xf]
      %v457 = vld [vmem:[%s2 + $0x1c] sm:$0xf]
      %v466 = vunpack.c.l.b16 %v450
      %v467 = vunpack.c.l.b16 %v451
      %v468 = vunpack.c.l.b16 %v452
      %v469 = vunpack.c.l.b16 %v453
      %v470 = vunpack.c.l.b16 %v454
      %v471 = vunpack.c.l.b16 %v455
      %v472 = vunpack.c.l.b16 %v456
      %v473 = vunpack.c.l.b16 %v457
      %v474 = vpack.c.b16 %v467, %v466
      %v475 = vpack.c.b16 %v469, %v468
      %v476 = vpack.c.b16 %v471, %v470
      %v477 = vpack.c.b16 %v473, %v472
      %vm482 = vcmask 523264
      %v484 = vsel %vm482, %v429, 0
      %v487 = vsel %vm482, %v430, 0
      %v490 = vsel %vm482, %v431, 0
      %v493 = vsel %vm482, %v432, 0
      %v496 = vsel %vm482, %v433, 0
      %v499 = vsel %vm482, %v434, 0
      %v502 = vsel %vm482, %v435, 0
      %v505 = vsel %vm482, %v436, 0
      %v508 = vsel %vm482, %v437, 0
      %v511 = vsel %vm482, %v438, 0
      %v514 = vsel %vm482, %v439, 0
      %v517 = vsel %vm482, %v440, 0
      %v520 = vsel %vm482, %v441, 0
      %v523 = vsel %vm482, %v442, 0
      %v526 = vsel %vm482, %v443, 0
      %v529 = vsel %vm482, %v444, 0
      %v532 = vsel %vm482, %v445, 0
      %v535 = vsel %vm482, %v446, 0
      %v538 = vsel %vm482, %v447, 0
      %v541 = vsel %vm482, %v448, 0
      %v544 = vsel %vm482, %v449, 0
      %546 = vmatprep.subr.bf16.mxu0 0
      %547 = vmatpush1.bf16.msra.mxu0 %v474
      %548 = vmatprep.subr.bf16.mxu0 0
      %549 = vmatpush1.bf16.msra.mxu0 %v475
      %550 = vmatprep.subr.bf16.mxu0 0
      %551 = vmatpush1.bf16.msra.mxu0 %v476
      %552 = vmatprep.subr.bf16.mxu0 0
      %553 = vmatpush1.bf16.msra.mxu0 %v477
      %554 = vmatprep.subr.bf16.mxu0 0
      %555 = vmatpush1.bf16.msra.mxu0 0
      %556 = vmatprep.subr.bf16.mxu0 0
      %557 = vmatpush1.bf16.msra.mxu0 0
      %558 = vmatprep.subr.bf16.mxu0 0
      %559 = vmatpush1.bf16.msra.mxu0 0
      %560 = vmatprep.subr.bf16.mxu0 0
      %561 = vmatpush1.bf16.msra.mxu0 0
      %562 = vmatprep.subr.bf16.mxu0 0
      %563 = vmatpush1.bf16.msra.mxu0 0
      %564 = vmatprep.subr.bf16.mxu0 0
      %565 = vmatpush1.bf16.msra.mxu0 0
      %566 = vmatprep.subr.bf16.mxu0 0
      %567 = vmatpush1.bf16.msra.mxu0 0
      %568 = vmatprep.subr.bf16.mxu0 0
      %569 = vmatpush1.bf16.msra.mxu0 0
      %570 = vmatprep.subr.bf16.mxu0 0
      %571 = vmatpush1.bf16.msra.mxu0 0
      %572 = vmatprep.subr.bf16.mxu0 0
      %573 = vmatpush1.bf16.msra.mxu0 0
      %574 = vmatprep.subr.bf16.mxu0 0
      %575 = vmatpush1.bf16.msra.mxu0 0
      %576 = vmatprep.subr.bf16.mxu0 0
      %577 = vmatpush1.bf16.msra.mxu0 0
      %578 = vmatprep.mubr.bf16.mxu0 0
      %579 = vmatmul.mubr.bf16.gmra.mrb[0].mxu0 %v484
      %v580 = vpop.f32.mrb[0].mxu0
      %v581 = vadd.f32 0.0, %v580
      %v582 = vpop.f32.mrb[0].mxu0
      %v583 = vpop.f32.mrb[0].mxu0
      %v584 = vadd.f32 0.0, %v583
      %v585 = vpop.f32.mrb[0].mxu0
      %586 = vmatprep.mubr.bf16.mxu0 0
      %587 = vmatmul.mubr.bf16.gmra.mrb[0].mxu0 %v487
      %v588 = vpop.f32.mrb[0].mxu0
      %v589 = vadd.f32 0.0, %v588
      %v590 = vpop.f32.mrb[0].mxu0
      %v591 = vpop.f32.mrb[0].mxu0
      %v592 = vadd.f32 0.0, %v591
      %v593 = vpop.f32.mrb[0].mxu0
      %594 = vmatprep.mubr.bf16.mxu0 0
      %595 = vmatmul.mubr.bf16.gmra.mrb[0].mxu0 %v490
      %v596 = vpop.f32.mrb[0].mxu0
      %v597 = vadd.f32 0.0, %v596
      %v598 = vpop.f32.mrb[0].mxu0
      %v599 = vpop.f32.mrb[0].mxu0
      %v600 = vadd.f32 0.0, %v599
      %v601 = vpop.f32.mrb[0].mxu0
      %602 = vmatprep.mubr.bf16.mxu0 0
      %603 = vmatmul.mubr.bf16.gmra.mrb[0].mxu0 %v493
      %v604 = vpop.f32.mrb[0].mxu0
      %v605 = vadd.f32 0.0, %v604
      %v606 = vpop.f32.mrb[0].mxu0
      %v607 = vpop.f32.mrb[0].mxu0
      %v608 = vadd.f32 0.0, %v607
      %v609 = vpop.f32.mrb[0].mxu0
      %610 = vmatprep.mubr.bf16.mxu0 0
      %611 = vmatmul.mubr.bf16.gmra.mrb[0].mxu0 %v496
      %v612 = vpop.f32.mrb[0].mxu0
      %v613 = vadd.f32 0.0, %v612
      %v614 = vpop.f32.mrb[0].mxu0
      %v615 = vpop.f32.mrb[0].mxu0
      %v616 = vadd.f32 0.0, %v615
      %v617 = vpop.f32.mrb[0].mxu0
      %618 = vmatprep.mubr.bf16.mxu0 0
      %619 = vmatmul.mubr.bf16.gmra.mrb[0].mxu0 %v499
      %v620 = vpop.f32.mrb[0].mxu0
      %v621 = vadd.f32 0.0, %v620
      %v622 = vpop.f32.mrb[0].mxu0
      %v623 = vpop.f32.mrb[0].mxu0
      %v624 = vadd.f32 0.0, %v623
      %v625 = vpop.f32.mrb[0].mxu0
      %626 = vmatprep.mubr.bf16.mxu0 0
      %627 = vmatmul.mubr.bf16.gmra.mrb[0].mxu0 %v502
      %v628 = vpop.f32.mrb[0].mxu0
      %v629 = vadd.f32 0.0, %v628
      %v630 = vpop.f32.mrb[0].mxu0
      %v631 = vpop.f32.mrb[0].mxu0
      %v632 = vadd.f32 0.0, %v631
      %v633 = vpop.f32.mrb[0].mxu0
      %634 = vmatprep.mubr.bf16.mxu0 0
      %635 = vmatmul.mubr.bf16.gmra.mrb[0].mxu0 %v505
      %v636 = vpop.f32.mrb[0].mxu0
      %v637 = vadd.f32 0.0, %v636
      %v638 = vpop.f32.mrb[0].mxu0
      %v639 = vpop.f32.mrb[0].mxu0
      %v640 = vadd.f32 0.0, %v639
      %v641 = vpop.f32.mrb[0].mxu0
      %642 = vmatprep.mubr.bf16.mxu0 0
      %643 = vmatmul.mubr.bf16.gmra.mrb[0].mxu0 %v508
      %v644 = vpop.f32.mrb[0].mxu0
      %v645 = vadd.f32 0.0, %v644
      %v646 = vpop.f32.mrb[0].mxu0
      %v647 = vpop.f32.mrb[0].mxu0
      %v648 = vadd.f32 0.0, %v647
      %v649 = vpop.f32.mrb[0].mxu0
      %650 = vmatprep.mubr.bf16.mxu0 0
      %651 = vmatmul.mubr.bf16.gmra.mrb[0].mxu0 %v511
      %v652 = vpop.f32.mrb[0].mxu0
      %v653 = vadd.f32 0.0, %v652
      %v654 = vpop.f32.mrb[0].mxu0
      %v655 = vpop.f32.mrb[0].mxu0
      %v656 = vadd.f32 0.0, %v655
      %v657 = vpop.f32.mrb[0].mxu0
      %658 = vmatprep.mubr.bf16.mxu0 0
      %659 = vmatmul.mubr.bf16.gmra.mrb[0].mxu0 %v514
      %v660 = vpop.f32.mrb[0].mxu0
      %v661 = vadd.f32 0.0, %v660
      %v662 = vpop.f32.mrb[0].mxu0
      %v663 = vpop.f32.mrb[0].mxu0
      %v664 = vadd.f32 0.0, %v663
      %v665 = vpop.f32.mrb[0].mxu0
      %666 = vmatprep.mubr.bf16.mxu0 0
      %667 = vmatmul.mubr.bf16.gmra.mrb[0].mxu0 %v517
      %v668 = vpop.f32.mrb[0].mxu0
      %v669 = vadd.f32 0.0, %v668
      %v670 = vpop.f32.mrb[0].mxu0
      %v671 = vpop.f32.mrb[0].mxu0
      %v672 = vadd.f32 0.0, %v671
      %v673 = vpop.f32.mrb[0].mxu0
      %674 = vmatprep.mubr.bf16.mxu0 0
      %675 = vmatmul.mubr.bf16.gmra.mrb[0].mxu0 %v520
      %v676 = vpop.f32.mrb[0].mxu0
      %v677 = vadd.f32 0.0, %v676
      %v678 = vpop.f32.mrb[0].mxu0
      %v679 = vpop.f32.mrb[0].mxu0
      %v680 = vadd.f32 0.0, %v679
      %v681 = vpop.f32.mrb[0].mxu0
      %682 = vmatprep.mubr.bf16.mxu0 0
      %683 = vmatmul.mubr.bf16.gmra.mrb[0].mxu0 %v523
      %v684 = vpop.f32.mrb[0].mxu0
      %v685 = vadd.f32 0.0, %v684
      %v686 = vpop.f32.mrb[0].mxu0
      %v687 = vpop.f32.mrb[0].mxu0
      %v688 = vadd.f32 0.0, %v687
      %v689 = vpop.f32.mrb[0].mxu0
      %690 = vmatprep.mubr.bf16.mxu0 0
      %691 = vmatmul.mubr.bf16.gmra.mrb[0].mxu0 %v526
      %v692 = vpop.f32.mrb[0].mxu0
      %v693 = vadd.f32 0.0, %v692
      %v694 = vpop.f32.mrb[0].mxu0
      %v695 = vpop.f32.mrb[0].mxu0
      %v696 = vadd.f32 0.0, %v695
      %v697 = vpop.f32.mrb[0].mxu0
      %698 = vmatprep.mubr.bf16.mxu0 0
      %699 = vmatmul.mubr.bf16.gmra.mrb[0].mxu0 %v529
      %v700 = vpop.f32.mrb[0].mxu0
      %v701 = vadd.f32 0.0, %v700
      %v702 = vpop.f32.mrb[0].mxu0
      %v703 = vpop.f32.mrb[0].mxu0
      %v704 = vadd.f32 0.0, %v703
      %v705 = vpop.f32.mrb[0].mxu0
      %706 = vmatprep.mubr.bf16.mxu0 0
      %707 = vmatmul.mubr.bf16.gmra.mrb[0].mxu0 %v532
      %v708 = vpop.f32.mrb[0].mxu0
      %v709 = vadd.f32 0.0, %v708
      %v710 = vpop.f32.mrb[0].mxu0
      %v711 = vpop.f32.mrb[0].mxu0
      %v712 = vadd.f32 0.0, %v711
      %v713 = vpop.f32.mrb[0].mxu0
      %714 = vmatprep.mubr.bf16.mxu0 0
      %715 = vmatmul.mubr.bf16.gmra.mrb[0].mxu0 %v535
      %v716 = vpop.f32.mrb[0].mxu0
      %v717 = vadd.f32 0.0, %v716
      %v718 = vpop.f32.mrb[0].mxu0
      %v719 = vpop.f32.mrb[0].mxu0
      %v720 = vadd.f32 0.0, %v719
      %v721 = vpop.f32.mrb[0].mxu0
      %722 = vmatprep.mubr.bf16.mxu0 0
      %723 = vmatmul.mubr.bf16.gmra.mrb[0].mxu0 %v538
      %v724 = vpop.f32.mrb[0].mxu0
      %v725 = vadd.f32 0.0, %v724
      %v726 = vpop.f32.mrb[0].mxu0
      %v727 = vpop.f32.mrb[0].mxu0
      %v728 = vadd.f32 0.0, %v727
      %v729 = vpop.f32.mrb[0].mxu0
      %730 = vmatprep.mubr.bf16.mxu0 0
      %731 = vmatmul.mubr.bf16.gmra.mrb[0].mxu0 %v541
      %v732 = vpop.f32.mrb[0].mxu0
      %v733 = vadd.f32 0.0, %v732
      %v734 = vpop.f32.mrb[0].mxu0
      %v735 = vpop.f32.mrb[0].mxu0
      %v736 = vadd.f32 0.0, %v735
      %v737 = vpop.f32.mrb[0].mxu0
      %738 = vmatprep.mubr.bf16.mxu0 0
      %739 = vmatmul.mubr.bf16.gmra.mrb[0].mxu0 %v544
      %v740 = vpop.f32.mrb[0].mxu0
      %v741 = vadd.f32 0.0, %v740
      %v742 = vpop.f32.mrb[0].mxu0
      %v743 = vpop.f32.mrb[0].mxu0
      %v744 = vpop.f32.mrb[0].mxu0
      %745 = vdwg.mxu0
      %v746 = vld [vmem:[%s3] sm:$0x1]
      %v748 = vlaneseq
      %v749 = vshrl.u32 %v748, 7
      %v750 = vsub.s32 0, %v749
      %v751 = vrot.slane %v746, %v750
      %v753 = vmul.f32 %v581, %v751
      %v754 = vmul.f32 %v584, %v751
      %v755 = vmul.f32 %v589, %v751
      %v756 = vmul.f32 %v592, %v751
      %v757 = vmul.f32 %v597, %v751
      %v758 = vmul.f32 %v600, %v751
      %v759 = vmul.f32 %v605, %v751
      %v760 = vmul.f32 %v608, %v751
      %v761 = vmul.f32 %v613, %v751
      %v762 = vmul.f32 %v616, %v751
      %v763 = vmul.f32 %v621, %v751
      %v764 = vmul.f32 %v624, %v751
      %v765 = vmul.f32 %v629, %v751
      %v766 = vmul.f32 %v632, %v751
      %v767 = vmul.f32 %v637, %v751
      %v768 = vmul.f32 %v640, %v751
      %v769 = vmul.f32 %v645, %v751
      %v770 = vmul.f32 %v648, %v751
      %v771 = vmul.f32 %v653, %v751
      %v772 = vmul.f32 %v656, %v751
      %v773 = vmul.f32 %v661, %v751
      %v774 = vmul.f32 %v664, %v751
      %v775 = vmul.f32 %v669, %v751
      %v776 = vmul.f32 %v672, %v751
      %v777 = vmul.f32 %v677, %v751
      %v778 = vmul.f32 %v680, %v751
      %v779 = vmul.f32 %v685, %v751
      %v780 = vmul.f32 %v688, %v751
      %v781 = vmul.f32 %v693, %v751
      %v782 = vmul.f32 %v696, %v751
      %v783 = vmul.f32 %v701, %v751
      %v784 = vmul.f32 %v704, %v751
      %v785 = vmul.f32 %v709, %v751
      %v786 = vmul.f32 %v712, %v751
      %v787 = vmul.f32 %v717, %v751
      %v788 = vmul.f32 %v720, %v751
      %v789 = vmul.f32 %v725, %v751
      %v790 = vmul.f32 %v728, %v751
      %v791 = vmul.f32 %v733, %v751
      %v792 = vmul.f32 %v736, %v751
      %v793 = vmul.f32 %v741, %v751
      %v794 = vld [vmem:[%s4] sm:$0x1]
      %v796 = vlaneseq
      %v797 = vshrl.u32 %v796, 7
      %v798 = vsub.s32 0, %v797
      %v799 = vrot.slane %v794, %v798
      %v801 = vadd.f32 %v753, %v799
      %v802 = vadd.f32 %v754, %v799
      %v803 = vadd.f32 %v755, %v799
      %v804 = vadd.f32 %v756, %v799
      %v805 = vadd.f32 %v757, %v799
      %v806 = vadd.f32 %v758, %v799
      %v807 = vadd.f32 %v759, %v799
      %v808 = vadd.f32 %v760, %v799
      %v809 = vadd.f32 %v761, %v799
      %v810 = vadd.f32 %v762, %v799
      %v811 = vadd.f32 %v763, %v799
      %v812 = vadd.f32 %v764, %v799
      %v813 = vadd.f32 %v765, %v799
      %v814 = vadd.f32 %v766, %v799
      %v815 = vadd.f32 %v767, %v799
      %v816 = vadd.f32 %v768, %v799
      %v817 = vadd.f32 %v769, %v799
      %v818 = vadd.f32 %v770, %v799
      %v819 = vadd.f32 %v771, %v799
      %v820 = vadd.f32 %v772, %v799
      %v821 = vadd.f32 %v773, %v799
      %v822 = vadd.f32 %v774, %v799
      %v823 = vadd.f32 %v775, %v799
      %v824 = vadd.f32 %v776, %v799
      %v825 = vadd.f32 %v777, %v799
      %v826 = vadd.f32 %v778, %v799
      %v827 = vadd.f32 %v779, %v799
      %v828 = vadd.f32 %v780, %v799
      %v829 = vadd.f32 %v781, %v799
      %v830 = vadd.f32 %v782, %v799
      %v831 = vadd.f32 %v783, %v799
      %v832 = vadd.f32 %v784, %v799
      %v833 = vadd.f32 %v785, %v799
      %v834 = vadd.f32 %v786, %v799
      %v835 = vadd.f32 %v787, %v799
      %v836 = vadd.f32 %v788, %v799
      %v837 = vadd.f32 %v789, %v799
      %v838 = vadd.f32 %v790, %v799
      %v839 = vadd.f32 %v791, %v799
      %v840 = vadd.f32 %v792, %v799
      %v841 = vadd.f32 %v793, %v799
      %v842 = vmax.f32 %v801, 0.0
      %v843 = vmax.f32 %v802, 0.0
      %v844 = vmax.f32 %v803, 0.0
      %v845 = vmax.f32 %v804, 0.0
      %v846 = vmax.f32 %v805, 0.0
      %v847 = vmax.f32 %v806, 0.0
      %v848 = vmax.f32 %v807, 0.0
      %v849 = vmax.f32 %v808, 0.0
      %v850 = vmax.f32 %v809, 0.0
      %v851 = vmax.f32 %v810, 0.0
      %v852 = vmax.f32 %v811, 0.0
      %v853 = vmax.f32 %v812, 0.0
      %v854 = vmax.f32 %v813, 0.0
      %v855 = vmax.f32 %v814, 0.0
      %v856 = vmax.f32 %v815, 0.0
      %v857 = vmax.f32 %v816, 0.0
      %v858 = vmax.f32 %v817, 0.0
      %v859 = vmax.f32 %v818, 0.0
      %v860 = vmax.f32 %v819, 0.0
      %v861 = vmax.f32 %v820, 0.0
      %v862 = vmax.f32 %v821, 0.0
      %v863 = vmax.f32 %v822, 0.0
      %v864 = vmax.f32 %v823, 0.0
      %v865 = vmax.f32 %v824, 0.0
      %v866 = vmax.f32 %v825, 0.0
      %v867 = vmax.f32 %v826, 0.0
      %v868 = vmax.f32 %v827, 0.0
      %v869 = vmax.f32 %v828, 0.0
      %v870 = vmax.f32 %v829, 0.0
      %v871 = vmax.f32 %v830, 0.0
      %v872 = vmax.f32 %v831, 0.0
      %v873 = vmax.f32 %v832, 0.0
      %v874 = vmax.f32 %v833, 0.0
      %v875 = vmax.f32 %v834, 0.0
      %v876 = vmax.f32 %v835, 0.0
      %v877 = vmax.f32 %v836, 0.0
      %v878 = vmax.f32 %v837, 0.0
      %v879 = vmax.f32 %v838, 0.0
      %v880 = vmax.f32 %v839, 0.0
      %v881 = vmax.f32 %v840, 0.0
      %v882 = vmax.f32 %v841, 0.0
      %v883 = vld [vmem:[%s1] sm:$0xff]
      %v884 = vld [vmem:[%s1 + $0x8] sm:$0xff]
      %v885 = vld [vmem:[%s1 + $0x10] sm:$0xff]
      %v886 = vld [vmem:[%s1 + $0x18] sm:$0xff]
      %v887 = vld [vmem:[%s1 + $0x20] sm:$0xff]
      %v888 = vld [vmem:[%s1 + $0x28] sm:$0xff]
      %v889 = vld [vmem:[%s1 + $0x30] sm:$0xff]
      %v890 = vld [vmem:[%s1 + $0x38] sm:$0xff]
      %v891 = vld [vmem:[%s1 + $0x40] sm:$0xff]
      %v892 = vld [vmem:[%s1 + $0x48] sm:$0xff]
      %v893 = vld [vmem:[%s1 + $0x50] sm:$0xff]
      %v894 = vld [vmem:[%s1 + $0x58] sm:$0xff]
      %v895 = vld [vmem:[%s1 + $0x60] sm:$0xff]
      %v896 = vld [vmem:[%s1 + $0x68] sm:$0xff]
      %v897 = vld [vmem:[%s1 + $0x70] sm:$0xff]
      %v898 = vld [vmem:[%s1 + $0x78] sm:$0xff]
      %v899 = vld [vmem:[%s1 + $0x80] sm:$0xff]
      %v900 = vld [vmem:[%s1 + $0x88] sm:$0xff]
      %v901 = vld [vmem:[%s1 + $0x90] sm:$0xff]
      %v902 = vld [vmem:[%s1 + $0x98] sm:$0xff]
      %v903 = vld [vmem:[%s1 + $0xa0] sm:$0xff]
      %v904 = vld [vmem:[%s1 + $0xa8] sm:$0xff]
      %v905 = vld [vmem:[%s1 + $0xb0] sm:$0xff]
      %v906 = vld [vmem:[%s1 + $0xb8] sm:$0xff]
      %v907 = vld [vmem:[%s1 + $0xc0] sm:$0xff]
      %v908 = vld [vmem:[%s1 + $0xc8] sm:$0xff]
      %v909 = vld [vmem:[%s1 + $0xd0] sm:$0xff]
      %v910 = vld [vmem:[%s1 + $0xd8] sm:$0xff]
      %v911 = vld [vmem:[%s1 + $0xe0] sm:$0xff]
      %v912 = vld [vmem:[%s1 + $0xe8] sm:$0xff]
      %v913 = vld [vmem:[%s1 + $0xf0] sm:$0xff]
      %v914 = vld [vmem:[%s1 + $0xf8] sm:$0xff]
      %v915 = vld [vmem:[%s1 + $0x100] sm:$0xff]
      %v916 = vld [vmem:[%s1 + $0x108] sm:$0xff]
      %v917 = vld [vmem:[%s1 + $0x110] sm:$0xff]
      %v918 = vld [vmem:[%s1 + $0x118] sm:$0xff]
      %v919 = vld [vmem:[%s1 + $0x120] sm:$0xff]
      %v920 = vld [vmem:[%s1 + $0x128] sm:$0xff]
      %v921 = vld [vmem:[%s1 + $0x130] sm:$0xff]
      %v922 = vld [vmem:[%s1 + $0x138] sm:$0xff]
      %v923 = vld [vmem:[%s1 + $0x140] sm:$0x3f]
      %925 = vset.pattern.permute.xlu0 0
      %926 = vperm.xlu0 %925, %v883
      %v927 = vpop.permute.xlu0 %926
      %930 = vset.pattern.permute.xlu0 0
      %931 = vperm.xlu0 %930, %v884
      %v932 = vpop.permute.xlu0 %931
      %935 = vset.pattern.permute.xlu0 0
      %936 = vperm.xlu0 %935, %v885
      %v937 = vpop.permute.xlu0 %936
      %940 = vset.pattern.permute.xlu0 0
      %941 = vperm.xlu0 %940, %v886
      %v942 = vpop.permute.xlu0 %941
      %945 = vset.pattern.permute.xlu0 0
      %946 = vperm.xlu0 %945, %v887
      %v947 = vpop.permute.xlu0 %946
      %950 = vset.pattern.permute.xlu0 0
      %951 = vperm.xlu0 %950, %v888
      %v952 = vpop.permute.xlu0 %951
      %955 = vset.pattern.permute.xlu0 0
      %956 = vperm.xlu0 %955, %v889
      %v957 = vpop.permute.xlu0 %956
      %960 = vset.pattern.permute.xlu0 0
      %961 = vperm.xlu0 %960, %v890
      %v962 = vpop.permute.xlu0 %961
      %965 = vset.pattern.permute.xlu0 0
      %966 = vperm.xlu0 %965, %v891
      %v967 = vpop.permute.xlu0 %966
      %970 = vset.pattern.permute.xlu0 0
      %971 = vperm.xlu0 %970, %v892
      %v972 = vpop.permute.xlu0 %971
      %975 = vset.pattern.permute.xlu0 0
      %976 = vperm.xlu0 %975, %v893
      %v977 = vpop.permute.xlu0 %976
      %980 = vset.pattern.permute.xlu0 0
      %981 = vperm.xlu0 %980, %v894
      %v982 = vpop.permute.xlu0 %981
      %985 = vset.pattern.permute.xlu0 0
      %986 = vperm.xlu0 %985, %v895
      %v987 = vpop.permute.xlu0 %986
      %990 = vset.pattern.permute.xlu0 0
      %991 = vperm.xlu0 %990, %v896
      %v992 = vpop.permute.xlu0 %991
      %995 = vset.pattern.permute.xlu0 0
      %996 = vperm.xlu0 %995, %v897
      %v997 = vpop.permute.xlu0 %996
      %1000 = vset.pattern.permute.xlu0 0
      %1001 = vperm.xlu0 %1000, %v898
      %v1002 = vpop.permute.xlu0 %1001
      %1005 = vset.pattern.permute.xlu0 0
      %1006 = vperm.xlu0 %1005, %v899
      %v1007 = vpop.permute.xlu0 %1006
      %1010 = vset.pattern.permute.xlu0 0
      %1011 = vperm.xlu0 %1010, %v900
      %v1012 = vpop.permute.xlu0 %1011
      %1015 = vset.pattern.permute.xlu0 0
      %1016 = vperm.xlu0 %1015, %v901
      %v1017 = vpop.permute.xlu0 %1016
      %1020 = vset.pattern.permute.xlu0 0
      %1021 = vperm.xlu0 %1020, %v902
      %v1022 = vpop.permute.xlu0 %1021
      %1025 = vset.pattern.permute.xlu0 0
      %1026 = vperm.xlu0 %1025, %v903
      %v1027 = vpop.permute.xlu0 %1026
      %1030 = vset.pattern.permute.xlu0 0
      %1031 = vperm.xlu0 %1030, %v904
      %v1032 = vpop.permute.xlu0 %1031
      %1035 = vset.pattern.permute.xlu0 0
      %1036 = vperm.xlu0 %1035, %v905
      %v1037 = vpop.permute.xlu0 %1036
      %1040 = vset.pattern.permute.xlu0 0
      %1041 = vperm.xlu0 %1040, %v906
      %v1042 = vpop.permute.xlu0 %1041
      %1045 = vset.pattern.permute.xlu0 0
      %1046 = vperm.xlu0 %1045, %v907
      %v1047 = vpop.permute.xlu0 %1046
      %1050 = vset.pattern.permute.xlu0 0
      %1051 = vperm.xlu0 %1050, %v908
      %v1052 = vpop.permute.xlu0 %1051
      %1055 = vset.pattern.permute.xlu0 0
      %1056 = vperm.xlu0 %1055, %v909
      %v1057 = vpop.permute.xlu0 %1056
      %1060 = vset.pattern.permute.xlu0 0
      %1061 = vperm.xlu0 %1060, %v910
      %v1062 = vpop.permute.xlu0 %1061
      %1065 = vset.pattern.permute.xlu0 0
      %1066 = vperm.xlu0 %1065, %v911
      %v1067 = vpop.permute.xlu0 %1066
      %1070 = vset.pattern.permute.xlu0 0
      %1071 = vperm.xlu0 %1070, %v912
      %v1072 = vpop.permute.xlu0 %1071
      %1075 = vset.pattern.permute.xlu0 0
      %1076 = vperm.xlu0 %1075, %v913
      %v1077 = vpop.permute.xlu0 %1076
      %1080 = vset.pattern.permute.xlu0 0
      %1081 = vperm.xlu0 %1080, %v914
      %v1082 = vpop.permute.xlu0 %1081
      %1085 = vset.pattern.permute.xlu0 0
      %1086 = vperm.xlu0 %1085, %v915
      %v1087 = vpop.permute.xlu0 %1086
      %1090 = vset.pattern.permute.xlu0 0
      %1091 = vperm.xlu0 %1090, %v916
      %v1092 = vpop.permute.xlu0 %1091
      %1095 = vset.pattern.permute.xlu0 0
      %1096 = vperm.xlu0 %1095, %v917
      %v1097 = vpop.permute.xlu0 %1096
      %1100 = vset.pattern.permute.xlu0 0
      %1101 = vperm.xlu0 %1100, %v918
      %v1102 = vpop.permute.xlu0 %1101
      %1105 = vset.pattern.permute.xlu0 0
      %1106 = vperm.xlu0 %1105, %v919
      %v1107 = vpop.permute.xlu0 %1106
      %1110 = vset.pattern.permute.xlu0 0
      %1111 = vperm.xlu0 %1110, %v920
      %v1112 = vpop.permute.xlu0 %1111
      %1115 = vset.pattern.permute.xlu0 0
      %1116 = vperm.xlu0 %1115, %v921
      %v1117 = vpop.permute.xlu0 %1116
      %1120 = vset.pattern.permute.xlu0 0
      %1121 = vperm.xlu0 %1120, %v922
      %v1122 = vpop.permute.xlu0 %1121
      %1125 = vset.pattern.permute.xlu0 0
      %1126 = vperm.xlu0 %1125, %v923
      %v1127 = vpop.permute.xlu0 %1126
      %v1129 = vmul.f32 %v842, %v927
      %v1130 = vmul.f32 %v843, %v932
      %v1131 = vmul.f32 %v844, %v937
      %v1132 = vmul.f32 %v845, %v942
      %v1133 = vmul.f32 %v846, %v947
      %v1134 = vmul.f32 %v847, %v952
      %v1135 = vmul.f32 %v848, %v957
      %v1136 = vmul.f32 %v849, %v962
      %v1137 = vmul.f32 %v850, %v967
      %v1138 = vmul.f32 %v851, %v972
      %v1139 = vmul.f32 %v852, %v977
      %v1140 = vmul.f32 %v853, %v982
      %v1141 = vmul.f32 %v854, %v987
      %v1142 = vmul.f32 %v855, %v992
      %v1143 = vmul.f32 %v856, %v997
      %v1144 = vmul.f32 %v857, %v1002
      %v1145 = vmul.f32 %v858, %v1007
      %v1146 = vmul.f32 %v859, %v1012
      %v1147 = vmul.f32 %v860, %v1017
      %v1148 = vmul.f32 %v861, %v1022
      %v1149 = vmul.f32 %v862, %v1027
      %v1150 = vmul.f32 %v863, %v1032
      %v1151 = vmul.f32 %v864, %v1037
      %v1152 = vmul.f32 %v865, %v1042
      %v1153 = vmul.f32 %v866, %v1047
      %v1154 = vmul.f32 %v867, %v1052
      %v1155 = vmul.f32 %v868, %v1057
      %v1156 = vmul.f32 %v869, %v1062
      %v1157 = vmul.f32 %v870, %v1067
      %v1158 = vmul.f32 %v871, %v1072
      %v1159 = vmul.f32 %v872, %v1077
      %v1160 = vmul.f32 %v873, %v1082
      %v1161 = vmul.f32 %v874, %v1087
      %v1162 = vmul.f32 %v875, %v1092
      %v1163 = vmul.f32 %v876, %v1097
      %v1164 = vmul.f32 %v877, %v1102
      %v1165 = vmul.f32 %v878, %v1107
      %v1166 = vmul.f32 %v879, %v1112
      %v1167 = vmul.f32 %v880, %v1117
      %v1168 = vmul.f32 %v881, %v1122
      %v1169 = vmul.f32 %v882, %v1127
      %v1170 = vpack.c.bf16 %v1130, %v1129
      %v1171 = vpack.c.bf16 %v1132, %v1131
      %v1172 = vpack.c.bf16 %v1134, %v1133
      %v1173 = vpack.c.bf16 %v1136, %v1135
      %v1174 = vpack.c.bf16 %v1138, %v1137
      %v1175 = vpack.c.bf16 %v1140, %v1139
      %v1176 = vpack.c.bf16 %v1142, %v1141
      %v1177 = vpack.c.bf16 %v1144, %v1143
      %v1178 = vpack.c.bf16 %v1146, %v1145
      %v1179 = vpack.c.bf16 %v1148, %v1147
      %v1180 = vpack.c.bf16 %v1150, %v1149
      %v1181 = vpack.c.bf16 %v1152, %v1151
      %v1182 = vpack.c.bf16 %v1154, %v1153
      %v1183 = vpack.c.bf16 %v1156, %v1155
      %v1184 = vpack.c.bf16 %v1158, %v1157
      %v1185 = vpack.c.bf16 %v1160, %v1159
      %v1186 = vpack.c.bf16 %v1162, %v1161
      %v1187 = vpack.c.bf16 %v1164, %v1163
      %v1188 = vpack.c.bf16 %v1166, %v1165
      %v1189 = vpack.c.bf16 %v1168, %v1167
      %v1190 = vpack.c.bf16 %v1169, %v1169
      %v1191 = vld [vmem:[%s5] sm:$0xf]
      %v1192 = vld [vmem:[%s5 + $0x4] sm:$0xf]
      %v1193 = vld [vmem:[%s5 + $0x8] sm:$0xf]
      %v1194 = vld [vmem:[%s5 + $0xc] sm:$0xf]
      %v1195 = vld [vmem:[%s5 + $0x10] sm:$0xf]
      %v1196 = vld [vmem:[%s5 + $0x14] sm:$0xf]
      %v1197 = vld [vmem:[%s5 + $0x18] sm:$0xf]
      %v1198 = vld [vmem:[%s5 + $0x1c] sm:$0xf]
      %v1199 = vld [vmem:[%s5 + $0x20] sm:$0xf]
      %v1200 = vld [vmem:[%s5 + $0x24] sm:$0xf]
      %v1201 = vld [vmem:[%s5 + $0x28] sm:$0xf]
      %v1202 = vld [vmem:[%s5 + $0x2c] sm:$0xf]
      %v1203 = vld [vmem:[%s5 + $0x30] sm:$0xf]
      %v1204 = vld [vmem:[%s5 + $0x34] sm:$0xf]
      %v1205 = vld [vmem:[%s5 + $0x38] sm:$0xf]
      %v1206 = vld [vmem:[%s5 + $0x3c] sm:$0xf]
      %v1207 = vld [vmem:[%s5 + $0x40] sm:$0xf]
      %v1208 = vld [vmem:[%s5 + $0x44] sm:$0xf]
      %v1209 = vld [vmem:[%s5 + $0x48] sm:$0xf]
      %v1210 = vld [vmem:[%s5 + $0x4c] sm:$0xf]
      %v1211 = vld [vmem:[%s5 + $0x50] sm:$0xf]
      %v1212 = vld [vmem:[%s5 + $0x54] sm:$0xf]
      %v1213 = vld [vmem:[%s5 + $0x58] sm:$0xf]
      %v1214 = vld [vmem:[%s5 + $0x5c] sm:$0xf]
      %v1215 = vld [vmem:[%s5 + $0x60] sm:$0xf]
      %v1216 = vld [vmem:[%s5 + $0x64] sm:$0xf]
      %v1217 = vld [vmem:[%s5 + $0x68] sm:$0xf]
      %v1218 = vld [vmem:[%s5 + $0x6c] sm:$0xf]
      %v1219 = vld [vmem:[%s5 + $0x70] sm:$0xf]
      %v1220 = vld [vmem:[%s5 + $0x74] sm:$0xf]
      %v1221 = vld [vmem:[%s5 + $0x78] sm:$0xf]
      %v1222 = vld [vmem:[%s5 + $0x7c] sm:$0xf]
      %v1223 = vld [vmem:[%s5 + $0x80] sm:$0xf]
      %v1224 = vld [vmem:[%s5 + $0x84] sm:$0xf]
      %v1225 = vld [vmem:[%s5 + $0x88] sm:$0xf]
      %v1226 = vld [vmem:[%s5 + $0x8c] sm:$0xf]
      %vm1227 = vsmask.f32 7424
      %v1229 = vshrl.u32 %v1170, 16
      %v1231 = vshll.u32 %v1170, 16
      %v1233 = vrot.slane %v1231, 1
      %v1234 = vor.u32 %v1229, %v1233
      %v1236 = vshll.u32 %v1171, 16
      %v1238 = vrot.slane %v1236, 1
      %v1239 = vsel %vm1227, %v1234, %v1238
      %v1240 = vshrl.u32 %v1171, 16
      %v1242 = vor.u32 %v1240, %v1238
      %v1244 = vshll.u32 %v1172, 16
      %v1246 = vrot.slane %v1244, 1
      %v1247 = vsel %vm1227, %v1242, %v1246
      %v1248 = vshrl.u32 %v1172, 16
      %v1250 = vor.u32 %v1248, %v1246
      %v1252 = vshll.u32 %v1173, 16
      %v1254 = vrot.slane %v1252, 1
      %v1255 = vsel %vm1227, %v1250, %v1254
      %v1256 = vshrl.u32 %v1173, 16
      %v1258 = vor.u32 %v1256, %v1254
      %v1260 = vshll.u32 %v1174, 16
      %v1262 = vrot.slane %v1260, 1
      %v1263 = vsel %vm1227, %v1258, %v1262
      %v1264 = vshrl.u32 %v1174, 16
      %v1266 = vor.u32 %v1264, %v1262
      %v1268 = vshll.u32 %v1175, 16
      %v1270 = vrot.slane %v1268, 1
      %v1271 = vsel %vm1227, %v1266, %v1270
      %v1272 = vshrl.u32 %v1175, 16
      %v1274 = vor.u32 %v1272, %v1270
      %v1276 = vshll.u32 %v1176, 16
      %v1278 = vrot.slane %v1276, 1
      %v1279 = vsel %vm1227, %v1274, %v1278
      %v1280 = vshrl.u32 %v1176, 16
      %v1282 = vor.u32 %v1280, %v1278
      %v1284 = vshll.u32 %v1177, 16
      %v1286 = vrot.slane %v1284, 1
      %v1287 = vsel %vm1227, %v1282, %v1286
      %v1288 = vshrl.u32 %v1177, 16
      %v1290 = vor.u32 %v1288, %v1286
      %v1292 = vshll.u32 %v1178, 16
      %v1294 = vrot.slane %v1292, 1
      %v1295 = vsel %vm1227, %v1290, %v1294
      %v1296 = vshrl.u32 %v1178, 16
      %v1298 = vor.u32 %v1296, %v1294
      %v1300 = vshll.u32 %v1179, 16
      %v1302 = vrot.slane %v1300, 1
      %v1303 = vsel %vm1227, %v1298, %v1302
      %v1304 = vshrl.u32 %v1179, 16
      %v1306 = vor.u32 %v1304, %v1302
      %v1308 = vshll.u32 %v1180, 16
      %v1310 = vrot.slane %v1308, 1
      %v1311 = vsel %vm1227, %v1306, %v1310
      %v1312 = vshrl.u32 %v1180, 16
      %v1314 = vor.u32 %v1312, %v1310
      %v1316 = vshll.u32 %v1181, 16
      %v1318 = vrot.slane %v1316, 1
      %v1319 = vsel %vm1227, %v1314, %v1318
      %v1320 = vshrl.u32 %v1181, 16
      %v1322 = vor.u32 %v1320, %v1318
      %v1324 = vshll.u32 %v1182, 16
      %v1326 = vrot.slane %v1324, 1
      %v1327 = vsel %vm1227, %v1322, %v1326
      %v1328 = vshrl.u32 %v1182, 16
      %v1330 = vor.u32 %v1328, %v1326
      %v1332 = vshll.u32 %v1183, 16
      %v1334 = vrot.slane %v1332, 1
      %v1335 = vsel %vm1227, %v1330, %v1334
      %v1336 = vshrl.u32 %v1183, 16
      %v1338 = vor.u32 %v1336, %v1334
      %v1340 = vshll.u32 %v1184, 16
      %v1342 = vrot.slane %v1340, 1
      %v1343 = vsel %vm1227, %v1338, %v1342
      %v1344 = vshrl.u32 %v1184, 16
      %v1346 = vor.u32 %v1344, %v1342
      %v1348 = vshll.u32 %v1185, 16
      %v1350 = vrot.slane %v1348, 1
      %v1351 = vsel %vm1227, %v1346, %v1350
      %v1352 = vshrl.u32 %v1185, 16
      %v1354 = vor.u32 %v1352, %v1350
      %v1356 = vshll.u32 %v1186, 16
      %v1358 = vrot.slane %v1356, 1
      %v1359 = vsel %vm1227, %v1354, %v1358
      %v1360 = vshrl.u32 %v1186, 16
      %v1362 = vor.u32 %v1360, %v1358
      %v1364 = vshll.u32 %v1187, 16
      %v1366 = vrot.slane %v1364, 1
      %v1367 = vsel %vm1227, %v1362, %v1366
      %v1368 = vshrl.u32 %v1187, 16
      %v1370 = vor.u32 %v1368, %v1366
      %v1372 = vshll.u32 %v1188, 16
      %v1374 = vrot.slane %v1372, 1
      %v1375 = vsel %vm1227, %v1370, %v1374
      %v1380 = vunpack.c.l.b16 %v1195
      %v1381 = vunpack.c.l.b16 %v1196
      %v1382 = vunpack.c.l.b16 %v1197
      %v1383 = vunpack.c.l.b16 %v1198
      %v1384 = vpack.c.b16 %v1381, %v1380
      %v1385 = vpack.c.b16 %v1383, %v1382
      %vm1388 = vcmask 261120
      %v1390 = vsel %vm1388, %v1239, 0
      %v1393 = vsel %vm1388, %v1247, 0
      %v1396 = vsel %vm1388, %v1255, 0
      %v1399 = vsel %vm1388, %v1263, 0
      %v1402 = vsel %vm1388, %v1271, 0
      %v1405 = vsel %vm1388, %v1279, 0
      %v1408 = vsel %vm1388, %v1287, 0
      %v1411 = vsel %vm1388, %v1295, 0
      %v1414 = vsel %vm1388, %v1303, 0
      %v1417 = vsel %vm1388, %v1311, 0
      %v1420 = vsel %vm1388, %v1319, 0
      %v1423 = vsel %vm1388, %v1327, 0
      %v1426 = vsel %vm1388, %v1335, 0
      %v1429 = vsel %vm1388, %v1343, 0
      %v1432 = vsel %vm1388, %v1351, 0
      %v1435 = vsel %vm1388, %v1359, 0
      %v1438 = vsel %vm1388, %v1367, 0
      %v1441 = vsel %vm1388, %v1375, 0
      %1443 = vmatprep.subr.bf16.mxu0 0
      %1444 = vmatpush1.bf16.msra.mxu0 %v1384
      %1445 = vmatprep.subr.bf16.mxu0 0
      %1446 = vmatpush1.bf16.msra.mxu0 %v1385
      %1447 = vmatprep.subr.bf16.mxu0 0
      %1448 = vmatpush1.bf16.msra.mxu0 0
      %1449 = vmatprep.subr.bf16.mxu0 0
      %1450 = vmatpush1.bf16.msra.mxu0 0
      %1451 = vmatprep.subr.bf16.mxu0 0
      %1452 = vmatpush1.bf16.msra.mxu0 0
      %1453 = vmatprep.subr.bf16.mxu0 0
      %1454 = vmatpush1.bf16.msra.mxu0 0
      %1455 = vmatprep.subr.bf16.mxu0 0
      %1456 = vmatpush1.bf16.msra.mxu0 0
      %1457 = vmatprep.subr.bf16.mxu0 0
      %1458 = vmatpush1.bf16.msra.mxu0 0
      %1459 = vmatprep.subr.bf16.mxu0 0
      %1460 = vmatpush1.bf16.msra.mxu0 0
      %1461 = vmatprep.subr.bf16.mxu0 0
      %1462 = vmatpush1.bf16.msra.mxu0 0
      %1463 = vmatprep.subr.bf16.mxu0 0
      %1464 = vmatpush1.bf16.msra.mxu0 0
      %1465 = vmatprep.subr.bf16.mxu0 0
      %1466 = vmatpush1.bf16.msra.mxu0 0
      %1467 = vmatprep.subr.bf16.mxu0 0
      %1468 = vmatpush1.bf16.msra.mxu0 0
      %1469 = vmatprep.subr.bf16.mxu0 0
      %1470 = vmatpush1.bf16.msra.mxu0 0
      %1471 = vmatprep.subr.bf16.mxu0 0
      %1472 = vmatpush1.bf16.msra.mxu0 0
      %1473 = vmatprep.subr.bf16.mxu0 0
      %1474 = vmatpush1.bf16.msra.mxu0 0
      %1475 = vmatprep.mubr.bf16.mxu0 0
      %1476 = vmatmul.mubr.bf16.gmra.mrb[0].mxu0 %v1390
      %v1477 = vpop.f32.mrb[0].mxu0
      %v1478 = vadd.f32 0.0, %v1477
      %v1479 = vpop.f32.mrb[0].mxu0
      %v1480 = vpop.f32.mrb[0].mxu0
      %v1481 = vadd.f32 0.0, %v1480
      %v1482 = vpop.f32.mrb[0].mxu0
      %1483 = vmatprep.mubr.bf16.mxu0 0
      %1484 = vmatmul.mubr.bf16.gmra.mrb[0].mxu0 %v1393
      %v1485 = vpop.f32.mrb[0].mxu0
      %v1486 = vadd.f32 0.0, %v1485
      %v1487 = vpop.f32.mrb[0].mxu0
      %v1488 = vpop.f32.mrb[0].mxu0
      %v1489 = vadd.f32 0.0, %v1488
      %v1490 = vpop.f32.mrb[0].mxu0
      %1491 = vmatprep.mubr.bf16.mxu0 0
      %1492 = vmatmul.mubr.bf16.gmra.mrb[0].mxu0 %v1396
      %v1493 = vpop.f32.mrb[0].mxu0
      %v1494 = vadd.f32 0.0, %v1493
      %v1495 = vpop.f32.mrb[0].mxu0
      %v1496 = vpop.f32.mrb[0].mxu0
      %v1497 = vadd.f32 0.0, %v1496
      %v1498 = vpop.f32.mrb[0].mxu0
      %1499 = vmatprep.mubr.bf16.mxu0 0
      %1500 = vmatmul.mubr.bf16.gmra.mrb[0].mxu0 %v1399
      %v1501 = vpop.f32.mrb[0].mxu0
      %v1502 = vadd.f32 0.0, %v1501
      %v1503 = vpop.f32.mrb[0].mxu0
      %v1504 = vpop.f32.mrb[0].mxu0
      %v1505 = vadd.f32 0.0, %v1504
      %v1506 = vpop.f32.mrb[0].mxu0
      %1507 = vmatprep.mubr.bf16.mxu0 0
      %1508 = vmatmul.mubr.bf16.gmra.mrb[0].mxu0 %v1402
      %v1509 = vpop.f32.mrb[0].mxu0
      %v1510 = vadd.f32 0.0, %v1509
      %v1511 = vpop.f32.mrb[0].mxu0
      %v1512 = vpop.f32.mrb[0].mxu0
      %v1513 = vadd.f32 0.0, %v1512
      %v1514 = vpop.f32.mrb[0].mxu0
      %1515 = vmatprep.mubr.bf16.mxu0 0
      %1516 = vmatmul.mubr.bf16.gmra.mrb[0].mxu0 %v1405
      %v1517 = vpop.f32.mrb[0].mxu0
      %v1518 = vadd.f32 0.0, %v1517
      %v1519 = vpop.f32.mrb[0].mxu0
      %v1520 = vpop.f32.mrb[0].mxu0
      %v1521 = vadd.f32 0.0, %v1520
      %v1522 = vpop.f32.mrb[0].mxu0
      %1523 = vmatprep.mubr.bf16.mxu0 0
      %1524 = vmatmul.mubr.bf16.gmra.mrb[0].mxu0 %v1408
      %v1525 = vpop.f32.mrb[0].mxu0
      %v1526 = vadd.f32 0.0, %v1525
      %v1527 = vpop.f32.mrb[0].mxu0
      %v1528 = vpop.f32.mrb[0].mxu0
      %v1529 = vadd.f32 0.0, %v1528
      %v1530 = vpop.f32.mrb[0].mxu0
      %1531 = vmatprep.mubr.bf16.mxu0 0
      %1532 = vmatmul.mubr.bf16.gmra.mrb[0].mxu0 %v1411
      %v1533 = vpop.f32.mrb[0].mxu0
      %v1534 = vadd.f32 0.0, %v1533
      %v1535 = vpop.f32.mrb[0].mxu0
      %v1536 = vpop.f32.mrb[0].mxu0
      %v1537 = vadd.f32 0.0, %v1536
      %v1538 = vpop.f32.mrb[0].mxu0
      %1539 = vmatprep.mubr.bf16.mxu0 0
      %1540 = vmatmul.mubr.bf16.gmra.mrb[0].mxu0 %v1414
      %v1541 = vpop.f32.mrb[0].mxu0
      %v1542 = vadd.f32 0.0, %v1541
      %v1543 = vpop.f32.mrb[0].mxu0
      %v1544 = vpop.f32.mrb[0].mxu0
      %v1545 = vadd.f32 0.0, %v1544
      %v1546 = vpop.f32.mrb[0].mxu0
      %1547 = vmatprep.mubr.bf16.mxu0 0
      %1548 = vmatmul.mubr.bf16.gmra.mrb[0].mxu0 %v1417
      %v1549 = vpop.f32.mrb[0].mxu0
      %v1550 = vadd.f32 0.0, %v1549
      %v1551 = vpop.f32.mrb[0].mxu0
      %v1552 = vpop.f32.mrb[0].mxu0
      %v1553 = vadd.f32 0.0, %v1552
      %v1554 = vpop.f32.mrb[0].mxu0
      %1555 = vmatprep.mubr.bf16.mxu0 0
      %1556 = vmatmul.mubr.bf16.gmra.mrb[0].mxu0 %v1420
      %v1557 = vpop.f32.mrb[0].mxu0
      %v1558 = vadd.f32 0.0, %v1557
      %v1559 = vpop.f32.mrb[0].mxu0
      %v1560 = vpop.f32.mrb[0].mxu0
      %v1561 = vadd.f32 0.0, %v1560
      %v1562 = vpop.f32.mrb[0].mxu0
      %1563 = vmatprep.mubr.bf16.mxu0 0
      %1564 = vmatmul.mubr.bf16.gmra.mrb[0].mxu0 %v1423
      %v1565 = vpop.f32.mrb[0].mxu0
      %v1566 = vadd.f32 0.0, %v1565
      %v1567 = vpop.f32.mrb[0].mxu0
      %v1568 = vpop.f32.mrb[0].mxu0
      %v1569 = vadd.f32 0.0, %v1568
      %v1570 = vpop.f32.mrb[0].mxu0
      %1571 = vmatprep.mubr.bf16.mxu0 0
      %1572 = vmatmul.mubr.bf16.gmra.mrb[0].mxu0 %v1426
      %v1573 = vpop.f32.mrb[0].mxu0
      %v1574 = vadd.f32 0.0, %v1573
      %v1575 = vpop.f32.mrb[0].mxu0
      %v1576 = vpop.f32.mrb[0].mxu0
      %v1577 = vadd.f32 0.0, %v1576
      %v1578 = vpop.f32.mrb[0].mxu0
      %1579 = vmatprep.mubr.bf16.mxu0 0
      %1580 = vmatmul.mubr.bf16.gmra.mrb[0].mxu0 %v1429
      %v1581 = vpop.f32.mrb[0].mxu0
      %v1582 = vadd.f32 0.0, %v1581
      %v1583 = vpop.f32.mrb[0].mxu0
      %v1584 = vpop.f32.mrb[0].mxu0
      %v1585 = vadd.f32 0.0, %v1584
      %v1586 = vpop.f32.mrb[0].mxu0
      %1587 = vmatprep.mubr.bf16.mxu0 0
      %1588 = vmatmul.mubr.bf16.gmra.mrb[0].mxu0 %v1432
      %v1589 = vpop.f32.mrb[0].mxu0
      %v1590 = vadd.f32 0.0, %v1589
      %v1591 = vpop.f32.mrb[0].mxu0
      %v1592 = vpop.f32.mrb[0].mxu0
      %v1593 = vadd.f32 0.0, %v1592
      %v1594 = vpop.f32.mrb[0].mxu0
      %1595 = vmatprep.mubr.bf16.mxu0 0
      %1596 = vmatmul.mubr.bf16.gmra.mrb[0].mxu0 %v1435
      %v1597 = vpop.f32.mrb[0].mxu0
      %v1598 = vadd.f32 0.0, %v1597
      %v1599 = vpop.f32.mrb[0].mxu0
      %v1600 = vpop.f32.mrb[0].mxu0
      %v1601 = vadd.f32 0.0, %v1600
      %v1602 = vpop.f32.mrb[0].mxu0
      %1603 = vmatprep.mubr.bf16.mxu0 0
      %1604 = vmatmul.mubr.bf16.gmra.mrb[0].mxu0 %v1438
      %v1605 = vpop.f32.mrb[0].mxu0
      %v1606 = vadd.f32 0.0, %v1605
      %v1607 = vpop.f32.mrb[0].mxu0
      %v1608 = vpop.f32.mrb[0].mxu0
      %v1609 = vadd.f32 0.0, %v1608
      %v1610 = vpop.f32.mrb[0].mxu0
      %1611 = vmatprep.mubr.bf16.mxu0 0
      %1612 = vmatmul.mubr.bf16.gmra.mrb[0].mxu0 %v1441
      %v1613 = vpop.f32.mrb[0].mxu0
      %v1614 = vadd.f32 0.0, %v1613
      %v1615 = vpop.f32.mrb[0].mxu0
      %v1616 = vpop.f32.mrb[0].mxu0
      %v1617 = vadd.f32 0.0, %v1616
      %v1618 = vpop.f32.mrb[0].mxu0
      %1619 = vdwg.mxu0
      %v1624 = vunpack.c.l.b16 %v1191
      %v1625 = vunpack.c.l.b16 %v1192
      %v1626 = vunpack.c.l.b16 %v1193
      %v1627 = vunpack.c.l.b16 %v1194
      %v1628 = vpack.c.b16 %v1625, %v1624
      %v1629 = vpack.c.b16 %v1627, %v1626
      %v1632 = vsel %vm1388, %v1170, 0
      %v1634 = vsel %vm1388, %v1171, 0
      %v1636 = vsel %vm1388, %v1172, 0
      %v1638 = vsel %vm1388, %v1173, 0
      %v1640 = vsel %vm1388, %v1174, 0
      %v1642 = vsel %vm1388, %v1175, 0
      %v1644 = vsel %vm1388, %v1176, 0
      %v1646 = vsel %vm1388, %v1177, 0
      %v1648 = vsel %vm1388, %v1178, 0
      %v1650 = vsel %vm1388, %v1179, 0
      %v1652 = vsel %vm1388, %v1180, 0
      %v1654 = vsel %vm1388, %v1181, 0
      %v1656 = vsel %vm1388, %v1182, 0
      %v1658 = vsel %vm1388, %v1183, 0
      %v1660 = vsel %vm1388, %v1184, 0
      %v1662 = vsel %vm1388, %v1185, 0
      %v1664 = vsel %vm1388, %v1186, 0
      %v1666 = vsel %vm1388, %v1187, 0
      %1668 = vmatprep.subr.bf16.mxu0 0
      %1669 = vmatpush1.bf16.msra.mxu0 %v1628
      %1670 = vmatprep.subr.bf16.mxu0 0
      %1671 = vmatpush1.bf16.msra.mxu0 %v1629
      %1672 = vmatprep.subr.bf16.mxu0 0
      %1673 = vmatpush1.bf16.msra.mxu0 0
      %1674 = vmatprep.subr.bf16.mxu0 0
      %1675 = vmatpush1.bf16.msra.mxu0 0
      %1676 = vmatprep.subr.bf16.mxu0 0
      %1677 = vmatpush1.bf16.msra.mxu0 0
      %1678 = vmatprep.subr.bf16.mxu0 0
      %1679 = vmatpush1.bf16.msra.mxu0 0
      %1680 = vmatprep.subr.bf16.mxu0 0
      %1681 = vmatpush1.bf16.msra.mxu0 0
      %1682 = vmatprep.subr.bf16.mxu0 0
      %1683 = vmatpush1.bf16.msra.mxu0 0
      %1684 = vmatprep.subr.bf16.mxu0 0
      %1685 = vmatpush1.bf16.msra.mxu0 0
      %1686 = vmatprep.subr.bf16.mxu0 0
      %1687 = vmatpush1.bf16.msra.mxu0 0
      %1688 = vmatprep.subr.bf16.mxu0 0
      %1689 = vmatpush1.bf16.msra.mxu0 0
      %1690 = vmatprep.subr.bf16.mxu0 0
      %1691 = vmatpush1.bf16.msra.mxu0 0
      %1692 = vmatprep.subr.bf16.mxu0 0
      %1693 = vmatpush1.bf16.msra.mxu0 0
      %1694 = vmatprep.subr.bf16.mxu0 0
      %1695 = vmatpush1.bf16.msra.mxu0 0
      %1696 = vmatprep.subr.bf16.mxu0 0
      %1697 = vmatpush1.bf16.msra.mxu0 0
      %1698 = vmatprep.subr.bf16.mxu0 0
      %1699 = vmatpush1.bf16.msra.mxu0 0
      %1700 = vmatprep.mubr.bf16.mxu0 0
      %1701 = vmatmul.mubr.bf16.gmra.mrb[0].mxu0 %v1632
      %v1702 = vpop.f32.mrb[0].mxu0
      %v1703 = vadd.f32 %v1478, %v1702
      %v1704 = vpop.f32.mrb[0].mxu0
      %v1705 = vpop.f32.mrb[0].mxu0
      %v1706 = vadd.f32 %v1481, %v1705
      %v1707 = vpop.f32.mrb[0].mxu0
      %1708 = vmatprep.mubr.bf16.mxu0 0
      %1709 = vmatmul.mubr.bf16.gmra.mrb[0].mxu0 %v1634
      %v1710 = vpop.f32.mrb[0].mxu0
      %v1711 = vadd.f32 %v1486, %v1710
      %v1712 = vpop.f32.mrb[0].mxu0
      %v1713 = vpop.f32.mrb[0].mxu0
      %v1714 = vadd.f32 %v1489, %v1713
      %v1715 = vpop.f32.mrb[0].mxu0
      %1716 = vmatprep.mubr.bf16.mxu0 0
      %1717 = vmatmul.mubr.bf16.gmra.mrb[0].mxu0 %v1636
      %v1718 = vpop.f32.mrb[0].mxu0
      %v1719 = vadd.f32 %v1494, %v1718
      %v1720 = vpop.f32.mrb[0].mxu0
      %v1721 = vpop.f32.mrb[0].mxu0
      %v1722 = vadd.f32 %v1497, %v1721
      %v1723 = vpop.f32.mrb[0].mxu0
      %1724 = vmatprep.mubr.bf16.mxu0 0
      %1725 = vmatmul.mubr.bf16.gmra.mrb[0].mxu0 %v1638
      %v1726 = vpop.f32.mrb[0].mxu0
      %v1727 = vadd.f32 %v1502, %v1726
      %v1728 = vpop.f32.mrb[0].mxu0
      %v1729 = vpop.f32.mrb[0].mxu0
      %v1730 = vadd.f32 %v1505, %v1729
      %v1731 = vpop.f32.mrb[0].mxu0
      %1732 = vmatprep.mubr.bf16.mxu0 0
      %1733 = vmatmul.mubr.bf16.gmra.mrb[0].mxu0 %v1640
      %v1734 = vpop.f32.mrb[0].mxu0
      %v1735 = vadd.f32 %v1510, %v1734
      %v1736 = vpop.f32.mrb[0].mxu0
      %v1737 = vpop.f32.mrb[0].mxu0
      %v1738 = vadd.f32 %v1513, %v1737
      %v1739 = vpop.f32.mrb[0].mxu0
      %1740 = vmatprep.mubr.bf16.mxu0 0
      %1741 = vmatmul.mubr.bf16.gmra.mrb[0].mxu0 %v1642
      %v1742 = vpop.f32.mrb[0].mxu0
      %v1743 = vadd.f32 %v1518, %v1742
      %v1744 = vpop.f32.mrb[0].mxu0
      %v1745 = vpop.f32.mrb[0].mxu0
      %v1746 = vadd.f32 %v1521, %v1745
      %v1747 = vpop.f32.mrb[0].mxu0
      %1748 = vmatprep.mubr.bf16.mxu0 0
      %1749 = vmatmul.mubr.bf16.gmra.mrb[0].mxu0 %v1644
      %v1750 = vpop.f32.mrb[0].mxu0
      %v1751 = vadd.f32 %v1526, %v1750
      %v1752 = vpop.f32.mrb[0].mxu0
      %v1753 = vpop.f32.mrb[0].mxu0
      %v1754 = vadd.f32 %v1529, %v1753
      %v1755 = vpop.f32.mrb[0].mxu0
      %1756 = vmatprep.mubr.bf16.mxu0 0
      %1757 = vmatmul.mubr.bf16.gmra.mrb[0].mxu0 %v1646
      %v1758 = vpop.f32.mrb[0].mxu0
      %v1759 = vadd.f32 %v1534, %v1758
      %v1760 = vpop.f32.mrb[0].mxu0
      %v1761 = vpop.f32.mrb[0].mxu0
      %v1762 = vadd.f32 %v1537, %v1761
      %v1763 = vpop.f32.mrb[0].mxu0
      %1764 = vmatprep.mubr.bf16.mxu0 0
      %1765 = vmatmul.mubr.bf16.gmra.mrb[0].mxu0 %v1648
      %v1766 = vpop.f32.mrb[0].mxu0
      %v1767 = vadd.f32 %v1542, %v1766
      %v1768 = vpop.f32.mrb[0].mxu0
      %v1769 = vpop.f32.mrb[0].mxu0
      %v1770 = vadd.f32 %v1545, %v1769
      %v1771 = vpop.f32.mrb[0].mxu0
      %1772 = vmatprep.mubr.bf16.mxu0 0
      %1773 = vmatmul.mubr.bf16.gmra.mrb[0].mxu0 %v1650
      %v1774 = vpop.f32.mrb[0].mxu0
      %v1775 = vadd.f32 %v1550, %v1774
      %v1776 = vpop.f32.mrb[0].mxu0
      %v1777 = vpop.f32.mrb[0].mxu0
      %v1778 = vadd.f32 %v1553, %v1777
      %v1779 = vpop.f32.mrb[0].mxu0
      %1780 = vmatprep.mubr.bf16.mxu0 0
      %1781 = vmatmul.mubr.bf16.gmra.mrb[0].mxu0 %v1652
      %v1782 = vpop.f32.mrb[0].mxu0
      %v1783 = vadd.f32 %v1558, %v1782
      %v1784 = vpop.f32.mrb[0].mxu0
      %v1785 = vpop.f32.mrb[0].mxu0
      %v1786 = vadd.f32 %v1561, %v1785
      %v1787 = vpop.f32.mrb[0].mxu0
      %1788 = vmatprep.mubr.bf16.mxu0 0
      %1789 = vmatmul.mubr.bf16.gmra.mrb[0].mxu0 %v1654
      %v1790 = vpop.f32.mrb[0].mxu0
      %v1791 = vadd.f32 %v1566, %v1790
      %v1792 = vpop.f32.mrb[0].mxu0
      %v1793 = vpop.f32.mrb[0].mxu0
      %v1794 = vadd.f32 %v1569, %v1793
      %v1795 = vpop.f32.mrb[0].mxu0
      %1796 = vmatprep.mubr.bf16.mxu0 0
      %1797 = vmatmul.mubr.bf16.gmra.mrb[0].mxu0 %v1656
      %v1798 = vpop.f32.mrb[0].mxu0
      %v1799 = vadd.f32 %v1574, %v1798
      %v1800 = vpop.f32.mrb[0].mxu0
      %v1801 = vpop.f32.mrb[0].mxu0
      %v1802 = vadd.f32 %v1577, %v1801
      %v1803 = vpop.f32.mrb[0].mxu0
      %1804 = vmatprep.mubr.bf16.mxu0 0
      %1805 = vmatmul.mubr.bf16.gmra.mrb[0].mxu0 %v1658
      %v1806 = vpop.f32.mrb[0].mxu0
      %v1807 = vadd.f32 %v1582, %v1806
      %v1808 = vpop.f32.mrb[0].mxu0
      %v1809 = vpop.f32.mrb[0].mxu0
      %v1810 = vadd.f32 %v1585, %v1809
      %v1811 = vpop.f32.mrb[0].mxu0
      %1812 = vmatprep.mubr.bf16.mxu0 0
      %1813 = vmatmul.mubr.bf16.gmra.mrb[0].mxu0 %v1660
      %v1814 = vpop.f32.mrb[0].mxu0
      %v1815 = vadd.f32 %v1590, %v1814
      %v1816 = vpop.f32.mrb[0].mxu0
      %v1817 = vpop.f32.mrb[0].mxu0
      %v1818 = vadd.f32 %v1593, %v1817
      %v1819 = vpop.f32.mrb[0].mxu0
      %1820 = vmatprep.mubr.bf16.mxu0 0
      %1821 = vmatmul.mubr.bf16.gmra.mrb[0].mxu0 %v1662
      %v1822 = vpop.f32.mrb[0].mxu0
      %v1823 = vadd.f32 %v1598, %v1822
      %v1824 = vpop.f32.mrb[0].mxu0
      %v1825 = vpop.f32.mrb[0].mxu0
      %v1826 = vadd.f32 %v1601, %v1825
      %v1827 = vpop.f32.mrb[0].mxu0
      %1828 = vmatprep.mubr.bf16.mxu0 0
      %1829 = vmatmul.mubr.bf16.gmra.mrb[0].mxu0 %v1664
      %v1830 = vpop.f32.mrb[0].mxu0
      %v1831 = vadd.f32 %v1606, %v1830
      %v1832 = vpop.f32.mrb[0].mxu0
      %v1833 = vpop.f32.mrb[0].mxu0
      %v1834 = vadd.f32 %v1609, %v1833
      %v1835 = vpop.f32.mrb[0].mxu0
      %1836 = vmatprep.mubr.bf16.mxu0 0
      %1837 = vmatmul.mubr.bf16.gmra.mrb[0].mxu0 %v1666
      %v1838 = vpop.f32.mrb[0].mxu0
      %v1839 = vadd.f32 %v1614, %v1838
      %v1840 = vpop.f32.mrb[0].mxu0
      %v1841 = vpop.f32.mrb[0].mxu0
      %v1842 = vadd.f32 %v1617, %v1841
      %v1843 = vpop.f32.mrb[0].mxu0
      %1844 = vdwg.mxu0
      %vm1864 = vcmask 1046528
      %v1865 = vrot.slane %v1170, 1
      %v1866 = vrot.slane %v1171, 1
      %v1867 = vsel %vm1864, %v1865, %v1866
      %v1868 = vrot.slane %v1172, 1
      %v1869 = vsel %vm1864, %v1866, %v1868
      %v1870 = vrot.slane %v1173, 1
      %v1871 = vsel %vm1864, %v1868, %v1870
      %v1872 = vrot.slane %v1174, 1
      %v1873 = vsel %vm1864, %v1870, %v1872
      %v1874 = vrot.slane %v1175, 1
      %v1875 = vsel %vm1864, %v1872, %v1874
      %v1876 = vrot.slane %v1176, 1
      %v1877 = vsel %vm1864, %v1874, %v1876
      %v1878 = vrot.slane %v1177, 1
      %v1879 = vsel %vm1864, %v1876, %v1878
      %v1880 = vrot.slane %v1178, 1
      %v1881 = vsel %vm1864, %v1878, %v1880
      %v1882 = vrot.slane %v1179, 1
      %v1883 = vsel %vm1864, %v1880, %v1882
      %v1884 = vrot.slane %v1180, 1
      %v1885 = vsel %vm1864, %v1882, %v1884
      %v1886 = vrot.slane %v1181, 1
      %v1887 = vsel %vm1864, %v1884, %v1886
      %v1888 = vrot.slane %v1182, 1
      %v1889 = vsel %vm1864, %v1886, %v1888
      %v1890 = vrot.slane %v1183, 1
      %v1891 = vsel %vm1864, %v1888, %v1890
      %v1892 = vrot.slane %v1184, 1
      %v1893 = vsel %vm1864, %v1890, %v1892
      %v1894 = vrot.slane %v1185, 1
      %v1895 = vsel %vm1864, %v1892, %v1894
      %v1896 = vrot.slane %v1186, 1
      %v1897 = vsel %vm1864, %v1894, %v1896
      %v1898 = vrot.slane %v1187, 1
      %v1899 = vsel %vm1864, %v1896, %v1898
      %v1900 = vrot.slane %v1188, 1
      %v1901 = vsel %vm1864, %v1898, %v1900
      %v1906 = vunpack.c.l.b16 %v1199
      %v1907 = vunpack.c.l.b16 %v1200
      %v1908 = vunpack.c.l.b16 %v1201
      %v1909 = vunpack.c.l.b16 %v1202
      %v1910 = vpack.c.b16 %v1907, %v1906
      %v1911 = vpack.c.b16 %v1909, %v1908
      %v1915 = vsel %vm1388, %v1867, 0
      %v1918 = vsel %vm1388, %v1869, 0
      %v1921 = vsel %vm1388, %v1871, 0
      %v1924 = vsel %vm1388, %v1873, 0
      %v1927 = vsel %vm1388, %v1875, 0
      %v1930 = vsel %vm1388, %v1877, 0
      %v1933 = vsel %vm1388, %v1879, 0
      %v1936 = vsel %vm1388, %v1881, 0
      %v1939 = vsel %vm1388, %v1883, 0
      %v1942 = vsel %vm1388, %v1885, 0
      %v1945 = vsel %vm1388, %v1887, 0
      %v1948 = vsel %vm1388, %v1889, 0
      %v1951 = vsel %vm1388, %v1891, 0
      %v1954 = vsel %vm1388, %v1893, 0
      %v1957 = vsel %vm1388, %v1895, 0
      %v1960 = vsel %vm1388, %v1897, 0
      %v1963 = vsel %vm1388, %v1899, 0
      %v1966 = vsel %vm1388, %v1901, 0
      %1968 = vmatprep.subr.bf16.mxu0 0
      %1969 = vmatpush1.bf16.msra.mxu0 %v1910
      %1970 = vmatprep.subr.bf16.mxu0 0
      %1971 = vmatpush1.bf16.msra.mxu0 %v1911
      %1972 = vmatprep.subr.bf16.mxu0 0
      %1973 = vmatpush1.bf16.msra.mxu0 0
      %1974 = vmatprep.subr.bf16.mxu0 0
      %1975 = vmatpush1.bf16.msra.mxu0 0
      %1976 = vmatprep.subr.bf16.mxu0 0
      %1977 = vmatpush1.bf16.msra.mxu0 0
      %1978 = vmatprep.subr.bf16.mxu0 0
      %1979 = vmatpush1.bf16.msra.mxu0 0
      %1980 = vmatprep.subr.bf16.mxu0 0
      %1981 = vmatpush1.bf16.msra.mxu0 0
      %1982 = vmatprep.subr.bf16.mxu0 0
      %1983 = vmatpush1.bf16.msra.mxu0 0
      %1984 = vmatprep.subr.bf16.mxu0 0
      %1985 = vmatpush1.bf16.msra.mxu0 0
      %1986 = vmatprep.subr.bf16.mxu0 0
      %1987 = vmatpush1.bf16.msra.mxu0 0
      %1988 = vmatprep.subr.bf16.mxu0 0
      %1989 = vmatpush1.bf16.msra.mxu0 0
      %1990 = vmatprep.subr.bf16.mxu0 0
      %1991 = vmatpush1.bf16.msra.mxu0 0
      %1992 = vmatprep.subr.bf16.mxu0 0
      %1993 = vmatpush1.bf16.msra.mxu0 0
      %1994 = vmatprep.subr.bf16.mxu0 0
      %1995 = vmatpush1.bf16.msra.mxu0 0
      %1996 = vmatprep.subr.bf16.mxu0 0
      %1997 = vmatpush1.bf16.msra.mxu0 0
      %1998 = vmatprep.subr.bf16.mxu0 0
      %1999 = vmatpush1.bf16.msra.mxu0 0
      %2000 = vmatprep.mubr.bf16.mxu0 0
      %2001 = vmatmul.mubr.bf16.gmra.mrb[0].mxu0 %v1915
      %v2002 = vpop.f32.mrb[0].mxu0
      %v2003 = vadd.f32 0.0, %v2002
      %v2004 = vpop.f32.mrb[0].mxu0
      %v2005 = vpop.f32.mrb[0].mxu0
      %v2006 = vadd.f32 0.0, %v2005
      %v2007 = vpop.f32.mrb[0].mxu0
      %2008 = vmatprep.mubr.bf16.mxu0 0
      %2009 = vmatmul.mubr.bf16.gmra.mrb[0].mxu0 %v1918
      %v2010 = vpop.f32.mrb[0].mxu0
      %v2011 = vadd.f32 0.0, %v2010
      %v2012 = vpop.f32.mrb[0].mxu0
      %v2013 = vpop.f32.mrb[0].mxu0
      %v2014 = vadd.f32 0.0, %v2013
      %v2015 = vpop.f32.mrb[0].mxu0
      %2016 = vmatprep.mubr.bf16.mxu0 0
      %2017 = vmatmul.mubr.bf16.gmra.mrb[0].mxu0 %v1921
      %v2018 = vpop.f32.mrb[0].mxu0
      %v2019 = vadd.f32 0.0, %v2018
      %v2020 = vpop.f32.mrb[0].mxu0
      %v2021 = vpop.f32.mrb[0].mxu0
      %v2022 = vadd.f32 0.0, %v2021
      %v2023 = vpop.f32.mrb[0].mxu0
      %2024 = vmatprep.mubr.bf16.mxu0 0
      %2025 = vmatmul.mubr.bf16.gmra.mrb[0].mxu0 %v1924
      %v2026 = vpop.f32.mrb[0].mxu0
      %v2027 = vadd.f32 0.0, %v2026
      %v2028 = vpop.f32.mrb[0].mxu0
      %v2029 = vpop.f32.mrb[0].mxu0
      %v2030 = vadd.f32 0.0, %v2029
      %v2031 = vpop.f32.mrb[0].mxu0
      %2032 = vmatprep.mubr.bf16.mxu0 0
      %2033 = vmatmul.mubr.bf16.gmra.mrb[0].mxu0 %v1927
      %v2034 = vpop.f32.mrb[0].mxu0
      %v2035 = vadd.f32 0.0, %v2034
      %v2036 = vpop.f32.mrb[0].mxu0
      %v2037 = vpop.f32.mrb[0].mxu0
      %v2038 = vadd.f32 0.0, %v2037
      %v2039 = vpop.f32.mrb[0].mxu0
      %2040 = vmatprep.mubr.bf16.mxu0 0
      %2041 = vmatmul.mubr.bf16.gmra.mrb[0].mxu0 %v1930
      %v2042 = vpop.f32.mrb[0].mxu0
      %v2043 = vadd.f32 0.0, %v2042
      %v2044 = vpop.f32.mrb[0].mxu0
      %v2045 = vpop.f32.mrb[0].mxu0
      %v2046 = vadd.f32 0.0, %v2045
      %v2047 = vpop.f32.mrb[0].mxu0
      %2048 = vmatprep.mubr.bf16.mxu0 0
      %2049 = vmatmul.mubr.bf16.gmra.mrb[0].mxu0 %v1933
      %v2050 = vpop.f32.mrb[0].mxu0
      %v2051 = vadd.f32 0.0, %v2050
      %v2052 = vpop.f32.mrb[0].mxu0
      %v2053 = vpop.f32.mrb[0].mxu0
      %v2054 = vadd.f32 0.0, %v2053
      %v2055 = vpop.f32.mrb[0].mxu0
      %2056 = vmatprep.mubr.bf16.mxu0 0
      %2057 = vmatmul.mubr.bf16.gmra.mrb[0].mxu0 %v1936
      %v2058 = vpop.f32.mrb[0].mxu0
      %v2059 = vadd.f32 0.0, %v2058
      %v2060 = vpop.f32.mrb[0].mxu0
      %v2061 = vpop.f32.mrb[0].mxu0
      %v2062 = vadd.f32 0.0, %v2061
      %v2063 = vpop.f32.mrb[0].mxu0
      %2064 = vmatprep.mubr.bf16.mxu0 0
      %2065 = vmatmul.mubr.bf16.gmra.mrb[0].mxu0 %v1939
      %v2066 = vpop.f32.mrb[0].mxu0
      %v2067 = vadd.f32 0.0, %v2066
      %v2068 = vpop.f32.mrb[0].mxu0
      %v2069 = vpop.f32.mrb[0].mxu0
      %v2070 = vadd.f32 0.0, %v2069
      %v2071 = vpop.f32.mrb[0].mxu0
      %2072 = vmatprep.mubr.bf16.mxu0 0
      %2073 = vmatmul.mubr.bf16.gmra.mrb[0].mxu0 %v1942
      %v2074 = vpop.f32.mrb[0].mxu0
      %v2075 = vadd.f32 0.0, %v2074
      %v2076 = vpop.f32.mrb[0].mxu0
      %v2077 = vpop.f32.mrb[0].mxu0
      %v2078 = vadd.f32 0.0, %v2077
      %v2079 = vpop.f32.mrb[0].mxu0
      %2080 = vmatprep.mubr.bf16.mxu0 0
      %2081 = vmatmul.mubr.bf16.gmra.mrb[0].mxu0 %v1945
      %v2082 = vpop.f32.mrb[0].mxu0
      %v2083 = vadd.f32 0.0, %v2082
      %v2084 = vpop.f32.mrb[0].mxu0
      %v2085 = vpop.f32.mrb[0].mxu0
      %v2086 = vadd.f32 0.0, %v2085
      %v2087 = vpop.f32.mrb[0].mxu0
      %2088 = vmatprep.mubr.bf16.mxu0 0
      %2089 = vmatmul.mubr.bf16.gmra.mrb[0].mxu0 %v1948
      %v2090 = vpop.f32.mrb[0].mxu0
      %v2091 = vadd.f32 0.0, %v2090
      %v2092 = vpop.f32.mrb[0].mxu0
      %v2093 = vpop.f32.mrb[0].mxu0
      %v2094 = vadd.f32 0.0, %v2093
      %v2095 = vpop.f32.mrb[0].mxu0
      %2096 = vmatprep.mubr.bf16.mxu0 0
      %2097 = vmatmul.mubr.bf16.gmra.mrb[0].mxu0 %v1951
      %v2098 = vpop.f32.mrb[0].mxu0
      %v2099 = vadd.f32 0.0, %v2098
      %v2100 = vpop.f32.mrb[0].mxu0
      %v2101 = vpop.f32.mrb[0].mxu0
      %v2102 = vadd.f32 0.0, %v2101
      %v2103 = vpop.f32.mrb[0].mxu0
      %2104 = vmatprep.mubr.bf16.mxu0 0
      %2105 = vmatmul.mubr.bf16.gmra.mrb[0].mxu0 %v1954
      %v2106 = vpop.f32.mrb[0].mxu0
      %v2107 = vadd.f32 0.0, %v2106
      %v2108 = vpop.f32.mrb[0].mxu0
      %v2109 = vpop.f32.mrb[0].mxu0
      %v2110 = vadd.f32 0.0, %v2109
      %v2111 = vpop.f32.mrb[0].mxu0
      %2112 = vmatprep.mubr.bf16.mxu0 0
      %2113 = vmatmul.mubr.bf16.gmra.mrb[0].mxu0 %v1957
      %v2114 = vpop.f32.mrb[0].mxu0
      %v2115 = vadd.f32 0.0, %v2114
      %v2116 = vpop.f32.mrb[0].mxu0
      %v2117 = vpop.f32.mrb[0].mxu0
      %v2118 = vadd.f32 0.0, %v2117
      %v2119 = vpop.f32.mrb[0].mxu0
      %2120 = vmatprep.mubr.bf16.mxu0 0
      %2121 = vmatmul.mubr.bf16.gmra.mrb[0].mxu0 %v1960
      %v2122 = vpop.f32.mrb[0].mxu0
      %v2123 = vadd.f32 0.0, %v2122
      %v2124 = vpop.f32.mrb[0].mxu0
      %v2125 = vpop.f32.mrb[0].mxu0
      %v2126 = vadd.f32 0.0, %v2125
      %v2127 = vpop.f32.mrb[0].mxu0
      %2128 = vmatprep.mubr.bf16.mxu0 0
      %2129 = vmatmul.mubr.bf16.gmra.mrb[0].mxu0 %v1963
      %v2130 = vpop.f32.mrb[0].mxu0
      %v2131 = vadd.f32 0.0, %v2130
      %v2132 = vpop.f32.mrb[0].mxu0
      %v2133 = vpop.f32.mrb[0].mxu0
      %v2134 = vadd.f32 0.0, %v2133
      %v2135 = vpop.f32.mrb[0].mxu0
      %2136 = vmatprep.mubr.bf16.mxu0 0
      %2137 = vmatmul.mubr.bf16.gmra.mrb[0].mxu0 %v1966
      %v2138 = vpop.f32.mrb[0].mxu0
      %v2139 = vadd.f32 0.0, %v2138
      %v2140 = vpop.f32.mrb[0].mxu0
      %v2141 = vpop.f32.mrb[0].mxu0
      %v2142 = vadd.f32 0.0, %v2141
      %v2143 = vpop.f32.mrb[0].mxu0
      %2144 = vdwg.mxu0
      %v2145 = vadd.f32 %v1703, %v2003
      %v2146 = vadd.f32 %v1706, %v2006
      %v2147 = vadd.f32 %v1711, %v2011
      %v2148 = vadd.f32 %v1714, %v2014
      %v2149 = vadd.f32 %v1719, %v2019
      %v2150 = vadd.f32 %v1722, %v2022
      %v2151 = vadd.f32 %v1727, %v2027
      %v2152 = vadd.f32 %v1730, %v2030
      %v2153 = vadd.f32 %v1735, %v2035
      %v2154 = vadd.f32 %v1738, %v2038
      %v2155 = vadd.f32 %v1743, %v2043
      %v2156 = vadd.f32 %v1746, %v2046
      %v2157 = vadd.f32 %v1751, %v2051
      %v2158 = vadd.f32 %v1754, %v2054
      %v2159 = vadd.f32 %v1759, %v2059
      %v2160 = vadd.f32 %v1762, %v2062
      %v2161 = vadd.f32 %v1767, %v2067
      %v2162 = vadd.f32 %v1770, %v2070
      %v2163 = vadd.f32 %v1775, %v2075
      %v2164 = vadd.f32 %v1778, %v2078
      %v2165 = vadd.f32 %v1783, %v2083
      %v2166 = vadd.f32 %v1786, %v2086
      %v2167 = vadd.f32 %v1791, %v2091
      %v2168 = vadd.f32 %v1794, %v2094
      %v2169 = vadd.f32 %v1799, %v2099
      %v2170 = vadd.f32 %v1802, %v2102
      %v2171 = vadd.f32 %v1807, %v2107
      %v2172 = vadd.f32 %v1810, %v2110
      %v2173 = vadd.f32 %v1815, %v2115
      %v2174 = vadd.f32 %v1818, %v2118
      %v2175 = vadd.f32 %v1823, %v2123
      %v2176 = vadd.f32 %v1826, %v2126
      %v2177 = vadd.f32 %v1831, %v2131
      %v2178 = vadd.f32 %v1834, %v2134
      %v2179 = vadd.f32 %v1839, %v2139
      %v2180 = vadd.f32 %v1842, %v2142
      %v2182 = vrot.slane %v1189, 1
      %v2183 = vsel %vm1864, %v1900, %v2182
      %v2188 = vunpack.c.l.b16 %v1203
      %v2189 = vunpack.c.l.b16 %v1204
      %v2190 = vunpack.c.l.b16 %v1205
      %v2191 = vunpack.c.l.b16 %v1206
      %v2192 = vpack.c.b16 %v2189, %v2188
      %v2193 = vpack.c.b16 %v2191, %v2190
      %v2197 = vsel %vm1388, %v2183, 0
      %2199 = vmatprep.subr.bf16.mxu0 0
      %2200 = vmatpush1.bf16.msra.mxu0 %v2192
      %2201 = vmatprep.subr.bf16.mxu0 0
      %2202 = vmatpush1.bf16.msra.mxu0 %v2193
      %2203 = vmatprep.subr.bf16.mxu0 0
      %2204 = vmatpush1.bf16.msra.mxu0 0
      %2205 = vmatprep.subr.bf16.mxu0 0
      %2206 = vmatpush1.bf16.msra.mxu0 0
      %2207 = vmatprep.subr.bf16.mxu0 0
      %2208 = vmatpush1.bf16.msra.mxu0 0
      %2209 = vmatprep.subr.bf16.mxu0 0
      %2210 = vmatpush1.bf16.msra.mxu0 0
      %2211 = vmatprep.subr.bf16.mxu0 0
      %2212 = vmatpush1.bf16.msra.mxu0 0
      %2213 = vmatprep.subr.bf16.mxu0 0
      %2214 = vmatpush1.bf16.msra.mxu0 0
      %2215 = vmatprep.subr.bf16.mxu0 0
      %2216 = vmatpush1.bf16.msra.mxu0 0
      %2217 = vmatprep.subr.bf16.mxu0 0
      %2218 = vmatpush1.bf16.msra.mxu0 0
      %2219 = vmatprep.subr.bf16.mxu0 0
      %2220 = vmatpush1.bf16.msra.mxu0 0
      %2221 = vmatprep.subr.bf16.mxu0 0
      %2222 = vmatpush1.bf16.msra.mxu0 0
      %2223 = vmatprep.subr.bf16.mxu0 0
      %2224 = vmatpush1.bf16.msra.mxu0 0
      %2225 = vmatprep.subr.bf16.mxu0 0
      %2226 = vmatpush1.bf16.msra.mxu0 0
      %2227 = vmatprep.subr.bf16.mxu0 0
      %2228 = vmatpush1.bf16.msra.mxu0 0
      %2229 = vmatprep.subr.bf16.mxu0 0
      %2230 = vmatpush1.bf16.msra.mxu0 0
      %2231 = vmatprep.mubr.bf16.mxu0 0
      %2232 = vmatmul.mubr.bf16.gmra.mrb[0].mxu0 %v1918
      %v2233 = vpop.f32.mrb[0].mxu0
      %v2234 = vadd.f32 0.0, %v2233
      %v2235 = vpop.f32.mrb[0].mxu0
      %v2236 = vpop.f32.mrb[0].mxu0
      %v2237 = vadd.f32 0.0, %v2236
      %v2238 = vpop.f32.mrb[0].mxu0
      %2239 = vmatprep.mubr.bf16.mxu0 0
      %2240 = vmatmul.mubr.bf16.gmra.mrb[0].mxu0 %v1921
      %v2241 = vpop.f32.mrb[0].mxu0
      %v2242 = vadd.f32 0.0, %v2241
      %v2243 = vpop.f32.mrb[0].mxu0
      %v2244 = vpop.f32.mrb[0].mxu0
      %v2245 = vadd.f32 0.0, %v2244
      %v2246 = vpop.f32.mrb[0].mxu0
      %2247 = vmatprep.mubr.bf16.mxu0 0
      %2248 = vmatmul.mubr.bf16.gmra.mrb[0].mxu0 %v1924
      %v2249 = vpop.f32.mrb[0].mxu0
      %v2250 = vadd.f32 0.0, %v2249
      %v2251 = vpop.f32.mrb[0].mxu0
      %v2252 = vpop.f32.mrb[0].mxu0
      %v2253 = vadd.f32 0.0, %v2252
      %v2254 = vpop.f32.mrb[0].mxu0
      %2255 = vmatprep.mubr.bf16.mxu0 0
      %2256 = vmatmul.mubr.bf16.gmra.mrb[0].mxu0 %v1927
      %v2257 = vpop.f32.mrb[0].mxu0
      %v2258 = vadd.f32 0.0, %v2257
      %v2259 = vpop.f32.mrb[0].mxu0
      %v2260 = vpop.f32.mrb[0].mxu0
      %v2261 = vadd.f32 0.0, %v2260
      %v2262 = vpop.f32.mrb[0].mxu0
      %2263 = vmatprep.mubr.bf16.mxu0 0
      %2264 = vmatmul.mubr.bf16.gmra.mrb[0].mxu0 %v1930
      %v2265 = vpop.f32.mrb[0].mxu0
      %v2266 = vadd.f32 0.0, %v2265
      %v2267 = vpop.f32.mrb[0].mxu0
      %v2268 = vpop.f32.mrb[0].mxu0
      %v2269 = vadd.f32 0.0, %v2268
      %v2270 = vpop.f32.mrb[0].mxu0
      %2271 = vmatprep.mubr.bf16.mxu0 0
      %2272 = vmatmul.mubr.bf16.gmra.mrb[0].mxu0 %v1933
      %v2273 = vpop.f32.mrb[0].mxu0
      %v2274 = vadd.f32 0.0, %v2273
      %v2275 = vpop.f32.mrb[0].mxu0
      %v2276 = vpop.f32.mrb[0].mxu0
      %v2277 = vadd.f32 0.0, %v2276
      %v2278 = vpop.f32.mrb[0].mxu0
      %2279 = vmatprep.mubr.bf16.mxu0 0
      %2280 = vmatmul.mubr.bf16.gmra.mrb[0].mxu0 %v1936
      %v2281 = vpop.f32.mrb[0].mxu0
      %v2282 = vadd.f32 0.0, %v2281
      %v2283 = vpop.f32.mrb[0].mxu0
      %v2284 = vpop.f32.mrb[0].mxu0
      %v2285 = vadd.f32 0.0, %v2284
      %v2286 = vpop.f32.mrb[0].mxu0
      %2287 = vmatprep.mubr.bf16.mxu0 0
      %2288 = vmatmul.mubr.bf16.gmra.mrb[0].mxu0 %v1939
      %v2289 = vpop.f32.mrb[0].mxu0
      %v2290 = vadd.f32 0.0, %v2289
      %v2291 = vpop.f32.mrb[0].mxu0
      %v2292 = vpop.f32.mrb[0].mxu0
      %v2293 = vadd.f32 0.0, %v2292
      %v2294 = vpop.f32.mrb[0].mxu0
      %2295 = vmatprep.mubr.bf16.mxu0 0
      %2296 = vmatmul.mubr.bf16.gmra.mrb[0].mxu0 %v1942
      %v2297 = vpop.f32.mrb[0].mxu0
      %v2298 = vadd.f32 0.0, %v2297
      %v2299 = vpop.f32.mrb[0].mxu0
      %v2300 = vpop.f32.mrb[0].mxu0
      %v2301 = vadd.f32 0.0, %v2300
      %v2302 = vpop.f32.mrb[0].mxu0
      %2303 = vmatprep.mubr.bf16.mxu0 0
      %2304 = vmatmul.mubr.bf16.gmra.mrb[0].mxu0 %v1945
      %v2305 = vpop.f32.mrb[0].mxu0
      %v2306 = vadd.f32 0.0, %v2305
      %v2307 = vpop.f32.mrb[0].mxu0
      %v2308 = vpop.f32.mrb[0].mxu0
      %v2309 = vadd.f32 0.0, %v2308
      %v2310 = vpop.f32.mrb[0].mxu0
      %2311 = vmatprep.mubr.bf16.mxu0 0
      %2312 = vmatmul.mubr.bf16.gmra.mrb[0].mxu0 %v1948
      %v2313 = vpop.f32.mrb[0].mxu0
      %v2314 = vadd.f32 0.0, %v2313
      %v2315 = vpop.f32.mrb[0].mxu0
      %v2316 = vpop.f32.mrb[0].mxu0
      %v2317 = vadd.f32 0.0, %v2316
      %v2318 = vpop.f32.mrb[0].mxu0
      %2319 = vmatprep.mubr.bf16.mxu0 0
      %2320 = vmatmul.mubr.bf16.gmra.mrb[0].mxu0 %v1951
      %v2321 = vpop.f32.mrb[0].mxu0
      %v2322 = vadd.f32 0.0, %v2321
      %v2323 = vpop.f32.mrb[0].mxu0
      %v2324 = vpop.f32.mrb[0].mxu0
      %v2325 = vadd.f32 0.0, %v2324
      %v2326 = vpop.f32.mrb[0].mxu0
      %2327 = vmatprep.mubr.bf16.mxu0 0
      %2328 = vmatmul.mubr.bf16.gmra.mrb[0].mxu0 %v1954
      %v2329 = vpop.f32.mrb[0].mxu0
      %v2330 = vadd.f32 0.0, %v2329
      %v2331 = vpop.f32.mrb[0].mxu0
      %v2332 = vpop.f32.mrb[0].mxu0
      %v2333 = vadd.f32 0.0, %v2332
      %v2334 = vpop.f32.mrb[0].mxu0
      %2335 = vmatprep.mubr.bf16.mxu0 0
      %2336 = vmatmul.mubr.bf16.gmra.mrb[0].mxu0 %v1957
      %v2337 = vpop.f32.mrb[0].mxu0
      %v2338 = vadd.f32 0.0, %v2337
      %v2339 = vpop.f32.mrb[0].mxu0
      %v2340 = vpop.f32.mrb[0].mxu0
      %v2341 = vadd.f32 0.0, %v2340
      %v2342 = vpop.f32.mrb[0].mxu0
      %2343 = vmatprep.mubr.bf16.mxu0 0
      %2344 = vmatmul.mubr.bf16.gmra.mrb[0].mxu0 %v1960
      %v2345 = vpop.f32.mrb[0].mxu0
      %v2346 = vadd.f32 0.0, %v2345
      %v2347 = vpop.f32.mrb[0].mxu0
      %v2348 = vpop.f32.mrb[0].mxu0
      %v2349 = vadd.f32 0.0, %v2348
      %v2350 = vpop.f32.mrb[0].mxu0
      %2351 = vmatprep.mubr.bf16.mxu0 0
      %2352 = vmatmul.mubr.bf16.gmra.mrb[0].mxu0 %v1963
      %v2353 = vpop.f32.mrb[0].mxu0
      %v2354 = vadd.f32 0.0, %v2353
      %v2355 = vpop.f32.mrb[0].mxu0
      %v2356 = vpop.f32.mrb[0].mxu0
      %v2357 = vadd.f32 0.0, %v2356
      %v2358 = vpop.f32.mrb[0].mxu0
      %2359 = vmatprep.mubr.bf16.mxu0 0
      %2360 = vmatmul.mubr.bf16.gmra.mrb[0].mxu0 %v1966
      %v2361 = vpop.f32.mrb[0].mxu0
      %v2362 = vadd.f32 0.0, %v2361
      %v2363 = vpop.f32.mrb[0].mxu0
      %v2364 = vpop.f32.mrb[0].mxu0
      %v2365 = vadd.f32 0.0, %v2364
      %v2366 = vpop.f32.mrb[0].mxu0
      %2367 = vmatprep.mubr.bf16.mxu0 0
      %2368 = vmatmul.mubr.bf16.gmra.mrb[0].mxu0 %v2197
      %v2369 = vpop.f32.mrb[0].mxu0
      %v2370 = vadd.f32 0.0, %v2369
      %v2371 = vpop.f32.mrb[0].mxu0
      %v2372 = vpop.f32.mrb[0].mxu0
      %v2373 = vadd.f32 0.0, %v2372
      %v2374 = vpop.f32.mrb[0].mxu0
      %2375 = vdwg.mxu0
      %v2376 = vadd.f32 %v2145, %v2234
      %v2377 = vadd.f32 %v2146, %v2237
      %v2378 = vadd.f32 %v2147, %v2242
      %v2379 = vadd.f32 %v2148, %v2245
      %v2380 = vadd.f32 %v2149, %v2250
      %v2381 = vadd.f32 %v2150, %v2253
      %v2382 = vadd.f32 %v2151, %v2258
      %v2383 = vadd.f32 %v2152, %v2261
      %v2384 = vadd.f32 %v2153, %v2266
      %v2385 = vadd.f32 %v2154, %v2269
      %v2386 = vadd.f32 %v2155, %v2274
      %v2387 = vadd.f32 %v2156, %v2277
      %v2388 = vadd.f32 %v2157, %v2282
      %v2389 = vadd.f32 %v2158, %v2285
      %v2390 = vadd.f32 %v2159, %v2290
      %v2391 = vadd.f32 %v2160, %v2293
      %v2392 = vadd.f32 %v2161, %v2298
      %v2393 = vadd.f32 %v2162, %v2301
      %v2394 = vadd.f32 %v2163, %v2306
      %v2395 = vadd.f32 %v2164, %v2309
      %v2396 = vadd.f32 %v2165, %v2314
      %v2397 = vadd.f32 %v2166, %v2317
      %v2398 = vadd.f32 %v2167, %v2322
      %v2399 = vadd.f32 %v2168, %v2325
      %v2400 = vadd.f32 %v2169, %v2330
      %v2401 = vadd.f32 %v2170, %v2333
      %v2402 = vadd.f32 %v2171, %v2338
      %v2403 = vadd.f32 %v2172, %v2341
      %v2404 = vadd.f32 %v2173, %v2346
      %v2405 = vadd.f32 %v2174, %v2349
      %v2406 = vadd.f32 %v2175, %v2354
      %v2407 = vadd.f32 %v2176, %v2357
      %v2408 = vadd.f32 %v2177, %v2362
      %v2409 = vadd.f32 %v2178, %v2365
      %v2410 = vadd.f32 %v2179, %v2370
      %v2411 = vadd.f32 %v2180, %v2373
      %vm2412 = vsmask.f32 6400
      %v2413 = vrot.slane %v1240, 1
      %v2414 = vrot.slane %v1236, 2
      %v2415 = vor.u32 %v2413, %v2414
      %v2416 = vrot.slane %v1248, 1
      %v2417 = vrot.slane %v1244, 2
      %v2418 = vor.u32 %v2416, %v2417
      %v2419 = vsel %vm2412, %v2415, %v2418
      %v2420 = vrot.slane %v1256, 1
      %v2421 = vrot.slane %v1252, 2
      %v2422 = vor.u32 %v2420, %v2421
      %v2423 = vsel %vm2412, %v2418, %v2422
      %v2424 = vrot.slane %v1264, 1
      %v2425 = vrot.slane %v1260, 2
      %v2426 = vor.u32 %v2424, %v2425
      %v2427 = vsel %vm2412, %v2422, %v2426
      %v2428 = vrot.slane %v1272, 1
      %v2429 = vrot.slane %v1268, 2
      %v2430 = vor.u32 %v2428, %v2429
      %v2431 = vsel %vm2412, %v2426, %v2430
      %v2432 = vrot.slane %v1280, 1
      %v2433 = vrot.slane %v1276, 2
      %v2434 = vor.u32 %v2432, %v2433
      %v2435 = vsel %vm2412, %v2430, %v2434
      %v2436 = vrot.slane %v1288, 1
      %v2437 = vrot.slane %v1284, 2
      %v2438 = vor.u32 %v2436, %v2437
      %v2439 = vsel %vm2412, %v2434, %v2438
      %v2440 = vrot.slane %v1296, 1
      %v2441 = vrot.slane %v1292, 2
      %v2442 = vor.u32 %v2440, %v2441
      %v2443 = vsel %vm2412, %v2438, %v2442
      %v2444 = vrot.slane %v1304, 1
      %v2445 = vrot.slane %v1300, 2
      %v2446 = vor.u32 %v2444, %v2445
      %v2447 = vsel %vm2412, %v2442, %v2446
      %v2448 = vrot.slane %v1312, 1
      %v2449 = vrot.slane %v1308, 2
      %v2450 = vor.u32 %v2448, %v2449
      %v2451 = vsel %vm2412, %v2446, %v2450
      %v2452 = vrot.slane %v1320, 1
      %v2453 = vrot.slane %v1316, 2
      %v2454 = vor.u32 %v2452, %v2453
      %v2455 = vsel %vm2412, %v2450, %v2454
      %v2456 = vrot.slane %v1328, 1
      %v2457 = vrot.slane %v1324, 2
      %v2458 = vor.u32 %v2456, %v2457
      %v2459 = vsel %vm2412, %v2454, %v2458
      %v2460 = vrot.slane %v1336, 1
      %v2461 = vrot.slane %v1332, 2
      %v2462 = vor.u32 %v2460, %v2461
      %v2463 = vsel %vm2412, %v2458, %v2462
      %v2464 = vrot.slane %v1344, 1
      %v2465 = vrot.slane %v1340, 2
      %v2466 = vor.u32 %v2464, %v2465
      %v2467 = vsel %vm2412, %v2462, %v2466
      %v2468 = vrot.slane %v1352, 1
      %v2469 = vrot.slane %v1348, 2
      %v2470 = vor.u32 %v2468, %v2469
      %v2471 = vsel %vm2412, %v2466, %v2470
      %v2472 = vrot.slane %v1360, 1
      %v2473 = vrot.slane %v1356, 2
      %v2474 = vor.u32 %v2472, %v2473
      %v2475 = vsel %vm2412, %v2470, %v2474
      %v2476 = vrot.slane %v1368, 1
      %v2477 = vrot.slane %v1364, 2
      %v2478 = vor.u32 %v2476, %v2477
      %v2479 = vsel %vm2412, %v2474, %v2478
      %v2480 = vshrl.u32 %v1188, 16
      %v2482 = vrot.slane %v2480, 1
      %v2483 = vrot.slane %v1372, 2
      %v2484 = vor.u32 %v2482, %v2483
      %v2485 = vsel %vm2412, %v2478, %v2484
      %v2487 = vshrl.u32 %v1189, 16
      %v2489 = vrot.slane %v2487, 1
      %v2490 = vshll.u32 %v1189, 16
      %v2492 = vrot.slane %v2490, 2
      %v2493 = vor.u32 %v2489, %v2492
      %v2494 = vsel %vm2412, %v2484, %v2493
      %v2499 = vunpack.c.l.b16 %v1207
      %v2500 = vunpack.c.l.b16 %v1208
      %v2501 = vunpack.c.l.b16 %v1209
      %v2502 = vunpack.c.l.b16 %v1210
      %v2503 = vpack.c.b16 %v2500, %v2499
      %v2504 = vpack.c.b16 %v2502, %v2501
      %v2508 = vsel %vm1388, %v2419, 0
      %v2511 = vsel %vm1388, %v2423, 0
      %v2514 = vsel %vm1388, %v2427, 0
      %v2517 = vsel %vm1388, %v2431, 0
      %v2520 = vsel %vm1388, %v2435, 0
      %v2523 = vsel %vm1388, %v2439, 0
      %v2526 = vsel %vm1388, %v2443, 0
      %v2529 = vsel %vm1388, %v2447, 0
      %v2532 = vsel %vm1388, %v2451, 0
      %v2535 = vsel %vm1388, %v2455, 0
      %v2538 = vsel %vm1388, %v2459, 0
      %v2541 = vsel %vm1388, %v2463, 0
      %v2544 = vsel %vm1388, %v2467, 0
      %v2547 = vsel %vm1388, %v2471, 0
      %v2550 = vsel %vm1388, %v2475, 0
      %v2553 = vsel %vm1388, %v2479, 0
      %v2556 = vsel %vm1388, %v2485, 0
      %v2559 = vsel %vm1388, %v2494, 0
      %2561 = vmatprep.subr.bf16.mxu0 0
      %2562 = vmatpush1.bf16.msra.mxu0 %v2503
      %2563 = vmatprep.subr.bf16.mxu0 0
      %2564 = vmatpush1.bf16.msra.mxu0 %v2504
      %2565 = vmatprep.subr.bf16.mxu0 0
      %2566 = vmatpush1.bf16.msra.mxu0 0
      %2567 = vmatprep.subr.bf16.mxu0 0
      %2568 = vmatpush1.bf16.msra.mxu0 0
      %2569 = vmatprep.subr.bf16.mxu0 0
      %2570 = vmatpush1.bf16.msra.mxu0 0
      %2571 = vmatprep.subr.bf16.mxu0 0
      %2572 = vmatpush1.bf16.msra.mxu0 0
      %2573 = vmatprep.subr.bf16.mxu0 0
      %2574 = vmatpush1.bf16.msra.mxu0 0
      %2575 = vmatprep.subr.bf16.mxu0 0
      %2576 = vmatpush1.bf16.msra.mxu0 0
      %2577 = vmatprep.subr.bf16.mxu0 0
      %2578 = vmatpush1.bf16.msra.mxu0 0
      %2579 = vmatprep.subr.bf16.mxu0 0
      %2580 = vmatpush1.bf16.msra.mxu0 0
      %2581 = vmatprep.subr.bf16.mxu0 0
      %2582 = vmatpush1.bf16.msra.mxu0 0
      %2583 = vmatprep.subr.bf16.mxu0 0
      %2584 = vmatpush1.bf16.msra.mxu0 0
      %2585 = vmatprep.subr.bf16.mxu0 0
      %2586 = vmatpush1.bf16.msra.mxu0 0
      %2587 = vmatprep.subr.bf16.mxu0 0
      %2588 = vmatpush1.bf16.msra.mxu0 0
      %2589 = vmatprep.subr.bf16.mxu0 0
      %2590 = vmatpush1.bf16.msra.mxu0 0
      %2591 = vmatprep.subr.bf16.mxu0 0
      %2592 = vmatpush1.bf16.msra.mxu0 0
      %2593 = vmatprep.mubr.bf16.mxu0 0
      %2594 = vmatmul.mubr.bf16.gmra.mrb[0].mxu0 %v2508
      %v2595 = vpop.f32.mrb[0].mxu0
      %v2596 = vadd.f32 0.0, %v2595
      %v2597 = vpop.f32.mrb[0].mxu0
      %v2598 = vpop.f32.mrb[0].mxu0
      %v2599 = vadd.f32 0.0, %v2598
      %v2600 = vpop.f32.mrb[0].mxu0
      %2601 = vmatprep.mubr.bf16.mxu0 0
      %2602 = vmatmul.mubr.bf16.gmra.mrb[0].mxu0 %v2511
      %v2603 = vpop.f32.mrb[0].mxu0
      %v2604 = vadd.f32 0.0, %v2603
      %v2605 = vpop.f32.mrb[0].mxu0
      %v2606 = vpop.f32.mrb[0].mxu0
      %v2607 = vadd.f32 0.0, %v2606
      %v2608 = vpop.f32.mrb[0].mxu0
      %2609 = vmatprep.mubr.bf16.mxu0 0
      %2610 = vmatmul.mubr.bf16.gmra.mrb[0].mxu0 %v2514
      %v2611 = vpop.f32.mrb[0].mxu0
      %v2612 = vadd.f32 0.0, %v2611
      %v2613 = vpop.f32.mrb[0].mxu0
      %v2614 = vpop.f32.mrb[0].mxu0
      %v2615 = vadd.f32 0.0, %v2614
      %v2616 = vpop.f32.mrb[0].mxu0
      %2617 = vmatprep.mubr.bf16.mxu0 0
      %2618 = vmatmul.mubr.bf16.gmra.mrb[0].mxu0 %v2517
      %v2619 = vpop.f32.mrb[0].mxu0
      %v2620 = vadd.f32 0.0, %v2619
      %v2621 = vpop.f32.mrb[0].mxu0
      %v2622 = vpop.f32.mrb[0].mxu0
      %v2623 = vadd.f32 0.0, %v2622
      %v2624 = vpop.f32.mrb[0].mxu0
      %2625 = vmatprep.mubr.bf16.mxu0 0
      %2626 = vmatmul.mubr.bf16.gmra.mrb[0].mxu0 %v2520
      %v2627 = vpop.f32.mrb[0].mxu0
      %v2628 = vadd.f32 0.0, %v2627
      %v2629 = vpop.f32.mrb[0].mxu0
      %v2630 = vpop.f32.mrb[0].mxu0
      %v2631 = vadd.f32 0.0, %v2630
      %v2632 = vpop.f32.mrb[0].mxu0
      %2633 = vmatprep.mubr.bf16.mxu0 0
      %2634 = vmatmul.mubr.bf16.gmra.mrb[0].mxu0 %v2523
      %v2635 = vpop.f32.mrb[0].mxu0
      %v2636 = vadd.f32 0.0, %v2635
      %v2637 = vpop.f32.mrb[0].mxu0
      %v2638 = vpop.f32.mrb[0].mxu0
      %v2639 = vadd.f32 0.0, %v2638
      %v2640 = vpop.f32.mrb[0].mxu0
      %2641 = vmatprep.mubr.bf16.mxu0 0
      %2642 = vmatmul.mubr.bf16.gmra.mrb[0].mxu0 %v2526
      %v2643 = vpop.f32.mrb[0].mxu0
      %v2644 = vadd.f32 0.0, %v2643
      %v2645 = vpop.f32.mrb[0].mxu0
      %v2646 = vpop.f32.mrb[0].mxu0
      %v2647 = vadd.f32 0.0, %v2646
      %v2648 = vpop.f32.mrb[0].mxu0
      %2649 = vmatprep.mubr.bf16.mxu0 0
      %2650 = vmatmul.mubr.bf16.gmra.mrb[0].mxu0 %v2529
      %v2651 = vpop.f32.mrb[0].mxu0
      %v2652 = vadd.f32 0.0, %v2651
      %v2653 = vpop.f32.mrb[0].mxu0
      %v2654 = vpop.f32.mrb[0].mxu0
      %v2655 = vadd.f32 0.0, %v2654
      %v2656 = vpop.f32.mrb[0].mxu0
      %2657 = vmatprep.mubr.bf16.mxu0 0
      %2658 = vmatmul.mubr.bf16.gmra.mrb[0].mxu0 %v2532
      %v2659 = vpop.f32.mrb[0].mxu0
      %v2660 = vadd.f32 0.0, %v2659
      %v2661 = vpop.f32.mrb[0].mxu0
      %v2662 = vpop.f32.mrb[0].mxu0
      %v2663 = vadd.f32 0.0, %v2662
      %v2664 = vpop.f32.mrb[0].mxu0
      %2665 = vmatprep.mubr.bf16.mxu0 0
      %2666 = vmatmul.mubr.bf16.gmra.mrb[0].mxu0 %v2535
      %v2667 = vpop.f32.mrb[0].mxu0
      %v2668 = vadd.f32 0.0, %v2667
      %v2669 = vpop.f32.mrb[0].mxu0
      %v2670 = vpop.f32.mrb[0].mxu0
      %v2671 = vadd.f32 0.0, %v2670
      %v2672 = vpop.f32.mrb[0].mxu0
      %2673 = vmatprep.mubr.bf16.mxu0 0
      %2674 = vmatmul.mubr.bf16.gmra.mrb[0].mxu0 %v2538
      %v2675 = vpop.f32.mrb[0].mxu0
      %v2676 = vadd.f32 0.0, %v2675
      %v2677 = vpop.f32.mrb[0].mxu0
      %v2678 = vpop.f32.mrb[0].mxu0
      %v2679 = vadd.f32 0.0, %v2678
      %v2680 = vpop.f32.mrb[0].mxu0
      %2681 = vmatprep.mubr.bf16.mxu0 0
      %2682 = vmatmul.mubr.bf16.gmra.mrb[0].mxu0 %v2541
      %v2683 = vpop.f32.mrb[0].mxu0
      %v2684 = vadd.f32 0.0, %v2683
      %v2685 = vpop.f32.mrb[0].mxu0
      %v2686 = vpop.f32.mrb[0].mxu0
      %v2687 = vadd.f32 0.0, %v2686
      %v2688 = vpop.f32.mrb[0].mxu0
      %2689 = vmatprep.mubr.bf16.mxu0 0
      %2690 = vmatmul.mubr.bf16.gmra.mrb[0].mxu0 %v2544
      %v2691 = vpop.f32.mrb[0].mxu0
      %v2692 = vadd.f32 0.0, %v2691
      %v2693 = vpop.f32.mrb[0].mxu0
      %v2694 = vpop.f32.mrb[0].mxu0
      %v2695 = vadd.f32 0.0, %v2694
      %v2696 = vpop.f32.mrb[0].mxu0
      %2697 = vmatprep.mubr.bf16.mxu0 0
      %2698 = vmatmul.mubr.bf16.gmra.mrb[0].mxu0 %v2547
      %v2699 = vpop.f32.mrb[0].mxu0
      %v2700 = vadd.f32 0.0, %v2699
      %v2701 = vpop.f32.mrb[0].mxu0
      %v2702 = vpop.f32.mrb[0].mxu0
      %v2703 = vadd.f32 0.0, %v2702
      %v2704 = vpop.f32.mrb[0].mxu0
      %2705 = vmatprep.mubr.bf16.mxu0 0
      %2706 = vmatmul.mubr.bf16.gmra.mrb[0].mxu0 %v2550
      %v2707 = vpop.f32.mrb[0].mxu0
      %v2708 = vadd.f32 0.0, %v2707
      %v2709 = vpop.f32.mrb[0].mxu0
      %v2710 = vpop.f32.mrb[0].mxu0
      %v2711 = vadd.f32 0.0, %v2710
      %v2712 = vpop.f32.mrb[0].mxu0
      %2713 = vmatprep.mubr.bf16.mxu0 0
      %2714 = vmatmul.mubr.bf16.gmra.mrb[0].mxu0 %v2553
      %v2715 = vpop.f32.mrb[0].mxu0
      %v2716 = vadd.f32 0.0, %v2715
      %v2717 = vpop.f32.mrb[0].mxu0
      %v2718 = vpop.f32.mrb[0].mxu0
      %v2719 = vadd.f32 0.0, %v2718
      %v2720 = vpop.f32.mrb[0].mxu0
      %2721 = vmatprep.mubr.bf16.mxu0 0
      %2722 = vmatmul.mubr.bf16.gmra.mrb[0].mxu0 %v2556
      %v2723 = vpop.f32.mrb[0].mxu0
      %v2724 = vadd.f32 0.0, %v2723
      %v2725 = vpop.f32.mrb[0].mxu0
      %v2726 = vpop.f32.mrb[0].mxu0
      %v2727 = vadd.f32 0.0, %v2726
      %v2728 = vpop.f32.mrb[0].mxu0
      %2729 = vmatprep.mubr.bf16.mxu0 0
      %2730 = vmatmul.mubr.bf16.gmra.mrb[0].mxu0 %v2559
      %v2731 = vpop.f32.mrb[0].mxu0
      %v2732 = vadd.f32 0.0, %v2731
      %v2733 = vpop.f32.mrb[0].mxu0
      %v2734 = vpop.f32.mrb[0].mxu0
      %v2735 = vadd.f32 0.0, %v2734
      %v2736 = vpop.f32.mrb[0].mxu0
      %2737 = vdwg.mxu0
      %v2738 = vadd.f32 %v2376, %v2596
      %v2739 = vadd.f32 %v2377, %v2599
      %v2740 = vadd.f32 %v2378, %v2604
      %v2741 = vadd.f32 %v2379, %v2607
      %v2742 = vadd.f32 %v2380, %v2612
      %v2743 = vadd.f32 %v2381, %v2615
      %v2744 = vadd.f32 %v2382, %v2620
      %v2745 = vadd.f32 %v2383, %v2623
      %v2746 = vadd.f32 %v2384, %v2628
      %v2747 = vadd.f32 %v2385, %v2631
      %v2748 = vadd.f32 %v2386, %v2636
      %v2749 = vadd.f32 %v2387, %v2639
      %v2750 = vadd.f32 %v2388, %v2644
      %v2751 = vadd.f32 %v2389, %v2647
      %v2752 = vadd.f32 %v2390, %v2652
      %v2753 = vadd.f32 %v2391, %v2655
      %v2754 = vadd.f32 %v2392, %v2660
      %v2755 = vadd.f32 %v2393, %v2663
      %v2756 = vadd.f32 %v2394, %v2668
      %v2757 = vadd.f32 %v2395, %v2671
      %v2758 = vadd.f32 %v2396, %v2676
      %v2759 = vadd.f32 %v2397, %v2679
      %v2760 = vadd.f32 %v2398, %v2684
      %v2761 = vadd.f32 %v2399, %v2687
      %v2762 = vadd.f32 %v2400, %v2692
      %v2763 = vadd.f32 %v2401, %v2695
      %v2764 = vadd.f32 %v2402, %v2700
      %v2765 = vadd.f32 %v2403, %v2703
      %v2766 = vadd.f32 %v2404, %v2708
      %v2767 = vadd.f32 %v2405, %v2711
      %v2768 = vadd.f32 %v2406, %v2716
      %v2769 = vadd.f32 %v2407, %v2719
      %v2770 = vadd.f32 %v2408, %v2724
      %v2771 = vadd.f32 %v2409, %v2727
      %v2772 = vadd.f32 %v2410, %v2732
      %v2773 = vadd.f32 %v2411, %v2735
      %vm2774 = vcmask 1045504
      %v2775 = vrot.slane %v1171, 2
      %v2776 = vrot.slane %v1172, 2
      %v2777 = vsel %vm2774, %v2775, %v2776
      %v2778 = vrot.slane %v1173, 2
      %v2779 = vsel %vm2774, %v2776, %v2778
      %v2780 = vrot.slane %v1174, 2
      %v2781 = vsel %vm2774, %v2778, %v2780
      %v2782 = vrot.slane %v1175, 2
      %v2783 = vsel %vm2774, %v2780, %v2782
      %v2784 = vrot.slane %v1176, 2
      %v2785 = vsel %vm2774, %v2782, %v2784
      %v2786 = vrot.slane %v1177, 2
      %v2787 = vsel %vm2774, %v2784, %v2786
      %v2788 = vrot.slane %v1178, 2
      %v2789 = vsel %vm2774, %v2786, %v2788
      %v2790 = vrot.slane %v1179, 2
      %v2791 = vsel %vm2774, %v2788, %v2790
      %v2792 = vrot.slane %v1180, 2
      %v2793 = vsel %vm2774, %v2790, %v2792
      %v2794 = vrot.slane %v1181, 2
      %v2795 = vsel %vm2774, %v2792, %v2794
      %v2796 = vrot.slane %v1182, 2
      %v2797 = vsel %vm2774, %v2794, %v2796
      %v2798 = vrot.slane %v1183, 2
      %v2799 = vsel %vm2774, %v2796, %v2798
      %v2800 = vrot.slane %v1184, 2
      %v2801 = vsel %vm2774, %v2798, %v2800
      %v2802 = vrot.slane %v1185, 2
      %v2803 = vsel %vm2774, %v2800, %v2802
      %v2804 = vrot.slane %v1186, 2
      %v2805 = vsel %vm2774, %v2802, %v2804
      %v2806 = vrot.slane %v1187, 2
      %v2807 = vsel %vm2774, %v2804, %v2806
      %v2808 = vrot.slane %v1188, 2
      %v2809 = vsel %vm2774, %v2806, %v2808
      %v2810 = vrot.slane %v1189, 2
      %v2811 = vsel %vm2774, %v2808, %v2810
      %v2816 = vunpack.c.l.b16 %v1211
      %v2817 = vunpack.c.l.b16 %v1212
      %v2818 = vunpack.c.l.b16 %v1213
      %v2819 = vunpack.c.l.b16 %v1214
      %v2820 = vpack.c.b16 %v2817, %v2816
      %v2821 = vpack.c.b16 %v2819, %v2818
      %v2825 = vsel %vm1388, %v2777, 0
      %v2828 = vsel %vm1388, %v2779, 0
      %v2831 = vsel %vm1388, %v2781, 0
      %v2834 = vsel %vm1388, %v2783, 0
      %v2837 = vsel %vm1388, %v2785, 0
      %v2840 = vsel %vm1388, %v2787, 0
      %v2843 = vsel %vm1388, %v2789, 0
      %v2846 = vsel %vm1388, %v2791, 0
      %v2849 = vsel %vm1388, %v2793, 0
      %v2852 = vsel %vm1388, %v2795, 0
      %v2855 = vsel %vm1388, %v2797, 0
      %v2858 = vsel %vm1388, %v2799, 0
      %v2861 = vsel %vm1388, %v2801, 0
      %v2864 = vsel %vm1388, %v2803, 0
      %v2867 = vsel %vm1388, %v2805, 0
      %v2870 = vsel %vm1388, %v2807, 0
      %v2873 = vsel %vm1388, %v2809, 0
      %v2876 = vsel %vm1388, %v2811, 0
      %2878 = vmatprep.subr.bf16.mxu0 0
      %2879 = vmatpush1.bf16.msra.mxu0 %v2820
      %2880 = vmatprep.subr.bf16.mxu0 0
      %2881 = vmatpush1.bf16.msra.mxu0 %v2821
      %2882 = vmatprep.subr.bf16.mxu0 0
      %2883 = vmatpush1.bf16.msra.mxu0 0
      %2884 = vmatprep.subr.bf16.mxu0 0
      %2885 = vmatpush1.bf16.msra.mxu0 0
      %2886 = vmatprep.subr.bf16.mxu0 0
      %2887 = vmatpush1.bf16.msra.mxu0 0
      %2888 = vmatprep.subr.bf16.mxu0 0
      %2889 = vmatpush1.bf16.msra.mxu0 0
      %2890 = vmatprep.subr.bf16.mxu0 0
      %2891 = vmatpush1.bf16.msra.mxu0 0
      %2892 = vmatprep.subr.bf16.mxu0 0
      %2893 = vmatpush1.bf16.msra.mxu0 0
      %2894 = vmatprep.subr.bf16.mxu0 0
      %2895 = vmatpush1.bf16.msra.mxu0 0
      %2896 = vmatprep.subr.bf16.mxu0 0
      %2897 = vmatpush1.bf16.msra.mxu0 0
      %2898 = vmatprep.subr.bf16.mxu0 0
      %2899 = vmatpush1.bf16.msra.mxu0 0
      %2900 = vmatprep.subr.bf16.mxu0 0
      %2901 = vmatpush1.bf16.msra.mxu0 0
      %2902 = vmatprep.subr.bf16.mxu0 0
      %2903 = vmatpush1.bf16.msra.mxu0 0
      %2904 = vmatprep.subr.bf16.mxu0 0
      %2905 = vmatpush1.bf16.msra.mxu0 0
      %2906 = vmatprep.subr.bf16.mxu0 0
      %2907 = vmatpush1.bf16.msra.mxu0 0
      %2908 = vmatprep.subr.bf16.mxu0 0
      %2909 = vmatpush1.bf16.msra.mxu0 0
      %2910 = vmatprep.mubr.bf16.mxu0 0
      %2911 = vmatmul.mubr.bf16.gmra.mrb[0].mxu0 %v2825
      %v2912 = vpop.f32.mrb[0].mxu0
      %v2913 = vadd.f32 0.0, %v2912
      %v2914 = vpop.f32.mrb[0].mxu0
      %v2915 = vpop.f32.mrb[0].mxu0
      %v2916 = vadd.f32 0.0, %v2915
      %v2917 = vpop.f32.mrb[0].mxu0
      %2918 = vmatprep.mubr.bf16.mxu0 0
      %2919 = vmatmul.mubr.bf16.gmra.mrb[0].mxu0 %v2828
      %v2920 = vpop.f32.mrb[0].mxu0
      %v2921 = vadd.f32 0.0, %v2920
      %v2922 = vpop.f32.mrb[0].mxu0
      %v2923 = vpop.f32.mrb[0].mxu0
      %v2924 = vadd.f32 0.0, %v2923
      %v2925 = vpop.f32.mrb[0].mxu0
      %2926 = vmatprep.mubr.bf16.mxu0 0
      %2927 = vmatmul.mubr.bf16.gmra.mrb[0].mxu0 %v2831
      %v2928 = vpop.f32.mrb[0].mxu0
      %v2929 = vadd.f32 0.0, %v2928
      %v2930 = vpop.f32.mrb[0].mxu0
      %v2931 = vpop.f32.mrb[0].mxu0
      %v2932 = vadd.f32 0.0, %v2931
      %v2933 = vpop.f32.mrb[0].mxu0
      %2934 = vmatprep.mubr.bf16.mxu0 0
      %2935 = vmatmul.mubr.bf16.gmra.mrb[0].mxu0 %v2834
      %v2936 = vpop.f32.mrb[0].mxu0
      %v2937 = vadd.f32 0.0, %v2936
      %v2938 = vpop.f32.mrb[0].mxu0
      %v2939 = vpop.f32.mrb[0].mxu0
      %v2940 = vadd.f32 0.0, %v2939
      %v2941 = vpop.f32.mrb[0].mxu0
      %2942 = vmatprep.mubr.bf16.mxu0 0
      %2943 = vmatmul.mubr.bf16.gmra.mrb[0].mxu0 %v2837
      %v2944 = vpop.f32.mrb[0].mxu0
      %v2945 = vadd.f32 0.0, %v2944
      %v2946 = vpop.f32.mrb[0].mxu0
      %v2947 = vpop.f32.mrb[0].mxu0
      %v2948 = vadd.f32 0.0, %v2947
      %v2949 = vpop.f32.mrb[0].mxu0
      %2950 = vmatprep.mubr.bf16.mxu0 0
      %2951 = vmatmul.mubr.bf16.gmra.mrb[0].mxu0 %v2840
      %v2952 = vpop.f32.mrb[0].mxu0
      %v2953 = vadd.f32 0.0, %v2952
      %v2954 = vpop.f32.mrb[0].mxu0
      %v2955 = vpop.f32.mrb[0].mxu0
      %v2956 = vadd.f32 0.0, %v2955
      %v2957 = vpop.f32.mrb[0].mxu0
      %2958 = vmatprep.mubr.bf16.mxu0 0
      %2959 = vmatmul.mubr.bf16.gmra.mrb[0].mxu0 %v2843
      %v2960 = vpop.f32.mrb[0].mxu0
      %v2961 = vadd.f32 0.0, %v2960
      %v2962 = vpop.f32.mrb[0].mxu0
      %v2963 = vpop.f32.mrb[0].mxu0
      %v2964 = vadd.f32 0.0, %v2963
      %v2965 = vpop.f32.mrb[0].mxu0
      %2966 = vmatprep.mubr.bf16.mxu0 0
      %2967 = vmatmul.mubr.bf16.gmra.mrb[0].mxu0 %v2846
      %v2968 = vpop.f32.mrb[0].mxu0
      %v2969 = vadd.f32 0.0, %v2968
      %v2970 = vpop.f32.mrb[0].mxu0
      %v2971 = vpop.f32.mrb[0].mxu0
      %v2972 = vadd.f32 0.0, %v2971
      %v2973 = vpop.f32.mrb[0].mxu0
      %2974 = vmatprep.mubr.bf16.mxu0 0
      %2975 = vmatmul.mubr.bf16.gmra.mrb[0].mxu0 %v2849
      %v2976 = vpop.f32.mrb[0].mxu0
      %v2977 = vadd.f32 0.0, %v2976
      %v2978 = vpop.f32.mrb[0].mxu0
      %v2979 = vpop.f32.mrb[0].mxu0
      %v2980 = vadd.f32 0.0, %v2979
      %v2981 = vpop.f32.mrb[0].mxu0
      %2982 = vmatprep.mubr.bf16.mxu0 0
      %2983 = vmatmul.mubr.bf16.gmra.mrb[0].mxu0 %v2852
      %v2984 = vpop.f32.mrb[0].mxu0
      %v2985 = vadd.f32 0.0, %v2984
      %v2986 = vpop.f32.mrb[0].mxu0
      %v2987 = vpop.f32.mrb[0].mxu0
      %v2988 = vadd.f32 0.0, %v2987
      %v2989 = vpop.f32.mrb[0].mxu0
      %2990 = vmatprep.mubr.bf16.mxu0 0
      %2991 = vmatmul.mubr.bf16.gmra.mrb[0].mxu0 %v2855
      %v2992 = vpop.f32.mrb[0].mxu0
      %v2993 = vadd.f32 0.0, %v2992
      %v2994 = vpop.f32.mrb[0].mxu0
      %v2995 = vpop.f32.mrb[0].mxu0
      %v2996 = vadd.f32 0.0, %v2995
      %v2997 = vpop.f32.mrb[0].mxu0
      %2998 = vmatprep.mubr.bf16.mxu0 0
      %2999 = vmatmul.mubr.bf16.gmra.mrb[0].mxu0 %v2858
      %v3000 = vpop.f32.mrb[0].mxu0
      %v3001 = vadd.f32 0.0, %v3000
      %v3002 = vpop.f32.mrb[0].mxu0
      %v3003 = vpop.f32.mrb[0].mxu0
      %v3004 = vadd.f32 0.0, %v3003
      %v3005 = vpop.f32.mrb[0].mxu0
      %3006 = vmatprep.mubr.bf16.mxu0 0
      %3007 = vmatmul.mubr.bf16.gmra.mrb[0].mxu0 %v2861
      %v3008 = vpop.f32.mrb[0].mxu0
      %v3009 = vadd.f32 0.0, %v3008
      %v3010 = vpop.f32.mrb[0].mxu0
      %v3011 = vpop.f32.mrb[0].mxu0
      %v3012 = vadd.f32 0.0, %v3011
      %v3013 = vpop.f32.mrb[0].mxu0
      %3014 = vmatprep.mubr.bf16.mxu0 0
      %3015 = vmatmul.mubr.bf16.gmra.mrb[0].mxu0 %v2864
      %v3016 = vpop.f32.mrb[0].mxu0
      %v3017 = vadd.f32 0.0, %v3016
      %v3018 = vpop.f32.mrb[0].mxu0
      %v3019 = vpop.f32.mrb[0].mxu0
      %v3020 = vadd.f32 0.0, %v3019
      %v3021 = vpop.f32.mrb[0].mxu0
      %3022 = vmatprep.mubr.bf16.mxu0 0
      %3023 = vmatmul.mubr.bf16.gmra.mrb[0].mxu0 %v2867
      %v3024 = vpop.f32.mrb[0].mxu0
      %v3025 = vadd.f32 0.0, %v3024
      %v3026 = vpop.f32.mrb[0].mxu0
      %v3027 = vpop.f32.mrb[0].mxu0
      %v3028 = vadd.f32 0.0, %v3027
      %v3029 = vpop.f32.mrb[0].mxu0
      %3030 = vmatprep.mubr.bf16.mxu0 0
      %3031 = vmatmul.mubr.bf16.gmra.mrb[0].mxu0 %v2870
      %v3032 = vpop.f32.mrb[0].mxu0
      %v3033 = vadd.f32 0.0, %v3032
      %v3034 = vpop.f32.mrb[0].mxu0
      %v3035 = vpop.f32.mrb[0].mxu0
      %v3036 = vadd.f32 0.0, %v3035
      %v3037 = vpop.f32.mrb[0].mxu0
      %3038 = vmatprep.mubr.bf16.mxu0 0
      %3039 = vmatmul.mubr.bf16.gmra.mrb[0].mxu0 %v2873
      %v3040 = vpop.f32.mrb[0].mxu0
      %v3041 = vadd.f32 0.0, %v3040
      %v3042 = vpop.f32.mrb[0].mxu0
      %v3043 = vpop.f32.mrb[0].mxu0
      %v3044 = vadd.f32 0.0, %v3043
      %v3045 = vpop.f32.mrb[0].mxu0
      %3046 = vmatprep.mubr.bf16.mxu0 0
      %3047 = vmatmul.mubr.bf16.gmra.mrb[0].mxu0 %v2876
      %v3048 = vpop.f32.mrb[0].mxu0
      %v3049 = vadd.f32 0.0, %v3048
      %v3050 = vpop.f32.mrb[0].mxu0
      %v3051 = vpop.f32.mrb[0].mxu0
      %v3052 = vadd.f32 0.0, %v3051
      %v3053 = vpop.f32.mrb[0].mxu0
      %3054 = vdwg.mxu0
      %v3055 = vadd.f32 %v2738, %v2913
      %v3056 = vadd.f32 %v2739, %v2916
      %v3057 = vadd.f32 %v2740, %v2921
      %v3058 = vadd.f32 %v2741, %v2924
      %v3059 = vadd.f32 %v2742, %v2929
      %v3060 = vadd.f32 %v2743, %v2932
      %v3061 = vadd.f32 %v2744, %v2937
      %v3062 = vadd.f32 %v2745, %v2940
      %v3063 = vadd.f32 %v2746, %v2945
      %v3064 = vadd.f32 %v2747, %v2948
      %v3065 = vadd.f32 %v2748, %v2953
      %v3066 = vadd.f32 %v2749, %v2956
      %v3067 = vadd.f32 %v2750, %v2961
      %v3068 = vadd.f32 %v2751, %v2964
      %v3069 = vadd.f32 %v2752, %v2969
      %v3070 = vadd.f32 %v2753, %v2972
      %v3071 = vadd.f32 %v2754, %v2977
      %v3072 = vadd.f32 %v2755, %v2980
      %v3073 = vadd.f32 %v2756, %v2985
      %v3074 = vadd.f32 %v2757, %v2988
      %v3075 = vadd.f32 %v2758, %v2993
      %v3076 = vadd.f32 %v2759, %v2996
      %v3077 = vadd.f32 %v2760, %v3001
      %v3078 = vadd.f32 %v2761, %v3004
      %v3079 = vadd.f32 %v2762, %v3009
      %v3080 = vadd.f32 %v2763, %v3012
      %v3081 = vadd.f32 %v2764, %v3017
      %v3082 = vadd.f32 %v2765, %v3020
      %v3083 = vadd.f32 %v2766, %v3025
      %v3084 = vadd.f32 %v2767, %v3028
      %v3085 = vadd.f32 %v2768, %v3033
      %v3086 = vadd.f32 %v2769, %v3036
      %v3087 = vadd.f32 %v2770, %v3041
      %v3088 = vadd.f32 %v2771, %v3044
      %v3089 = vadd.f32 %v2772, %v3049
      %v3090 = vadd.f32 %v2773, %v3052
      %v3092 = vrot.slane %v1190, 2
      %v3093 = vsel %vm2774, %v2810, %v3092
      %v3098 = vunpack.c.l.b16 %v1215
      %v3099 = vunpack.c.l.b16 %v1216
      %v3100 = vunpack.c.l.b16 %v1217
      %v3101 = vunpack.c.l.b16 %v1218
      %v3102 = vpack.c.b16 %v3099, %v3098
      %v3103 = vpack.c.b16 %v3101, %v3100
      %v3107 = vsel %vm1388, %v3093, 0
      %3109 = vmatprep.subr.bf16.mxu0 0
      %3110 = vmatpush1.bf16.msra.mxu0 %v3102
      %3111 = vmatprep.subr.bf16.mxu0 0
      %3112 = vmatpush1.bf16.msra.mxu0 %v3103
      %3113 = vmatprep.subr.bf16.mxu0 0
      %3114 = vmatpush1.bf16.msra.mxu0 0
      %3115 = vmatprep.subr.bf16.mxu0 0
      %3116 = vmatpush1.bf16.msra.mxu0 0
      %3117 = vmatprep.subr.bf16.mxu0 0
      %3118 = vmatpush1.bf16.msra.mxu0 0
      %3119 = vmatprep.subr.bf16.mxu0 0
      %3120 = vmatpush1.bf16.msra.mxu0 0
      %3121 = vmatprep.subr.bf16.mxu0 0
      %3122 = vmatpush1.bf16.msra.mxu0 0
      %3123 = vmatprep.subr.bf16.mxu0 0
      %3124 = vmatpush1.bf16.msra.mxu0 0
      %3125 = vmatprep.subr.bf16.mxu0 0
      %3126 = vmatpush1.bf16.msra.mxu0 0
      %3127 = vmatprep.subr.bf16.mxu0 0
      %3128 = vmatpush1.bf16.msra.mxu0 0
      %3129 = vmatprep.subr.bf16.mxu0 0
      %3130 = vmatpush1.bf16.msra.mxu0 0
      %3131 = vmatprep.subr.bf16.mxu0 0
      %3132 = vmatpush1.bf16.msra.mxu0 0
      %3133 = vmatprep.subr.bf16.mxu0 0
      %3134 = vmatpush1.bf16.msra.mxu0 0
      %3135 = vmatprep.subr.bf16.mxu0 0
      %3136 = vmatpush1.bf16.msra.mxu0 0
      %3137 = vmatprep.subr.bf16.mxu0 0
      %3138 = vmatpush1.bf16.msra.mxu0 0
      %3139 = vmatprep.subr.bf16.mxu0 0
      %3140 = vmatpush1.bf16.msra.mxu0 0
      %3141 = vmatprep.mubr.bf16.mxu0 0
      %3142 = vmatmul.mubr.bf16.gmra.mrb[0].mxu0 %v2828
      %v3143 = vpop.f32.mrb[0].mxu0
      %v3144 = vadd.f32 0.0, %v3143
      %v3145 = vpop.f32.mrb[0].mxu0
      %v3146 = vpop.f32.mrb[0].mxu0
      %v3147 = vadd.f32 0.0, %v3146
      %v3148 = vpop.f32.mrb[0].mxu0
      %3149 = vmatprep.mubr.bf16.mxu0 0
      %3150 = vmatmul.mubr.bf16.gmra.mrb[0].mxu0 %v2831
      %v3151 = vpop.f32.mrb[0].mxu0
      %v3152 = vadd.f32 0.0, %v3151
      %v3153 = vpop.f32.mrb[0].mxu0
      %v3154 = vpop.f32.mrb[0].mxu0
      %v3155 = vadd.f32 0.0, %v3154
      %v3156 = vpop.f32.mrb[0].mxu0
      %3157 = vmatprep.mubr.bf16.mxu0 0
      %3158 = vmatmul.mubr.bf16.gmra.mrb[0].mxu0 %v2834
      %v3159 = vpop.f32.mrb[0].mxu0
      %v3160 = vadd.f32 0.0, %v3159
      %v3161 = vpop.f32.mrb[0].mxu0
      %v3162 = vpop.f32.mrb[0].mxu0
      %v3163 = vadd.f32 0.0, %v3162
      %v3164 = vpop.f32.mrb[0].mxu0
      %3165 = vmatprep.mubr.bf16.mxu0 0
      %3166 = vmatmul.mubr.bf16.gmra.mrb[0].mxu0 %v2837
      %v3167 = vpop.f32.mrb[0].mxu0
      %v3168 = vadd.f32 0.0, %v3167
      %v3169 = vpop.f32.mrb[0].mxu0
      %v3170 = vpop.f32.mrb[0].mxu0
      %v3171 = vadd.f32 0.0, %v3170
      %v3172 = vpop.f32.mrb[0].mxu0
      %3173 = vmatprep.mubr.bf16.mxu0 0
      %3174 = vmatmul.mubr.bf16.gmra.mrb[0].mxu0 %v2840
      %v3175 = vpop.f32.mrb[0].mxu0
      %v3176 = vadd.f32 0.0, %v3175
      %v3177 = vpop.f32.mrb[0].mxu0
      %v3178 = vpop.f32.mrb[0].mxu0
      %v3179 = vadd.f32 0.0, %v3178
      %v3180 = vpop.f32.mrb[0].mxu0
      %3181 = vmatprep.mubr.bf16.mxu0 0
      %3182 = vmatmul.mubr.bf16.gmra.mrb[0].mxu0 %v2843
      %v3183 = vpop.f32.mrb[0].mxu0
      %v3184 = vadd.f32 0.0, %v3183
      %v3185 = vpop.f32.mrb[0].mxu0
      %v3186 = vpop.f32.mrb[0].mxu0
      %v3187 = vadd.f32 0.0, %v3186
      %v3188 = vpop.f32.mrb[0].mxu0
      %3189 = vmatprep.mubr.bf16.mxu0 0
      %3190 = vmatmul.mubr.bf16.gmra.mrb[0].mxu0 %v2846
      %v3191 = vpop.f32.mrb[0].mxu0
      %v3192 = vadd.f32 0.0, %v3191
      %v3193 = vpop.f32.mrb[0].mxu0
      %v3194 = vpop.f32.mrb[0].mxu0
      %v3195 = vadd.f32 0.0, %v3194
      %v3196 = vpop.f32.mrb[0].mxu0
      %3197 = vmatprep.mubr.bf16.mxu0 0
      %3198 = vmatmul.mubr.bf16.gmra.mrb[0].mxu0 %v2849
      %v3199 = vpop.f32.mrb[0].mxu0
      %v3200 = vadd.f32 0.0, %v3199
      %v3201 = vpop.f32.mrb[0].mxu0
      %v3202 = vpop.f32.mrb[0].mxu0
      %v3203 = vadd.f32 0.0, %v3202
      %v3204 = vpop.f32.mrb[0].mxu0
      %3205 = vmatprep.mubr.bf16.mxu0 0
      %3206 = vmatmul.mubr.bf16.gmra.mrb[0].mxu0 %v2852
      %v3207 = vpop.f32.mrb[0].mxu0
      %v3208 = vadd.f32 0.0, %v3207
      %v3209 = vpop.f32.mrb[0].mxu0
      %v3210 = vpop.f32.mrb[0].mxu0
      %v3211 = vadd.f32 0.0, %v3210
      %v3212 = vpop.f32.mrb[0].mxu0
      %3213 = vmatprep.mubr.bf16.mxu0 0
      %3214 = vmatmul.mubr.bf16.gmra.mrb[0].mxu0 %v2855
      %v3215 = vpop.f32.mrb[0].mxu0
      %v3216 = vadd.f32 0.0, %v3215
      %v3217 = vpop.f32.mrb[0].mxu0
      %v3218 = vpop.f32.mrb[0].mxu0
      %v3219 = vadd.f32 0.0, %v3218
      %v3220 = vpop.f32.mrb[0].mxu0
      %3221 = vmatprep.mubr.bf16.mxu0 0
      %3222 = vmatmul.mubr.bf16.gmra.mrb[0].mxu0 %v2858
      %v3223 = vpop.f32.mrb[0].mxu0
      %v3224 = vadd.f32 0.0, %v3223
      %v3225 = vpop.f32.mrb[0].mxu0
      %v3226 = vpop.f32.mrb[0].mxu0
      %v3227 = vadd.f32 0.0, %v3226
      %v3228 = vpop.f32.mrb[0].mxu0
      %3229 = vmatprep.mubr.bf16.mxu0 0
      %3230 = vmatmul.mubr.bf16.gmra.mrb[0].mxu0 %v2861
      %v3231 = vpop.f32.mrb[0].mxu0
      %v3232 = vadd.f32 0.0, %v3231
      %v3233 = vpop.f32.mrb[0].mxu0
      %v3234 = vpop.f32.mrb[0].mxu0
      %v3235 = vadd.f32 0.0, %v3234
      %v3236 = vpop.f32.mrb[0].mxu0
      %3237 = vmatprep.mubr.bf16.mxu0 0
      %3238 = vmatmul.mubr.bf16.gmra.mrb[0].mxu0 %v2864
      %v3239 = vpop.f32.mrb[0].mxu0
      %v3240 = vadd.f32 0.0, %v3239
      %v3241 = vpop.f32.mrb[0].mxu0
      %v3242 = vpop.f32.mrb[0].mxu0
      %v3243 = vadd.f32 0.0, %v3242
      %v3244 = vpop.f32.mrb[0].mxu0
      %3245 = vmatprep.mubr.bf16.mxu0 0
      %3246 = vmatmul.mubr.bf16.gmra.mrb[0].mxu0 %v2867
      %v3247 = vpop.f32.mrb[0].mxu0
      %v3248 = vadd.f32 0.0, %v3247
      %v3249 = vpop.f32.mrb[0].mxu0
      %v3250 = vpop.f32.mrb[0].mxu0
      %v3251 = vadd.f32 0.0, %v3250
      %v3252 = vpop.f32.mrb[0].mxu0
      %3253 = vmatprep.mubr.bf16.mxu0 0
      %3254 = vmatmul.mubr.bf16.gmra.mrb[0].mxu0 %v2870
      %v3255 = vpop.f32.mrb[0].mxu0
      %v3256 = vadd.f32 0.0, %v3255
      %v3257 = vpop.f32.mrb[0].mxu0
      %v3258 = vpop.f32.mrb[0].mxu0
      %v3259 = vadd.f32 0.0, %v3258
      %v3260 = vpop.f32.mrb[0].mxu0
      %3261 = vmatprep.mubr.bf16.mxu0 0
      %3262 = vmatmul.mubr.bf16.gmra.mrb[0].mxu0 %v2873
      %v3263 = vpop.f32.mrb[0].mxu0
      %v3264 = vadd.f32 0.0, %v3263
      %v3265 = vpop.f32.mrb[0].mxu0
      %v3266 = vpop.f32.mrb[0].mxu0
      %v3267 = vadd.f32 0.0, %v3266
      %v3268 = vpop.f32.mrb[0].mxu0
      %3269 = vmatprep.mubr.bf16.mxu0 0
      %3270 = vmatmul.mubr.bf16.gmra.mrb[0].mxu0 %v2876
      %v3271 = vpop.f32.mrb[0].mxu0
      %v3272 = vadd.f32 0.0, %v3271
      %v3273 = vpop.f32.mrb[0].mxu0
      %v3274 = vpop.f32.mrb[0].mxu0
      %v3275 = vadd.f32 0.0, %v3274
      %v3276 = vpop.f32.mrb[0].mxu0
      %3277 = vmatprep.mubr.bf16.mxu0 0
      %3278 = vmatmul.mubr.bf16.gmra.mrb[0].mxu0 %v3107
      %v3279 = vpop.f32.mrb[0].mxu0
      %v3280 = vadd.f32 0.0, %v3279
      %v3281 = vpop.f32.mrb[0].mxu0
      %v3282 = vpop.f32.mrb[0].mxu0
      %v3283 = vadd.f32 0.0, %v3282
      %v3284 = vpop.f32.mrb[0].mxu0
      %3285 = vdwg.mxu0
      %v3286 = vadd.f32 %v3055, %v3144
      %v3287 = vadd.f32 %v3056, %v3147
      %v3288 = vadd.f32 %v3057, %v3152
      %v3289 = vadd.f32 %v3058, %v3155
      %v3290 = vadd.f32 %v3059, %v3160
      %v3291 = vadd.f32 %v3060, %v3163
      %v3292 = vadd.f32 %v3061, %v3168
      %v3293 = vadd.f32 %v3062, %v3171
      %v3294 = vadd.f32 %v3063, %v3176
      %v3295 = vadd.f32 %v3064, %v3179
      %v3296 = vadd.f32 %v3065, %v3184
      %v3297 = vadd.f32 %v3066, %v3187
      %v3298 = vadd.f32 %v3067, %v3192
      %v3299 = vadd.f32 %v3068, %v3195
      %v3300 = vadd.f32 %v3069, %v3200
      %v3301 = vadd.f32 %v3070, %v3203
      %v3302 = vadd.f32 %v3071, %v3208
      %v3303 = vadd.f32 %v3072, %v3211
      %v3304 = vadd.f32 %v3073, %v3216
      %v3305 = vadd.f32 %v3074, %v3219
      %v3306 = vadd.f32 %v3075, %v3224
      %v3307 = vadd.f32 %v3076, %v3227
      %v3308 = vadd.f32 %v3077, %v3232
      %v3309 = vadd.f32 %v3078, %v3235
      %v3310 = vadd.f32 %v3079, %v3240
      %v3311 = vadd.f32 %v3080, %v3243
      %v3312 = vadd.f32 %v3081, %v3248
      %v3313 = vadd.f32 %v3082, %v3251
      %v3314 = vadd.f32 %v3083, %v3256
      %v3315 = vadd.f32 %v3084, %v3259
      %v3316 = vadd.f32 %v3085, %v3264
      %v3317 = vadd.f32 %v3086, %v3267
      %v3318 = vadd.f32 %v3087, %v3272
      %v3319 = vadd.f32 %v3088, %v3275
      %v3320 = vadd.f32 %v3089, %v3280
      %v3321 = vadd.f32 %v3090, %v3283
      %vm3322 = vsmask.f32 5376
      %v3323 = vrot.slane %v1248, 2
      %v3324 = vrot.slane %v1244, 3
      %v3325 = vor.u32 %v3323, %v3324
      %v3326 = vrot.slane %v1256, 2
      %v3327 = vrot.slane %v1252, 3
      %v3328 = vor.u32 %v3326, %v3327
      %v3329 = vsel %vm3322, %v3325, %v3328
      %v3330 = vrot.slane %v1264, 2
      %v3331 = vrot.slane %v1260, 3
      %v3332 = vor.u32 %v3330, %v3331
      %v3333 = vsel %vm3322, %v3328, %v3332
      %v3334 = vrot.slane %v1272, 2
      %v3335 = vrot.slane %v1268, 3
      %v3336 = vor.u32 %v3334, %v3335
      %v3337 = vsel %vm3322, %v3332, %v3336
      %v3338 = vrot.slane %v1280, 2
      %v3339 = vrot.slane %v1276, 3
      %v3340 = vor.u32 %v3338, %v3339
      %v3341 = vsel %vm3322, %v3336, %v3340
      %v3342 = vrot.slane %v1288, 2
      %v3343 = vrot.slane %v1284, 3
      %v3344 = vor.u32 %v3342, %v3343
      %v3345 = vsel %vm3322, %v3340, %v3344
      %v3346 = vrot.slane %v1296, 2
      %v3347 = vrot.slane %v1292, 3
      %v3348 = vor.u32 %v3346, %v3347
      %v3349 = vsel %vm3322, %v3344, %v3348
      %v3350 = vrot.slane %v1304, 2
      %v3351 = vrot.slane %v1300, 3
      %v3352 = vor.u32 %v3350, %v3351
      %v3353 = vsel %vm3322, %v3348, %v3352
      %v3354 = vrot.slane %v1312, 2
      %v3355 = vrot.slane %v1308, 3
      %v3356 = vor.u32 %v3354, %v3355
      %v3357 = vsel %vm3322, %v3352, %v3356
      %v3358 = vrot.slane %v1320, 2
      %v3359 = vrot.slane %v1316, 3
      %v3360 = vor.u32 %v3358, %v3359
      %v3361 = vsel %vm3322, %v3356, %v3360
      %v3362 = vrot.slane %v1328, 2
      %v3363 = vrot.slane %v1324, 3
      %v3364 = vor.u32 %v3362, %v3363
      %v3365 = vsel %vm3322, %v3360, %v3364
      %v3366 = vrot.slane %v1336, 2
      %v3367 = vrot.slane %v1332, 3
      %v3368 = vor.u32 %v3366, %v3367
      %v3369 = vsel %vm3322, %v3364, %v3368
      %v3370 = vrot.slane %v1344, 2
      %v3371 = vrot.slane %v1340, 3
      %v3372 = vor.u32 %v3370, %v3371
      %v3373 = vsel %vm3322, %v3368, %v3372
      %v3374 = vrot.slane %v1352, 2
      %v3375 = vrot.slane %v1348, 3
      %v3376 = vor.u32 %v3374, %v3375
      %v3377 = vsel %vm3322, %v3372, %v3376
      %v3378 = vrot.slane %v1360, 2
      %v3379 = vrot.slane %v1356, 3
      %v3380 = vor.u32 %v3378, %v3379
      %v3381 = vsel %vm3322, %v3376, %v3380
      %v3382 = vrot.slane %v1368, 2
      %v3383 = vrot.slane %v1364, 3
      %v3384 = vor.u32 %v3382, %v3383
      %v3385 = vsel %vm3322, %v3380, %v3384
      %v3386 = vrot.slane %v2480, 2
      %v3387 = vrot.slane %v1372, 3
      %v3388 = vor.u32 %v3386, %v3387
      %v3389 = vsel %vm3322, %v3384, %v3388
      %v3390 = vrot.slane %v2487, 2
      %v3391 = vrot.slane %v2490, 3
      %v3392 = vor.u32 %v3390, %v3391
      %v3393 = vsel %vm3322, %v3388, %v3392
      %v3395 = vshrl.u32 %v1190, 16
      %v3397 = vrot.slane %v3395, 2
      %v3398 = vshll.u32 %v1190, 16
      %v3400 = vrot.slane %v3398, 3
      %v3401 = vor.u32 %v3397, %v3400
      %v3402 = vsel %vm3322, %v3392, %v3401
      %v3407 = vunpack.c.l.b16 %v1219
      %v3408 = vunpack.c.l.b16 %v1220
      %v3409 = vunpack.c.l.b16 %v1221
      %v3410 = vunpack.c.l.b16 %v1222
      %v3411 = vpack.c.b16 %v3408, %v3407
      %v3412 = vpack.c.b16 %v3410, %v3409
      %v3416 = vsel %vm1388, %v3329, 0
      %v3419 = vsel %vm1388, %v3333, 0
      %v3422 = vsel %vm1388, %v3337, 0
      %v3425 = vsel %vm1388, %v3341, 0
      %v3428 = vsel %vm1388, %v3345, 0
      %v3431 = vsel %vm1388, %v3349, 0
      %v3434 = vsel %vm1388, %v3353, 0
      %v3437 = vsel %vm1388, %v3357, 0
      %v3440 = vsel %vm1388, %v3361, 0
      %v3443 = vsel %vm1388, %v3365, 0
      %v3446 = vsel %vm1388, %v3369, 0
      %v3449 = vsel %vm1388, %v3373, 0
      %v3452 = vsel %vm1388, %v3377, 0
      %v3455 = vsel %vm1388, %v3381, 0
      %v3458 = vsel %vm1388, %v3385, 0
      %v3461 = vsel %vm1388, %v3389, 0
      %v3464 = vsel %vm1388, %v3393, 0
      %v3467 = vsel %vm1388, %v3402, 0
      %3469 = vmatprep.subr.bf16.mxu0 0
      %3470 = vmatpush1.bf16.msra.mxu0 %v3411
      %3471 = vmatprep.subr.bf16.mxu0 0
      %3472 = vmatpush1.bf16.msra.mxu0 %v3412
      %3473 = vmatprep.subr.bf16.mxu0 0
      %3474 = vmatpush1.bf16.msra.mxu0 0
      %3475 = vmatprep.subr.bf16.mxu0 0
      %3476 = vmatpush1.bf16.msra.mxu0 0
      %3477 = vmatprep.subr.bf16.mxu0 0
      %3478 = vmatpush1.bf16.msra.mxu0 0
      %3479 = vmatprep.subr.bf16.mxu0 0
      %3480 = vmatpush1.bf16.msra.mxu0 0
      %3481 = vmatprep.subr.bf16.mxu0 0
      %3482 = vmatpush1.bf16.msra.mxu0 0
      %3483 = vmatprep.subr.bf16.mxu0 0
      %3484 = vmatpush1.bf16.msra.mxu0 0
      %3485 = vmatprep.subr.bf16.mxu0 0
      %3486 = vmatpush1.bf16.msra.mxu0 0
      %3487 = vmatprep.subr.bf16.mxu0 0
      %3488 = vmatpush1.bf16.msra.mxu0 0
      %3489 = vmatprep.subr.bf16.mxu0 0
      %3490 = vmatpush1.bf16.msra.mxu0 0
      %3491 = vmatprep.subr.bf16.mxu0 0
      %3492 = vmatpush1.bf16.msra.mxu0 0
      %3493 = vmatprep.subr.bf16.mxu0 0
      %3494 = vmatpush1.bf16.msra.mxu0 0
      %3495 = vmatprep.subr.bf16.mxu0 0
      %3496 = vmatpush1.bf16.msra.mxu0 0
      %3497 = vmatprep.subr.bf16.mxu0 0
      %3498 = vmatpush1.bf16.msra.mxu0 0
      %3499 = vmatprep.subr.bf16.mxu0 0
      %3500 = vmatpush1.bf16.msra.mxu0 0
      %3501 = vmatprep.mubr.bf16.mxu0 0
      %3502 = vmatmul.mubr.bf16.gmra.mrb[0].mxu0 %v3416
      %v3503 = vpop.f32.mrb[0].mxu0
      %v3504 = vadd.f32 0.0, %v3503
      %v3505 = vpop.f32.mrb[0].mxu0
      %v3506 = vpop.f32.mrb[0].mxu0
      %v3507 = vadd.f32 0.0, %v3506
      %v3508 = vpop.f32.mrb[0].mxu0
      %3509 = vmatprep.mubr.bf16.mxu0 0
      %3510 = vmatmul.mubr.bf16.gmra.mrb[0].mxu0 %v3419
      %v3511 = vpop.f32.mrb[0].mxu0
      %v3512 = vadd.f32 0.0, %v3511
      %v3513 = vpop.f32.mrb[0].mxu0
      %v3514 = vpop.f32.mrb[0].mxu0
      %v3515 = vadd.f32 0.0, %v3514
      %v3516 = vpop.f32.mrb[0].mxu0
      %3517 = vmatprep.mubr.bf16.mxu0 0
      %3518 = vmatmul.mubr.bf16.gmra.mrb[0].mxu0 %v3422
      %v3519 = vpop.f32.mrb[0].mxu0
      %v3520 = vadd.f32 0.0, %v3519
      %v3521 = vpop.f32.mrb[0].mxu0
      %v3522 = vpop.f32.mrb[0].mxu0
      %v3523 = vadd.f32 0.0, %v3522
      %v3524 = vpop.f32.mrb[0].mxu0
      %3525 = vmatprep.mubr.bf16.mxu0 0
      %3526 = vmatmul.mubr.bf16.gmra.mrb[0].mxu0 %v3425
      %v3527 = vpop.f32.mrb[0].mxu0
      %v3528 = vadd.f32 0.0, %v3527
      %v3529 = vpop.f32.mrb[0].mxu0
      %v3530 = vpop.f32.mrb[0].mxu0
      %v3531 = vadd.f32 0.0, %v3530
      %v3532 = vpop.f32.mrb[0].mxu0
      %3533 = vmatprep.mubr.bf16.mxu0 0
      %3534 = vmatmul.mubr.bf16.gmra.mrb[0].mxu0 %v3428
      %v3535 = vpop.f32.mrb[0].mxu0
      %v3536 = vadd.f32 0.0, %v3535
      %v3537 = vpop.f32.mrb[0].mxu0
      %v3538 = vpop.f32.mrb[0].mxu0
      %v3539 = vadd.f32 0.0, %v3538
      %v3540 = vpop.f32.mrb[0].mxu0
      %3541 = vmatprep.mubr.bf16.mxu0 0
      %3542 = vmatmul.mubr.bf16.gmra.mrb[0].mxu0 %v3431
      %v3543 = vpop.f32.mrb[0].mxu0
      %v3544 = vadd.f32 0.0, %v3543
      %v3545 = vpop.f32.mrb[0].mxu0
      %v3546 = vpop.f32.mrb[0].mxu0
      %v3547 = vadd.f32 0.0, %v3546
      %v3548 = vpop.f32.mrb[0].mxu0
      %3549 = vmatprep.mubr.bf16.mxu0 0
      %3550 = vmatmul.mubr.bf16.gmra.mrb[0].mxu0 %v3434
      %v3551 = vpop.f32.mrb[0].mxu0
      %v3552 = vadd.f32 0.0, %v3551
      %v3553 = vpop.f32.mrb[0].mxu0
      %v3554 = vpop.f32.mrb[0].mxu0
      %v3555 = vadd.f32 0.0, %v3554
      %v3556 = vpop.f32.mrb[0].mxu0
      %3557 = vmatprep.mubr.bf16.mxu0 0
      %3558 = vmatmul.mubr.bf16.gmra.mrb[0].mxu0 %v3437
      %v3559 = vpop.f32.mrb[0].mxu0
      %v3560 = vadd.f32 0.0, %v3559
      %v3561 = vpop.f32.mrb[0].mxu0
      %v3562 = vpop.f32.mrb[0].mxu0
      %v3563 = vadd.f32 0.0, %v3562
      %v3564 = vpop.f32.mrb[0].mxu0
      %3565 = vmatprep.mubr.bf16.mxu0 0
      %3566 = vmatmul.mubr.bf16.gmra.mrb[0].mxu0 %v3440
      %v3567 = vpop.f32.mrb[0].mxu0
      %v3568 = vadd.f32 0.0, %v3567
      %v3569 = vpop.f32.mrb[0].mxu0
      %v3570 = vpop.f32.mrb[0].mxu0
      %v3571 = vadd.f32 0.0, %v3570
      %v3572 = vpop.f32.mrb[0].mxu0
      %3573 = vmatprep.mubr.bf16.mxu0 0
      %3574 = vmatmul.mubr.bf16.gmra.mrb[0].mxu0 %v3443
      %v3575 = vpop.f32.mrb[0].mxu0
      %v3576 = vadd.f32 0.0, %v3575
      %v3577 = vpop.f32.mrb[0].mxu0
      %v3578 = vpop.f32.mrb[0].mxu0
      %v3579 = vadd.f32 0.0, %v3578
      %v3580 = vpop.f32.mrb[0].mxu0
      %3581 = vmatprep.mubr.bf16.mxu0 0
      %3582 = vmatmul.mubr.bf16.gmra.mrb[0].mxu0 %v3446
      %v3583 = vpop.f32.mrb[0].mxu0
      %v3584 = vadd.f32 0.0, %v3583
      %v3585 = vpop.f32.mrb[0].mxu0
      %v3586 = vpop.f32.mrb[0].mxu0
      %v3587 = vadd.f32 0.0, %v3586
      %v3588 = vpop.f32.mrb[0].mxu0
      %3589 = vmatprep.mubr.bf16.mxu0 0
      %3590 = vmatmul.mubr.bf16.gmra.mrb[0].mxu0 %v3449
      %v3591 = vpop.f32.mrb[0].mxu0
      %v3592 = vadd.f32 0.0, %v3591
      %v3593 = vpop.f32.mrb[0].mxu0
      %v3594 = vpop.f32.mrb[0].mxu0
      %v3595 = vadd.f32 0.0, %v3594
      %v3596 = vpop.f32.mrb[0].mxu0
      %3597 = vmatprep.mubr.bf16.mxu0 0
      %3598 = vmatmul.mubr.bf16.gmra.mrb[0].mxu0 %v3452
      %v3599 = vpop.f32.mrb[0].mxu0
      %v3600 = vadd.f32 0.0, %v3599
      %v3601 = vpop.f32.mrb[0].mxu0
      %v3602 = vpop.f32.mrb[0].mxu0
      %v3603 = vadd.f32 0.0, %v3602
      %v3604 = vpop.f32.mrb[0].mxu0
      %3605 = vmatprep.mubr.bf16.mxu0 0
      %3606 = vmatmul.mubr.bf16.gmra.mrb[0].mxu0 %v3455
      %v3607 = vpop.f32.mrb[0].mxu0
      %v3608 = vadd.f32 0.0, %v3607
      %v3609 = vpop.f32.mrb[0].mxu0
      %v3610 = vpop.f32.mrb[0].mxu0
      %v3611 = vadd.f32 0.0, %v3610
      %v3612 = vpop.f32.mrb[0].mxu0
      %3613 = vmatprep.mubr.bf16.mxu0 0
      %3614 = vmatmul.mubr.bf16.gmra.mrb[0].mxu0 %v3458
      %v3615 = vpop.f32.mrb[0].mxu0
      %v3616 = vadd.f32 0.0, %v3615
      %v3617 = vpop.f32.mrb[0].mxu0
      %v3618 = vpop.f32.mrb[0].mxu0
      %v3619 = vadd.f32 0.0, %v3618
      %v3620 = vpop.f32.mrb[0].mxu0
      %3621 = vmatprep.mubr.bf16.mxu0 0
      %3622 = vmatmul.mubr.bf16.gmra.mrb[0].mxu0 %v3461
      %v3623 = vpop.f32.mrb[0].mxu0
      %v3624 = vadd.f32 0.0, %v3623
      %v3625 = vpop.f32.mrb[0].mxu0
      %v3626 = vpop.f32.mrb[0].mxu0
      %v3627 = vadd.f32 0.0, %v3626
      %v3628 = vpop.f32.mrb[0].mxu0
      %3629 = vmatprep.mubr.bf16.mxu0 0
      %3630 = vmatmul.mubr.bf16.gmra.mrb[0].mxu0 %v3464
      %v3631 = vpop.f32.mrb[0].mxu0
      %v3632 = vadd.f32 0.0, %v3631
      %v3633 = vpop.f32.mrb[0].mxu0
      %v3634 = vpop.f32.mrb[0].mxu0
      %v3635 = vadd.f32 0.0, %v3634
      %v3636 = vpop.f32.mrb[0].mxu0
      %3637 = vmatprep.mubr.bf16.mxu0 0
      %3638 = vmatmul.mubr.bf16.gmra.mrb[0].mxu0 %v3467
      %v3639 = vpop.f32.mrb[0].mxu0
      %v3640 = vadd.f32 0.0, %v3639
      %v3641 = vpop.f32.mrb[0].mxu0
      %v3642 = vpop.f32.mrb[0].mxu0
      %v3643 = vadd.f32 0.0, %v3642
      %v3644 = vpop.f32.mrb[0].mxu0
      %3645 = vdwg.mxu0
      %v3646 = vadd.f32 %v3286, %v3504
      %v3647 = vadd.f32 %v3287, %v3507
      %v3648 = vadd.f32 %v3288, %v3512
      %v3649 = vadd.f32 %v3289, %v3515
      %v3650 = vadd.f32 %v3290, %v3520
      %v3651 = vadd.f32 %v3291, %v3523
      %v3652 = vadd.f32 %v3292, %v3528
      %v3653 = vadd.f32 %v3293, %v3531
      %v3654 = vadd.f32 %v3294, %v3536
      %v3655 = vadd.f32 %v3295, %v3539
      %v3656 = vadd.f32 %v3296, %v3544
      %v3657 = vadd.f32 %v3297, %v3547
      %v3658 = vadd.f32 %v3298, %v3552
      %v3659 = vadd.f32 %v3299, %v3555
      %v3660 = vadd.f32 %v3300, %v3560
      %v3661 = vadd.f32 %v3301, %v3563
      %v3662 = vadd.f32 %v3302, %v3568
      %v3663 = vadd.f32 %v3303, %v3571
      %v3664 = vadd.f32 %v3304, %v3576
      %v3665 = vadd.f32 %v3305, %v3579
      %v3666 = vadd.f32 %v3306, %v3584
      %v3667 = vadd.f32 %v3307, %v3587
      %v3668 = vadd.f32 %v3308, %v3592
      %v3669 = vadd.f32 %v3309, %v3595
      %v3670 = vadd.f32 %v3310, %v3600
      %v3671 = vadd.f32 %v3311, %v3603
      %v3672 = vadd.f32 %v3312, %v3608
      %v3673 = vadd.f32 %v3313, %v3611
      %v3674 = vadd.f32 %v3314, %v3616
      %v3675 = vadd.f32 %v3315, %v3619
      %v3676 = vadd.f32 %v3316, %v3624
      %v3677 = vadd.f32 %v3317, %v3627
      %v3678 = vadd.f32 %v3318, %v3632
      %v3679 = vadd.f32 %v3319, %v3635
      %v3680 = vadd.f32 %v3320, %v3640
      %v3681 = vadd.f32 %v3321, %v3643
      %vm3682 = vcmask 1044480
      %v3683 = vrot.slane %v1172, 3
      %v3684 = vrot.slane %v1173, 3
      %v3685 = vsel %vm3682, %v3683, %v3684
      %v3686 = vrot.slane %v1174, 3
      %v3687 = vsel %vm3682, %v3684, %v3686
      %v3688 = vrot.slane %v1175, 3
      %v3689 = vsel %vm3682, %v3686, %v3688
      %v3690 = vrot.slane %v1176, 3
      %v3691 = vsel %vm3682, %v3688, %v3690
      %v3692 = vrot.slane %v1177, 3
      %v3693 = vsel %vm3682, %v3690, %v3692
      %v3694 = vrot.slane %v1178, 3
      %v3695 = vsel %vm3682, %v3692, %v3694
      %v3696 = vrot.slane %v1179, 3
      %v3697 = vsel %vm3682, %v3694, %v3696
      %v3698 = vrot.slane %v1180, 3
      %v3699 = vsel %vm3682, %v3696, %v3698
      %v3700 = vrot.slane %v1181, 3
      %v3701 = vsel %vm3682, %v3698, %v3700
      %v3702 = vrot.slane %v1182, 3
      %v3703 = vsel %vm3682, %v3700, %v3702
      %v3704 = vrot.slane %v1183, 3
      %v3705 = vsel %vm3682, %v3702, %v3704
      %v3706 = vrot.slane %v1184, 3
      %v3707 = vsel %vm3682, %v3704, %v3706
      %v3708 = vrot.slane %v1185, 3
      %v3709 = vsel %vm3682, %v3706, %v3708
      %v3710 = vrot.slane %v1186, 3
      %v3711 = vsel %vm3682, %v3708, %v3710
      %v3712 = vrot.slane %v1187, 3
      %v3713 = vsel %vm3682, %v3710, %v3712
      %v3714 = vrot.slane %v1188, 3
      %v3715 = vsel %vm3682, %v3712, %v3714
      %v3716 = vrot.slane %v1189, 3
      %v3717 = vsel %vm3682, %v3714, %v3716
      %v3718 = vrot.slane %v1190, 3
      %v3719 = vsel %vm3682, %v3716, %v3718
      %v3724 = vunpack.c.l.b16 %v1223
      %v3725 = vunpack.c.l.b16 %v1224
      %v3726 = vunpack.c.l.b16 %v1225
      %v3727 = vunpack.c.l.b16 %v1226
      %v3728 = vpack.c.b16 %v3725, %v3724
      %v3729 = vpack.c.b16 %v3727, %v3726
      %v3733 = vsel %vm1388, %v3685, 0
      %v3736 = vsel %vm1388, %v3687, 0
      %v3739 = vsel %vm1388, %v3689, 0
      %v3742 = vsel %vm1388, %v3691, 0
      %v3745 = vsel %vm1388, %v3693, 0
      %v3748 = vsel %vm1388, %v3695, 0
      %v3751 = vsel %vm1388, %v3697, 0
      %v3754 = vsel %vm1388, %v3699, 0
      %v3757 = vsel %vm1388, %v3701, 0
      %v3760 = vsel %vm1388, %v3703, 0
      %v3763 = vsel %vm1388, %v3705, 0
      %v3766 = vsel %vm1388, %v3707, 0
      %v3769 = vsel %vm1388, %v3709, 0
      %v3772 = vsel %vm1388, %v3711, 0
      %v3775 = vsel %vm1388, %v3713, 0
      %v3778 = vsel %vm1388, %v3715, 0
      %v3781 = vsel %vm1388, %v3717, 0
      %v3784 = vsel %vm1388, %v3719, 0
      %3786 = vmatprep.subr.bf16.mxu0 0
      %3787 = vmatpush1.bf16.msra.mxu0 %v3728
      %3788 = vmatprep.subr.bf16.mxu0 0
      %3789 = vmatpush1.bf16.msra.mxu0 %v3729
      %3790 = vmatprep.subr.bf16.mxu0 0
      %3791 = vmatpush1.bf16.msra.mxu0 0
      %3792 = vmatprep.subr.bf16.mxu0 0
      %3793 = vmatpush1.bf16.msra.mxu0 0
      %3794 = vmatprep.subr.bf16.mxu0 0
      %3795 = vmatpush1.bf16.msra.mxu0 0
      %3796 = vmatprep.subr.bf16.mxu0 0
      %3797 = vmatpush1.bf16.msra.mxu0 0
      %3798 = vmatprep.subr.bf16.mxu0 0
      %3799 = vmatpush1.bf16.msra.mxu0 0
      %3800 = vmatprep.subr.bf16.mxu0 0
      %3801 = vmatpush1.bf16.msra.mxu0 0
      %3802 = vmatprep.subr.bf16.mxu0 0
      %3803 = vmatpush1.bf16.msra.mxu0 0
      %3804 = vmatprep.subr.bf16.mxu0 0
      %3805 = vmatpush1.bf16.msra.mxu0 0
      %3806 = vmatprep.subr.bf16.mxu0 0
      %3807 = vmatpush1.bf16.msra.mxu0 0
      %3808 = vmatprep.subr.bf16.mxu0 0
      %3809 = vmatpush1.bf16.msra.mxu0 0
      %3810 = vmatprep.subr.bf16.mxu0 0
      %3811 = vmatpush1.bf16.msra.mxu0 0
      %3812 = vmatprep.subr.bf16.mxu0 0
      %3813 = vmatpush1.bf16.msra.mxu0 0
      %3814 = vmatprep.subr.bf16.mxu0 0
      %3815 = vmatpush1.bf16.msra.mxu0 0
      %3816 = vmatprep.subr.bf16.mxu0 0
      %3817 = vmatpush1.bf16.msra.mxu0 0
      %3818 = vmatprep.mubr.bf16.mxu0 0
      %3819 = vmatmul.mubr.bf16.gmra.mrb[0].mxu0 %v3733
      %v3820 = vpop.f32.mrb[0].mxu0
      %v3821 = vadd.f32 0.0, %v3820
      %v3822 = vpop.f32.mrb[0].mxu0
      %v3823 = vpop.f32.mrb[0].mxu0
      %v3824 = vadd.f32 0.0, %v3823
      %v3825 = vpop.f32.mrb[0].mxu0
      %3826 = vmatprep.mubr.bf16.mxu0 0
      %3827 = vmatmul.mubr.bf16.gmra.mrb[0].mxu0 %v3736
      %v3828 = vpop.f32.mrb[0].mxu0
      %v3829 = vadd.f32 0.0, %v3828
      %v3830 = vpop.f32.mrb[0].mxu0
      %v3831 = vpop.f32.mrb[0].mxu0
      %v3832 = vadd.f32 0.0, %v3831
      %v3833 = vpop.f32.mrb[0].mxu0
      %3834 = vmatprep.mubr.bf16.mxu0 0
      %3835 = vmatmul.mubr.bf16.gmra.mrb[0].mxu0 %v3739
      %v3836 = vpop.f32.mrb[0].mxu0
      %v3837 = vadd.f32 0.0, %v3836
      %v3838 = vpop.f32.mrb[0].mxu0
      %v3839 = vpop.f32.mrb[0].mxu0
      %v3840 = vadd.f32 0.0, %v3839
      %v3841 = vpop.f32.mrb[0].mxu0
      %3842 = vmatprep.mubr.bf16.mxu0 0
      %3843 = vmatmul.mubr.bf16.gmra.mrb[0].mxu0 %v3742
      %v3844 = vpop.f32.mrb[0].mxu0
      %v3845 = vadd.f32 0.0, %v3844
      %v3846 = vpop.f32.mrb[0].mxu0
      %v3847 = vpop.f32.mrb[0].mxu0
      %v3848 = vadd.f32 0.0, %v3847
      %v3849 = vpop.f32.mrb[0].mxu0
      %3850 = vmatprep.mubr.bf16.mxu0 0
      %3851 = vmatmul.mubr.bf16.gmra.mrb[0].mxu0 %v3745
      %v3852 = vpop.f32.mrb[0].mxu0
      %v3853 = vadd.f32 0.0, %v3852
      %v3854 = vpop.f32.mrb[0].mxu0
      %v3855 = vpop.f32.mrb[0].mxu0
      %v3856 = vadd.f32 0.0, %v3855
      %v3857 = vpop.f32.mrb[0].mxu0
      %3858 = vmatprep.mubr.bf16.mxu0 0
      %3859 = vmatmul.mubr.bf16.gmra.mrb[0].mxu0 %v3748
      %v3860 = vpop.f32.mrb[0].mxu0
      %v3861 = vadd.f32 0.0, %v3860
      %v3862 = vpop.f32.mrb[0].mxu0
      %v3863 = vpop.f32.mrb[0].mxu0
      %v3864 = vadd.f32 0.0, %v3863
      %v3865 = vpop.f32.mrb[0].mxu0
      %3866 = vmatprep.mubr.bf16.mxu0 0
      %3867 = vmatmul.mubr.bf16.gmra.mrb[0].mxu0 %v3751
      %v3868 = vpop.f32.mrb[0].mxu0
      %v3869 = vadd.f32 0.0, %v3868
      %v3870 = vpop.f32.mrb[0].mxu0
      %v3871 = vpop.f32.mrb[0].mxu0
      %v3872 = vadd.f32 0.0, %v3871
      %v3873 = vpop.f32.mrb[0].mxu0
      %3874 = vmatprep.mubr.bf16.mxu0 0
      %3875 = vmatmul.mubr.bf16.gmra.mrb[0].mxu0 %v3754
      %v3876 = vpop.f32.mrb[0].mxu0
      %v3877 = vadd.f32 0.0, %v3876
      %v3878 = vpop.f32.mrb[0].mxu0
      %v3879 = vpop.f32.mrb[0].mxu0
      %v3880 = vadd.f32 0.0, %v3879
      %v3881 = vpop.f32.mrb[0].mxu0
      %3882 = vmatprep.mubr.bf16.mxu0 0
      %3883 = vmatmul.mubr.bf16.gmra.mrb[0].mxu0 %v3757
      %v3884 = vpop.f32.mrb[0].mxu0
      %v3885 = vadd.f32 0.0, %v3884
      %v3886 = vpop.f32.mrb[0].mxu0
      %v3887 = vpop.f32.mrb[0].mxu0
      %v3888 = vadd.f32 0.0, %v3887
      %v3889 = vpop.f32.mrb[0].mxu0
      %3890 = vmatprep.mubr.bf16.mxu0 0
      %3891 = vmatmul.mubr.bf16.gmra.mrb[0].mxu0 %v3760
      %v3892 = vpop.f32.mrb[0].mxu0
      %v3893 = vadd.f32 0.0, %v3892
      %v3894 = vpop.f32.mrb[0].mxu0
      %v3895 = vpop.f32.mrb[0].mxu0
      %v3896 = vadd.f32 0.0, %v3895
      %v3897 = vpop.f32.mrb[0].mxu0
      %3898 = vmatprep.mubr.bf16.mxu0 0
      %3899 = vmatmul.mubr.bf16.gmra.mrb[0].mxu0 %v3763
      %v3900 = vpop.f32.mrb[0].mxu0
      %v3901 = vadd.f32 0.0, %v3900
      %v3902 = vpop.f32.mrb[0].mxu0
      %v3903 = vpop.f32.mrb[0].mxu0
      %v3904 = vadd.f32 0.0, %v3903
      %v3905 = vpop.f32.mrb[0].mxu0
      %3906 = vmatprep.mubr.bf16.mxu0 0
      %3907 = vmatmul.mubr.bf16.gmra.mrb[0].mxu0 %v3766
      %v3908 = vpop.f32.mrb[0].mxu0
      %v3909 = vadd.f32 0.0, %v3908
      %v3910 = vpop.f32.mrb[0].mxu0
      %v3911 = vpop.f32.mrb[0].mxu0
      %v3912 = vadd.f32 0.0, %v3911
      %v3913 = vpop.f32.mrb[0].mxu0
      %3914 = vmatprep.mubr.bf16.mxu0 0
      %3915 = vmatmul.mubr.bf16.gmra.mrb[0].mxu0 %v3769
      %v3916 = vpop.f32.mrb[0].mxu0
      %v3917 = vadd.f32 0.0, %v3916
      %v3918 = vpop.f32.mrb[0].mxu0
      %v3919 = vpop.f32.mrb[0].mxu0
      %v3920 = vadd.f32 0.0, %v3919
      %v3921 = vpop.f32.mrb[0].mxu0
      %3922 = vmatprep.mubr.bf16.mxu0 0
      %3923 = vmatmul.mubr.bf16.gmra.mrb[0].mxu0 %v3772
      %v3924 = vpop.f32.mrb[0].mxu0
      %v3925 = vadd.f32 0.0, %v3924
      %v3926 = vpop.f32.mrb[0].mxu0
      %v3927 = vpop.f32.mrb[0].mxu0
      %v3928 = vadd.f32 0.0, %v3927
      %v3929 = vpop.f32.mrb[0].mxu0
      %3930 = vmatprep.mubr.bf16.mxu0 0
      %3931 = vmatmul.mubr.bf16.gmra.mrb[0].mxu0 %v3775
      %v3932 = vpop.f32.mrb[0].mxu0
      %v3933 = vadd.f32 0.0, %v3932
      %v3934 = vpop.f32.mrb[0].mxu0
      %v3935 = vpop.f32.mrb[0].mxu0
      %v3936 = vadd.f32 0.0, %v3935
      %v3937 = vpop.f32.mrb[0].mxu0
      %3938 = vmatprep.mubr.bf16.mxu0 0
      %3939 = vmatmul.mubr.bf16.gmra.mrb[0].mxu0 %v3778
      %v3940 = vpop.f32.mrb[0].mxu0
      %v3941 = vadd.f32 0.0, %v3940
      %v3942 = vpop.f32.mrb[0].mxu0
      %v3943 = vpop.f32.mrb[0].mxu0
      %v3944 = vadd.f32 0.0, %v3943
      %v3945 = vpop.f32.mrb[0].mxu0
      %3946 = vmatprep.mubr.bf16.mxu0 0
      %3947 = vmatmul.mubr.bf16.gmra.mrb[0].mxu0 %v3781
      %v3948 = vpop.f32.mrb[0].mxu0
      %v3949 = vadd.f32 0.0, %v3948
      %v3950 = vpop.f32.mrb[0].mxu0
      %v3951 = vpop.f32.mrb[0].mxu0
      %v3952 = vadd.f32 0.0, %v3951
      %v3953 = vpop.f32.mrb[0].mxu0
      %3954 = vmatprep.mubr.bf16.mxu0 0
      %3955 = vmatmul.mubr.bf16.gmra.mrb[0].mxu0 %v3784
      %v3956 = vpop.f32.mrb[0].mxu0
      %v3957 = vadd.f32 0.0, %v3956
      %v3958 = vpop.f32.mrb[0].mxu0
      %v3959 = vpop.f32.mrb[0].mxu0
      %v3960 = vadd.f32 0.0, %v3959
      %v3961 = vpop.f32.mrb[0].mxu0
      %3962 = vdwg.mxu0
      %v3963 = vadd.f32 %v3646, %v3821
      %v3964 = vadd.f32 %v3647, %v3824
      %v3965 = vadd.f32 %v3648, %v3829
      %v3966 = vadd.f32 %v3649, %v3832
      %v3967 = vadd.f32 %v3650, %v3837
      %v3968 = vadd.f32 %v3651, %v3840
      %v3969 = vadd.f32 %v3652, %v3845
      %v3970 = vadd.f32 %v3653, %v3848
      %v3971 = vadd.f32 %v3654, %v3853
      %v3972 = vadd.f32 %v3655, %v3856
      %v3973 = vadd.f32 %v3656, %v3861
      %v3974 = vadd.f32 %v3657, %v3864
      %v3975 = vadd.f32 %v3658, %v3869
      %v3976 = vadd.f32 %v3659, %v3872
      %v3977 = vadd.f32 %v3660, %v3877
      %v3978 = vadd.f32 %v3661, %v3880
      %v3979 = vadd.f32 %v3662, %v3885
      %v3980 = vadd.f32 %v3663, %v3888
      %v3981 = vadd.f32 %v3664, %v3893
      %v3982 = vadd.f32 %v3665, %v3896
      %v3983 = vadd.f32 %v3666, %v3901
      %v3984 = vadd.f32 %v3667, %v3904
      %v3985 = vadd.f32 %v3668, %v3909
      %v3986 = vadd.f32 %v3669, %v3912
      %v3987 = vadd.f32 %v3670, %v3917
      %v3988 = vadd.f32 %v3671, %v3920
      %v3989 = vadd.f32 %v3672, %v3925
      %v3990 = vadd.f32 %v3673, %v3928
      %v3991 = vadd.f32 %v3674, %v3933
      %v3992 = vadd.f32 %v3675, %v3936
      %v3993 = vadd.f32 %v3676, %v3941
      %v3994 = vadd.f32 %v3677, %v3944
      %v3995 = vadd.f32 %v3678, %v3949
      %v3996 = vadd.f32 %v3679, %v3952
      %v3997 = vadd.f32 %v3680, %v3957
      %v3998 = vadd.f32 %v3681, %v3960
      %v3999 = vld [vmem:[%s6] sm:$0x1]
      %v4001 = vlaneseq
      %v4002 = vshrl.u32 %v4001, 7
      %v4003 = vsub.s32 0, %v4002
      %v4004 = vrot.slane %v3999, %v4003
      %v4006 = vmul.f32 %v3963, %v4004
      %v4007 = vmul.f32 %v3964, %v4004
      %v4008 = vmul.f32 %v3965, %v4004
      %v4009 = vmul.f32 %v3966, %v4004
      %v4010 = vmul.f32 %v3967, %v4004
      %v4011 = vmul.f32 %v3968, %v4004
      %v4012 = vmul.f32 %v3969, %v4004
      %v4013 = vmul.f32 %v3970, %v4004
      %v4014 = vmul.f32 %v3971, %v4004
      %v4015 = vmul.f32 %v3972, %v4004
      %v4016 = vmul.f32 %v3973, %v4004
      %v4017 = vmul.f32 %v3974, %v4004
      %v4018 = vmul.f32 %v3975, %v4004
      %v4019 = vmul.f32 %v3976, %v4004
      %v4020 = vmul.f32 %v3977, %v4004
      %v4021 = vmul.f32 %v3978, %v4004
      %v4022 = vmul.f32 %v3979, %v4004
      %v4023 = vmul.f32 %v3980, %v4004
      %v4024 = vmul.f32 %v3981, %v4004
      %v4025 = vmul.f32 %v3982, %v4004
      %v4026 = vmul.f32 %v3983, %v4004
      %v4027 = vmul.f32 %v3984, %v4004
      %v4028 = vmul.f32 %v3985, %v4004
      %v4029 = vmul.f32 %v3986, %v4004
      %v4030 = vmul.f32 %v3987, %v4004
      %v4031 = vmul.f32 %v3988, %v4004
      %v4032 = vmul.f32 %v3989, %v4004
      %v4033 = vmul.f32 %v3990, %v4004
      %v4034 = vmul.f32 %v3991, %v4004
      %v4035 = vmul.f32 %v3992, %v4004
      %v4036 = vmul.f32 %v3993, %v4004
      %v4037 = vmul.f32 %v3994, %v4004
      %v4038 = vmul.f32 %v3995, %v4004
      %v4039 = vmul.f32 %v3996, %v4004
      %v4040 = vmul.f32 %v3997, %v4004
      %v4041 = vmul.f32 %v3998, %v4004
      %v4042 = vld [vmem:[%s7] sm:$0x1]
      %v4044 = vlaneseq
      %v4045 = vshrl.u32 %v4044, 7
      %v4046 = vsub.s32 0, %v4045
      %v4047 = vrot.slane %v4042, %v4046
      %v4049 = vadd.f32 %v4006, %v4047
      %v4050 = vadd.f32 %v4007, %v4047
      %v4051 = vadd.f32 %v4008, %v4047
      %v4052 = vadd.f32 %v4009, %v4047
      %v4053 = vadd.f32 %v4010, %v4047
      %v4054 = vadd.f32 %v4011, %v4047
      %v4055 = vadd.f32 %v4012, %v4047
      %v4056 = vadd.f32 %v4013, %v4047
      %v4057 = vadd.f32 %v4014, %v4047
      %v4058 = vadd.f32 %v4015, %v4047
      %v4059 = vadd.f32 %v4016, %v4047
      %v4060 = vadd.f32 %v4017, %v4047
      %v4061 = vadd.f32 %v4018, %v4047
      %v4062 = vadd.f32 %v4019, %v4047
      %v4063 = vadd.f32 %v4020, %v4047
      %v4064 = vadd.f32 %v4021, %v4047
      %v4065 = vadd.f32 %v4022, %v4047
      %v4066 = vadd.f32 %v4023, %v4047
      %v4067 = vadd.f32 %v4024, %v4047
      %v4068 = vadd.f32 %v4025, %v4047
      %v4069 = vadd.f32 %v4026, %v4047
      %v4070 = vadd.f32 %v4027, %v4047
      %v4071 = vadd.f32 %v4028, %v4047
      %v4072 = vadd.f32 %v4029, %v4047
      %v4073 = vadd.f32 %v4030, %v4047
      %v4074 = vadd.f32 %v4031, %v4047
      %v4075 = vadd.f32 %v4032, %v4047
      %v4076 = vadd.f32 %v4033, %v4047
      %v4077 = vadd.f32 %v4034, %v4047
      %v4078 = vadd.f32 %v4035, %v4047
      %v4079 = vadd.f32 %v4036, %v4047
      %v4080 = vadd.f32 %v4037, %v4047
      %v4081 = vadd.f32 %v4038, %v4047
      %v4082 = vadd.f32 %v4039, %v4047
      %v4083 = vadd.f32 %v4040, %v4047
      %v4084 = vadd.f32 %v4041, %v4047
      %v4085 = vmax.f32 %v4049, 0.0
      %v4086 = vmax.f32 %v4050, 0.0
      %v4087 = vmax.f32 %v4051, 0.0
      %v4088 = vmax.f32 %v4052, 0.0
      %v4089 = vmax.f32 %v4053, 0.0
      %v4090 = vmax.f32 %v4054, 0.0
      %v4091 = vmax.f32 %v4055, 0.0
      %v4092 = vmax.f32 %v4056, 0.0
      %v4093 = vmax.f32 %v4057, 0.0
      %v4094 = vmax.f32 %v4058, 0.0
      %v4095 = vmax.f32 %v4059, 0.0
      %v4096 = vmax.f32 %v4060, 0.0
      %v4097 = vmax.f32 %v4061, 0.0
      %v4098 = vmax.f32 %v4062, 0.0
      %v4099 = vmax.f32 %v4063, 0.0
      %v4100 = vmax.f32 %v4064, 0.0
      %v4101 = vmax.f32 %v4065, 0.0
      %v4102 = vmax.f32 %v4066, 0.0
      %v4103 = vmax.f32 %v4067, 0.0
      %v4104 = vmax.f32 %v4068, 0.0
      %v4105 = vmax.f32 %v4069, 0.0
      %v4106 = vmax.f32 %v4070, 0.0
      %v4107 = vmax.f32 %v4071, 0.0
      %v4108 = vmax.f32 %v4072, 0.0
      %v4109 = vmax.f32 %v4073, 0.0
      %v4110 = vmax.f32 %v4074, 0.0
      %v4111 = vmax.f32 %v4075, 0.0
      %v4112 = vmax.f32 %v4076, 0.0
      %v4113 = vmax.f32 %v4077, 0.0
      %v4114 = vmax.f32 %v4078, 0.0
      %v4115 = vmax.f32 %v4079, 0.0
      %v4116 = vmax.f32 %v4080, 0.0
      %v4117 = vmax.f32 %v4081, 0.0
      %v4118 = vmax.f32 %v4082, 0.0
      %v4119 = vmax.f32 %v4083, 0.0
      %v4120 = vmax.f32 %v4084, 0.0
      %v4121 = vpack.c.bf16 %v4086, %v4085
      %v4122 = vpack.c.bf16 %v4088, %v4087
      %v4123 = vpack.c.bf16 %v4090, %v4089
      %v4124 = vpack.c.bf16 %v4092, %v4091
      %v4125 = vpack.c.bf16 %v4094, %v4093
      %v4126 = vpack.c.bf16 %v4096, %v4095
      %v4127 = vpack.c.bf16 %v4098, %v4097
      %v4128 = vpack.c.bf16 %v4100, %v4099
      %v4129 = vpack.c.bf16 %v4102, %v4101
      %v4130 = vpack.c.bf16 %v4104, %v4103
      %v4131 = vpack.c.bf16 %v4106, %v4105
      %v4132 = vpack.c.bf16 %v4108, %v4107
      %v4133 = vpack.c.bf16 %v4110, %v4109
      %v4134 = vpack.c.bf16 %v4112, %v4111
      %v4135 = vpack.c.bf16 %v4114, %v4113
      %v4136 = vpack.c.bf16 %v4116, %v4115
      %v4137 = vpack.c.bf16 %v4118, %v4117
      %v4138 = vpack.c.bf16 %v4120, %v4119
      %v4139 = vld [vmem:[%s8] sm:$0xf]
      %v4140 = vld [vmem:[%s8 + $0x4] sm:$0xf]
      %v4141 = vld [vmem:[%s8 + $0x8] sm:$0xf]
      %v4142 = vld [vmem:[%s8 + $0xc] sm:$0xf]
      %v4147 = vunpack.c.l.b16 %v4139
      %v4148 = vunpack.c.l.b16 %v4140
      %v4149 = vunpack.c.l.b16 %v4141
      %v4150 = vunpack.c.l.b16 %v4142
      %v4151 = vpack.c.b16 %v4148, %v4147
      %v4152 = vpack.c.b16 %v4150, %v4149
      %v4156 = vsel %vm1388, %v4121, 0
      %v4159 = vsel %vm1388, %v4122, 0
      %v4162 = vsel %vm1388, %v4123, 0
      %v4165 = vsel %vm1388, %v4124, 0
      %v4168 = vsel %vm1388, %v4125, 0
      %v4171 = vsel %vm1388, %v4126, 0
      %v4174 = vsel %vm1388, %v4127, 0
      %v4177 = vsel %vm1388, %v4128, 0
      %v4180 = vsel %vm1388, %v4129, 0
      %v4183 = vsel %vm1388, %v4130, 0
      %v4186 = vsel %vm1388, %v4131, 0
      %v4189 = vsel %vm1388, %v4132, 0
      %v4192 = vsel %vm1388, %v4133, 0
      %v4195 = vsel %vm1388, %v4134, 0
      %v4198 = vsel %vm1388, %v4135, 0
      %v4201 = vsel %vm1388, %v4136, 0
      %v4204 = vsel %vm1388, %v4137, 0
      %v4207 = vsel %vm1388, %v4138, 0
      %4209 = vmatprep.subr.bf16.mxu0 0
      %4210 = vmatpush1.bf16.msra.mxu0 %v4151
      %4211 = vmatprep.subr.bf16.mxu0 0
      %4212 = vmatpush1.bf16.msra.mxu0 %v4152
      %4213 = vmatprep.subr.bf16.mxu0 0
      %4214 = vmatpush1.bf16.msra.mxu0 0
      %4215 = vmatprep.subr.bf16.mxu0 0
      %4216 = vmatpush1.bf16.msra.mxu0 0
      %4217 = vmatprep.subr.bf16.mxu0 0
      %4218 = vmatpush1.bf16.msra.mxu0 0
      %4219 = vmatprep.subr.bf16.mxu0 0
      %4220 = vmatpush1.bf16.msra.mxu0 0
      %4221 = vmatprep.subr.bf16.mxu0 0
      %4222 = vmatpush1.bf16.msra.mxu0 0
      %4223 = vmatprep.subr.bf16.mxu0 0
      %4224 = vmatpush1.bf16.msra.mxu0 0
      %4225 = vmatprep.subr.bf16.mxu0 0
      %4226 = vmatpush1.bf16.msra.mxu0 0
      %4227 = vmatprep.subr.bf16.mxu0 0
      %4228 = vmatpush1.bf16.msra.mxu0 0
      %4229 = vmatprep.subr.bf16.mxu0 0
      %4230 = vmatpush1.bf16.msra.mxu0 0
      %4231 = vmatprep.subr.bf16.mxu0 0
      %4232 = vmatpush1.bf16.msra.mxu0 0
      %4233 = vmatprep.subr.bf16.mxu0 0
      %4234 = vmatpush1.bf16.msra.mxu0 0
      %4235 = vmatprep.subr.bf16.mxu0 0
      %4236 = vmatpush1.bf16.msra.mxu0 0
      %4237 = vmatprep.subr.bf16.mxu0 0
      %4238 = vmatpush1.bf16.msra.mxu0 0
      %4239 = vmatprep.subr.bf16.mxu0 0
      %4240 = vmatpush1.bf16.msra.mxu0 0
      %4241 = vmatprep.mubr.bf16.mxu0 0
      %4242 = vmatmul.mubr.bf16.gmra.mrb[0].mxu0 %v4156
      %v4243 = vpop.f32.mrb[0].mxu0
      %v4244 = vadd.f32 0.0, %v4243
      %v4245 = vpop.f32.mrb[0].mxu0
      %v4246 = vpop.f32.mrb[0].mxu0
      %v4247 = vadd.f32 0.0, %v4246
      %v4248 = vpop.f32.mrb[0].mxu0
      %4249 = vmatprep.mubr.bf16.mxu0 0
      %4250 = vmatmul.mubr.bf16.gmra.mrb[0].mxu0 %v4159
      %v4251 = vpop.f32.mrb[0].mxu0
      %v4252 = vadd.f32 0.0, %v4251
      %v4253 = vpop.f32.mrb[0].mxu0
      %v4254 = vpop.f32.mrb[0].mxu0
      %v4255 = vadd.f32 0.0, %v4254
      %v4256 = vpop.f32.mrb[0].mxu0
      %4257 = vmatprep.mubr.bf16.mxu0 0
      %4258 = vmatmul.mubr.bf16.gmra.mrb[0].mxu0 %v4162
      %v4259 = vpop.f32.mrb[0].mxu0
      %v4260 = vadd.f32 0.0, %v4259
      %v4261 = vpop.f32.mrb[0].mxu0
      %v4262 = vpop.f32.mrb[0].mxu0
      %v4263 = vadd.f32 0.0, %v4262
      %v4264 = vpop.f32.mrb[0].mxu0
      %4265 = vmatprep.mubr.bf16.mxu0 0
      %4266 = vmatmul.mubr.bf16.gmra.mrb[0].mxu0 %v4165
      %v4267 = vpop.f32.mrb[0].mxu0
      %v4268 = vadd.f32 0.0, %v4267
      %v4269 = vpop.f32.mrb[0].mxu0
      %v4270 = vpop.f32.mrb[0].mxu0
      %v4271 = vadd.f32 0.0, %v4270
      %v4272 = vpop.f32.mrb[0].mxu0
      %4273 = vmatprep.mubr.bf16.mxu0 0
      %4274 = vmatmul.mubr.bf16.gmra.mrb[0].mxu0 %v4168
      %v4275 = vpop.f32.mrb[0].mxu0
      %v4276 = vadd.f32 0.0, %v4275
      %v4277 = vpop.f32.mrb[0].mxu0
      %v4278 = vpop.f32.mrb[0].mxu0
      %v4279 = vadd.f32 0.0, %v4278
      %v4280 = vpop.f32.mrb[0].mxu0
      %4281 = vmatprep.mubr.bf16.mxu0 0
      %4282 = vmatmul.mubr.bf16.gmra.mrb[0].mxu0 %v4171
      %v4283 = vpop.f32.mrb[0].mxu0
      %v4284 = vadd.f32 0.0, %v4283
      %v4285 = vpop.f32.mrb[0].mxu0
      %v4286 = vpop.f32.mrb[0].mxu0
      %v4287 = vadd.f32 0.0, %v4286
      %v4288 = vpop.f32.mrb[0].mxu0
      %4289 = vmatprep.mubr.bf16.mxu0 0
      %4290 = vmatmul.mubr.bf16.gmra.mrb[0].mxu0 %v4174
      %v4291 = vpop.f32.mrb[0].mxu0
      %v4292 = vadd.f32 0.0, %v4291
      %v4293 = vpop.f32.mrb[0].mxu0
      %v4294 = vpop.f32.mrb[0].mxu0
      %v4295 = vadd.f32 0.0, %v4294
      %v4296 = vpop.f32.mrb[0].mxu0
      %4297 = vmatprep.mubr.bf16.mxu0 0
      %4298 = vmatmul.mubr.bf16.gmra.mrb[0].mxu0 %v4177
      %v4299 = vpop.f32.mrb[0].mxu0
      %v4300 = vadd.f32 0.0, %v4299
      %v4301 = vpop.f32.mrb[0].mxu0
      %v4302 = vpop.f32.mrb[0].mxu0
      %v4303 = vadd.f32 0.0, %v4302
      %v4304 = vpop.f32.mrb[0].mxu0
      %4305 = vmatprep.mubr.bf16.mxu0 0
      %4306 = vmatmul.mubr.bf16.gmra.mrb[0].mxu0 %v4180
      %v4307 = vpop.f32.mrb[0].mxu0
      %v4308 = vadd.f32 0.0, %v4307
      %v4309 = vpop.f32.mrb[0].mxu0
      %v4310 = vpop.f32.mrb[0].mxu0
      %v4311 = vadd.f32 0.0, %v4310
      %v4312 = vpop.f32.mrb[0].mxu0
      %4313 = vmatprep.mubr.bf16.mxu0 0
      %4314 = vmatmul.mubr.bf16.gmra.mrb[0].mxu0 %v4183
      %v4315 = vpop.f32.mrb[0].mxu0
      %v4316 = vadd.f32 0.0, %v4315
      %v4317 = vpop.f32.mrb[0].mxu0
      %v4318 = vpop.f32.mrb[0].mxu0
      %v4319 = vadd.f32 0.0, %v4318
      %v4320 = vpop.f32.mrb[0].mxu0
      %4321 = vmatprep.mubr.bf16.mxu0 0
      %4322 = vmatmul.mubr.bf16.gmra.mrb[0].mxu0 %v4186
      %v4323 = vpop.f32.mrb[0].mxu0
      %v4324 = vadd.f32 0.0, %v4323
      %v4325 = vpop.f32.mrb[0].mxu0
      %v4326 = vpop.f32.mrb[0].mxu0
      %v4327 = vadd.f32 0.0, %v4326
      %v4328 = vpop.f32.mrb[0].mxu0
      %4329 = vmatprep.mubr.bf16.mxu0 0
      %4330 = vmatmul.mubr.bf16.gmra.mrb[0].mxu0 %v4189
      %v4331 = vpop.f32.mrb[0].mxu0
      %v4332 = vadd.f32 0.0, %v4331
      %v4333 = vpop.f32.mrb[0].mxu0
      %v4334 = vpop.f32.mrb[0].mxu0
      %v4335 = vadd.f32 0.0, %v4334
      %v4336 = vpop.f32.mrb[0].mxu0
      %4337 = vmatprep.mubr.bf16.mxu0 0
      %4338 = vmatmul.mubr.bf16.gmra.mrb[0].mxu0 %v4192
      %v4339 = vpop.f32.mrb[0].mxu0
      %v4340 = vadd.f32 0.0, %v4339
      %v4341 = vpop.f32.mrb[0].mxu0
      %v4342 = vpop.f32.mrb[0].mxu0
      %v4343 = vadd.f32 0.0, %v4342
      %v4344 = vpop.f32.mrb[0].mxu0
      %4345 = vmatprep.mubr.bf16.mxu0 0
      %4346 = vmatmul.mubr.bf16.gmra.mrb[0].mxu0 %v4195
      %v4347 = vpop.f32.mrb[0].mxu0
      %v4348 = vadd.f32 0.0, %v4347
      %v4349 = vpop.f32.mrb[0].mxu0
      %v4350 = vpop.f32.mrb[0].mxu0
      %v4351 = vadd.f32 0.0, %v4350
      %v4352 = vpop.f32.mrb[0].mxu0
      %4353 = vmatprep.mubr.bf16.mxu0 0
      %4354 = vmatmul.mubr.bf16.gmra.mrb[0].mxu0 %v4198
      %v4355 = vpop.f32.mrb[0].mxu0
      %v4356 = vadd.f32 0.0, %v4355
      %v4357 = vpop.f32.mrb[0].mxu0
      %v4358 = vpop.f32.mrb[0].mxu0
      %v4359 = vadd.f32 0.0, %v4358
      %v4360 = vpop.f32.mrb[0].mxu0
      %4361 = vmatprep.mubr.bf16.mxu0 0
      %4362 = vmatmul.mubr.bf16.gmra.mrb[0].mxu0 %v4201
      %v4363 = vpop.f32.mrb[0].mxu0
      %v4364 = vadd.f32 0.0, %v4363
      %v4365 = vpop.f32.mrb[0].mxu0
      %v4366 = vpop.f32.mrb[0].mxu0
      %v4367 = vadd.f32 0.0, %v4366
      %v4368 = vpop.f32.mrb[0].mxu0
      %4369 = vmatprep.mubr.bf16.mxu0 0
      %4370 = vmatmul.mubr.bf16.gmra.mrb[0].mxu0 %v4204
      %v4371 = vpop.f32.mrb[0].mxu0
      %v4372 = vadd.f32 0.0, %v4371
      %v4373 = vpop.f32.mrb[0].mxu0
      %v4374 = vpop.f32.mrb[0].mxu0
      %v4375 = vadd.f32 0.0, %v4374
      %v4376 = vpop.f32.mrb[0].mxu0
      %4377 = vmatprep.mubr.bf16.mxu0 0
      %4378 = vmatmul.mubr.bf16.gmra.mrb[0].mxu0 %v4207
      %v4379 = vpop.f32.mrb[0].mxu0
      %v4380 = vadd.f32 0.0, %v4379
      %v4381 = vpop.f32.mrb[0].mxu0
      %v4382 = vpop.f32.mrb[0].mxu0
      %v4383 = vadd.f32 0.0, %v4382
      %v4384 = vpop.f32.mrb[0].mxu0
      %4385 = vdwg.mxu0
      %v4386 = vld [vmem:[%s9] sm:$0x1]
      %v4388 = vlaneseq
      %v4389 = vshrl.u32 %v4388, 7
      %v4390 = vsub.s32 0, %v4389
      %v4391 = vrot.slane %v4386, %v4390
      %v4393 = vmul.f32 %v4244, %v4391
      %v4394 = vmul.f32 %v4247, %v4391
      %v4395 = vmul.f32 %v4252, %v4391
      %v4396 = vmul.f32 %v4255, %v4391
      %v4397 = vmul.f32 %v4260, %v4391
      %v4398 = vmul.f32 %v4263, %v4391
      %v4399 = vmul.f32 %v4268, %v4391
      %v4400 = vmul.f32 %v4271, %v4391
      %v4401 = vmul.f32 %v4276, %v4391
      %v4402 = vmul.f32 %v4279, %v4391
      %v4403 = vmul.f32 %v4284, %v4391
      %v4404 = vmul.f32 %v4287, %v4391
      %v4405 = vmul.f32 %v4292, %v4391
      %v4406 = vmul.f32 %v4295, %v4391
      %v4407 = vmul.f32 %v4300, %v4391
      %v4408 = vmul.f32 %v4303, %v4391
      %v4409 = vmul.f32 %v4308, %v4391
      %v4410 = vmul.f32 %v4311, %v4391
      %v4411 = vmul.f32 %v4316, %v4391
      %v4412 = vmul.f32 %v4319, %v4391
      %v4413 = vmul.f32 %v4324, %v4391
      %v4414 = vmul.f32 %v4327, %v4391
      %v4415 = vmul.f32 %v4332, %v4391
      %v4416 = vmul.f32 %v4335, %v4391
      %v4417 = vmul.f32 %v4340, %v4391
      %v4418 = vmul.f32 %v4343, %v4391
      %v4419 = vmul.f32 %v4348, %v4391
      %v4420 = vmul.f32 %v4351, %v4391
      %v4421 = vmul.f32 %v4356, %v4391
      %v4422 = vmul.f32 %v4359, %v4391
      %v4423 = vmul.f32 %v4364, %v4391
      %v4424 = vmul.f32 %v4367, %v4391
      %v4425 = vmul.f32 %v4372, %v4391
      %v4426 = vmul.f32 %v4375, %v4391
      %v4427 = vmul.f32 %v4380, %v4391
      %v4428 = vmul.f32 %v4383, %v4391
      %v4429 = vld [vmem:[%s10] sm:$0x1]
      %v4431 = vlaneseq
      %v4432 = vshrl.u32 %v4431, 7
      %v4433 = vsub.s32 0, %v4432
      %v4434 = vrot.slane %v4429, %v4433
      %v4436 = vadd.f32 %v4393, %v4434
      %v4437 = vadd.f32 %v4394, %v4434
      %v4438 = vadd.f32 %v4395, %v4434
      %v4439 = vadd.f32 %v4396, %v4434
      %v4440 = vadd.f32 %v4397, %v4434
      %v4441 = vadd.f32 %v4398, %v4434
      %v4442 = vadd.f32 %v4399, %v4434
      %v4443 = vadd.f32 %v4400, %v4434
      %v4444 = vadd.f32 %v4401, %v4434
      %v4445 = vadd.f32 %v4402, %v4434
      %v4446 = vadd.f32 %v4403, %v4434
      %v4447 = vadd.f32 %v4404, %v4434
      %v4448 = vadd.f32 %v4405, %v4434
      %v4449 = vadd.f32 %v4406, %v4434
      %v4450 = vadd.f32 %v4407, %v4434
      %v4451 = vadd.f32 %v4408, %v4434
      %v4452 = vadd.f32 %v4409, %v4434
      %v4453 = vadd.f32 %v4410, %v4434
      %v4454 = vadd.f32 %v4411, %v4434
      %v4455 = vadd.f32 %v4412, %v4434
      %v4456 = vadd.f32 %v4413, %v4434
      %v4457 = vadd.f32 %v4414, %v4434
      %v4458 = vadd.f32 %v4415, %v4434
      %v4459 = vadd.f32 %v4416, %v4434
      %v4460 = vadd.f32 %v4417, %v4434
      %v4461 = vadd.f32 %v4418, %v4434
      %v4462 = vadd.f32 %v4419, %v4434
      %v4463 = vadd.f32 %v4420, %v4434
      %v4464 = vadd.f32 %v4421, %v4434
      %v4465 = vadd.f32 %v4422, %v4434
      %v4466 = vadd.f32 %v4423, %v4434
      %v4467 = vadd.f32 %v4424, %v4434
      %v4468 = vadd.f32 %v4425, %v4434
      %v4469 = vadd.f32 %v4426, %v4434
      %v4470 = vadd.f32 %v4427, %v4434
      %v4471 = vadd.f32 %v4428, %v4434
      %v4472 = vld [vmem:[%s381 + $0x13] sm:$0xff]
      %v4473 = vld [vmem:[%s381 + $0x1b] sm:$0xff]
      %v4474 = vld [vmem:[%s381 + $0x23] sm:$0xff]
      %v4475 = vld [vmem:[%s381 + $0x2b] sm:$0xff]
      %v4476 = vld [vmem:[%s381 + $0x33] sm:$0xff]
      %v4477 = vld [vmem:[%s381 + $0x3b] sm:$0xff]
      %v4478 = vld [vmem:[%s381 + $0x43] sm:$0xff]
      %v4479 = vld [vmem:[%s381 + $0x4b] sm:$0xff]
      %v4480 = vld [vmem:[%s381 + $0x53] sm:$0xff]
      %v4481 = vld [vmem:[%s381 + $0x5b] sm:$0xff]
      %v4482 = vld [vmem:[%s381 + $0x63] sm:$0xff]
      %v4483 = vld [vmem:[%s381 + $0x6b] sm:$0xff]
      %v4484 = vld [vmem:[%s381 + $0x73] sm:$0xff]
      %v4485 = vld [vmem:[%s381 + $0x7b] sm:$0xff]
      %v4486 = vld [vmem:[%s381 + $0x83] sm:$0xff]
      %v4487 = vld [vmem:[%s381 + $0x8b] sm:$0xff]
      %v4488 = vld [vmem:[%s381 + $0x93] sm:$0xff]
      %v4489 = vld [vmem:[%s381 + $0x9b] sm:$0xff]
      %v4490 = vld [vmem:[%s381 + $0xa3] sm:$0xff]
      %v4491 = vld [vmem:[%s381 + $0xab] sm:$0xff]
      %v4492 = vld [vmem:[%s381 + $0xb3] sm:$0xff]
      %v4493 = vld [vmem:[%s381 + $0xbb] sm:$0xff]
      %v4494 = vld [vmem:[%s381 + $0xc3] sm:$0xff]
      %v4495 = vld [vmem:[%s381 + $0xcb] sm:$0xff]
      %v4496 = vld [vmem:[%s381 + $0xd3] sm:$0xff]
      %v4497 = vld [vmem:[%s381 + $0xdb] sm:$0xff]
      %v4498 = vld [vmem:[%s381 + $0xe3] sm:$0xff]
      %v4499 = vld [vmem:[%s381 + $0xeb] sm:$0xff]
      %v4500 = vld [vmem:[%s381 + $0xf3] sm:$0xff]
      %v4501 = vld [vmem:[%s381 + $0xfb] sm:$0xff]
      %v4502 = vld [vmem:[%s381 + $0x103] sm:$0xff]
      %v4503 = vld [vmem:[%s381 + $0x10b] sm:$0xff]
      %v4504 = vld [vmem:[%s381 + $0x113] sm:$0xff]
      %v4505 = vld [vmem:[%s381 + $0x11b] sm:$0xff]
      %v4506 = vld [vmem:[%s381 + $0x123] sm:$0xff]
      %v4507 = vld [vmem:[%s381 + $0x12b] sm:$0xff]
      %v4508 = vadd.f32 %v4436, %v4472
      %v4509 = vadd.f32 %v4437, %v4473
      %v4510 = vadd.f32 %v4438, %v4474
      %v4511 = vadd.f32 %v4439, %v4475
      %v4512 = vadd.f32 %v4440, %v4476
      %v4513 = vadd.f32 %v4441, %v4477
      %v4514 = vadd.f32 %v4442, %v4478
      %v4515 = vadd.f32 %v4443, %v4479
      %v4516 = vadd.f32 %v4444, %v4480
      %v4517 = vadd.f32 %v4445, %v4481
      %v4518 = vadd.f32 %v4446, %v4482
      %v4519 = vadd.f32 %v4447, %v4483
      %v4520 = vadd.f32 %v4448, %v4484
      %v4521 = vadd.f32 %v4449, %v4485
      %v4522 = vadd.f32 %v4450, %v4486
      %v4523 = vadd.f32 %v4451, %v4487
      %v4524 = vadd.f32 %v4452, %v4488
      %v4525 = vadd.f32 %v4453, %v4489
      %v4526 = vadd.f32 %v4454, %v4490
      %v4527 = vadd.f32 %v4455, %v4491
      %v4528 = vadd.f32 %v4456, %v4492
      %v4529 = vadd.f32 %v4457, %v4493
      %v4530 = vadd.f32 %v4458, %v4494
      %v4531 = vadd.f32 %v4459, %v4495
      %v4532 = vadd.f32 %v4460, %v4496
      %v4533 = vadd.f32 %v4461, %v4497
      %v4534 = vadd.f32 %v4462, %v4498
      %v4535 = vadd.f32 %v4463, %v4499
      %v4536 = vadd.f32 %v4464, %v4500
      %v4537 = vadd.f32 %v4465, %v4501
      %v4538 = vadd.f32 %v4466, %v4502
      %v4539 = vadd.f32 %v4467, %v4503
      %v4540 = vadd.f32 %v4468, %v4504
      %v4541 = vadd.f32 %v4469, %v4505
      %v4542 = vadd.f32 %v4470, %v4506
      %v4543 = vadd.f32 %v4471, %v4507
      %v4544 = vmax.f32 %v4508, 0.0
      %v4545 = vmax.f32 %v4509, 0.0
      %v4546 = vmax.f32 %v4510, 0.0
      %v4547 = vmax.f32 %v4511, 0.0
      %v4548 = vmax.f32 %v4512, 0.0
      %v4549 = vmax.f32 %v4513, 0.0
      %v4550 = vmax.f32 %v4514, 0.0
      %v4551 = vmax.f32 %v4515, 0.0
      %v4552 = vmax.f32 %v4516, 0.0
      %v4553 = vmax.f32 %v4517, 0.0
      %v4554 = vmax.f32 %v4518, 0.0
      %v4555 = vmax.f32 %v4519, 0.0
      %v4556 = vmax.f32 %v4520, 0.0
      %v4557 = vmax.f32 %v4521, 0.0
      %v4558 = vmax.f32 %v4522, 0.0
      %v4559 = vmax.f32 %v4523, 0.0
      %v4560 = vmax.f32 %v4524, 0.0
      %v4561 = vmax.f32 %v4525, 0.0
      %v4562 = vmax.f32 %v4526, 0.0
      %v4563 = vmax.f32 %v4527, 0.0
      %v4564 = vmax.f32 %v4528, 0.0
      %v4565 = vmax.f32 %v4529, 0.0
      %v4566 = vmax.f32 %v4530, 0.0
      %v4567 = vmax.f32 %v4531, 0.0
      %v4568 = vmax.f32 %v4532, 0.0
      %v4569 = vmax.f32 %v4533, 0.0
      %v4570 = vmax.f32 %v4534, 0.0
      %v4571 = vmax.f32 %v4535, 0.0
      %v4572 = vmax.f32 %v4536, 0.0
      %v4573 = vmax.f32 %v4537, 0.0
      %v4574 = vmax.f32 %v4538, 0.0
      %v4575 = vmax.f32 %v4539, 0.0
      %v4576 = vmax.f32 %v4540, 0.0
      %v4577 = vmax.f32 %v4541, 0.0
      %v4578 = vmax.f32 %v4542, 0.0
      %v4579 = vmax.f32 %v4543, 0.0
      %4580 = vst.msk [vmem:[%s386] sm:$0xff] %vm482, %v4544
      %4581 = vst.msk [vmem:[%s386 + $0x8] sm:$0xff] %vm482, %v4545
      %4582 = vst.msk [vmem:[%s386 + $0x10] sm:$0xff] %vm482, %v4546
      %4583 = vst.msk [vmem:[%s386 + $0x18] sm:$0xff] %vm482, %v4547
      %4584 = vst.msk [vmem:[%s386 + $0x20] sm:$0xff] %vm482, %v4548
      %4585 = vst.msk [vmem:[%s386 + $0x28] sm:$0xff] %vm482, %v4549
      %4586 = vst.msk [vmem:[%s386 + $0x30] sm:$0xff] %vm482, %v4550
      %4587 = vst.msk [vmem:[%s386 + $0x38] sm:$0xff] %vm482, %v4551
      %4588 = vst.msk [vmem:[%s386 + $0x40] sm:$0xff] %vm482, %v4552
      %4589 = vst.msk [vmem:[%s386 + $0x48] sm:$0xff] %vm482, %v4553
      %4590 = vst.msk [vmem:[%s386 + $0x50] sm:$0xff] %vm482, %v4554
      %4591 = vst.msk [vmem:[%s386 + $0x58] sm:$0xff] %vm482, %v4555
      %4592 = vst.msk [vmem:[%s386 + $0x60] sm:$0xff] %vm482, %v4556
      %4593 = vst.msk [vmem:[%s386 + $0x68] sm:$0xff] %vm482, %v4557
      %4594 = vst.msk [vmem:[%s386 + $0x70] sm:$0xff] %vm482, %v4558
      %4595 = vst.msk [vmem:[%s386 + $0x78] sm:$0xff] %vm482, %v4559
      %4596 = vst.msk [vmem:[%s386 + $0x80] sm:$0xff] %vm482, %v4560
      %4597 = vst.msk [vmem:[%s386 + $0x88] sm:$0xff] %vm482, %v4561
      %4598 = vst.msk [vmem:[%s386 + $0x90] sm:$0xff] %vm482, %v4562
      %4599 = vst.msk [vmem:[%s386 + $0x98] sm:$0xff] %vm482, %v4563
      %4600 = vst.msk [vmem:[%s386 + $0xa0] sm:$0xff] %vm482, %v4564
      %4601 = vst.msk [vmem:[%s386 + $0xa8] sm:$0xff] %vm482, %v4565
      %4602 = vst.msk [vmem:[%s386 + $0xb0] sm:$0xff] %vm482, %v4566
      %4603 = vst.msk [vmem:[%s386 + $0xb8] sm:$0xff] %vm482, %v4567
      %4604 = vst.msk [vmem:[%s386 + $0xc0] sm:$0xff] %vm482, %v4568
      %4605 = vst.msk [vmem:[%s386 + $0xc8] sm:$0xff] %vm482, %v4569
      %4606 = vst.msk [vmem:[%s386 + $0xd0] sm:$0xff] %vm482, %v4570
      %4607 = vst.msk [vmem:[%s386 + $0xd8] sm:$0xff] %vm482, %v4571
      %4608 = vst.msk [vmem:[%s386 + $0xe0] sm:$0xff] %vm482, %v4572
      %4609 = vst.msk [vmem:[%s386 + $0xe8] sm:$0xff] %vm482, %v4573
      %4610 = vst.msk [vmem:[%s386 + $0xf0] sm:$0xff] %vm482, %v4574
      %4611 = vst.msk [vmem:[%s386 + $0xf8] sm:$0xff] %vm482, %v4575
      %4612 = vst.msk [vmem:[%s386 + $0x100] sm:$0xff] %vm482, %v4576
      %4613 = vst.msk [vmem:[%s386 + $0x108] sm:$0xff] %vm482, %v4577
      %4614 = vst.msk [vmem:[%s386 + $0x110] sm:$0xff] %vm482, %v4578
      %4615 = vst.msk [vmem:[%s386 + $0x118] sm:$0xff] %vm482, %v4579
      %p4616 = scmp.lt.s32.totalorder %s22, 1
      %s4617 = scalar_select %p4616, %s22, 1
      %s4618 = smul.addr %s4617, 36
      %s4619 = smul.addr %s4618, 8
      %s4620 = scalar_lea.vmem %s11, %s4619
      // Predicated region
      $region65: #{bottleneck_forward.1} parent=63 // pred_check
        %p4621 = pneg %p276
      $region66: #{bottleneck_forward.1} parent=63 // pred_check_branch
        %4623 = sbr.rel (%p4621) target = $region68
      $region67: #{bottleneck_forward.1} parent=63 // pred_region
        _
      $region68: #{bottleneck_forward.1} parent=63 // pred_fallthru
        _
    $region64: #{bottleneck_forward.1} parent=5 // pred_fallthru
      _
    %p4624 = scmp.le.s32.totalorder 2, %s17
    // Predicated region
    $region69: #{bottleneck_forward.1} parent=5 // pred_check
      %p4625 = pneg %p4624
    $region70: #{bottleneck_forward.1} parent=5 // pred_check_branch
      %4627 = sbr.rel (%p4625) target = $region72
    $region71: #{bottleneck_forward.1} parent=5 // pred_region
      %s4628 = ssub.s32 %s17, 2
      // Predicated region
      $region73: #{bottleneck_forward.1} parent=71 // pred_check
        %p4629 = pneg %p282
      $region74: #{bottleneck_forward.1} parent=71 // pred_check_branch
        %4631 = sbr.rel (%p4629) target = $region76
      $region75: #{bottleneck_forward.1} parent=71 // pred_region
        %p4632 = scmp.lt.s32.totalorder %s23, 1
        %s4633 = scalar_select %p4632, %s23, 1
        %s4634 = smul.addr %s4633, 36
        %s4635 = smul.addr %s4634, 8
        %s4636 = scalar_lea.vmem %s11, %s4635
      $region76: #{bottleneck_forward.1} parent=71 // pred_fallthru
        _
    $region72: #{bottleneck_forward.1} parent=5 // pred_fallthru
      _
  $region6: #{bottleneck_forward.1} parent=0 // loop_footer
    %s21 = sadd.s32 1, %s17
  $region7: #{bottleneck_forward.1} parent=0 // loop_footer_branch
    %16 = sbr.rel target = $region3
  $region8: #{bottleneck_forward.1} parent=0 // loop_exit
    _

</llo_original>
